<compile_context>
chip_gen: v7x
topology: tpu7x:2x2x1
jax: 0.10.0
libtpu: 0.0.40
codegen_flags: <defaults>
</compile_context>

<pallas_src>
import functools

import jax
import jax.numpy as jnp
from jax.experimental import pallas as pl
from jax.experimental.pallas import tpu as pltpu


# ----------------------------------------------------------------------------
# Fused BasicBlock kernel (one grid step = one image x one row-tile of output)
# ----------------------------------------------------------------------------
def _basic_block_kernel(*refs, stride, TQ, Wo, Ho, R, downsample):
    """Refs:
      xt_ref : (1, s*s, RP, CP, Cinp) bf16  phase-decomposed, halo'd input tile
      w1_ref : (9*Cinp, Coutp)        bf16  conv1 im2col weight slab
      w2_ref : (9*Coutp, Coutp)       bf16  conv2 im2col weight slab
      bn_ref : (8, Coutp)             f32   rows: s1,b1,s2,b2,s_sc,b_sc,-,-
      wsc_ref: (Cinp, Coutp)          bf16  1x1 shortcut weights (downsample)
      o_ref  : (1, TQ*Wo, Coutp)      f32   lane-dense output slab
      out1_scr: (TQ+2, Wo+2, Coutp)   bf16  VMEM scratch for the intermediate
    """
    if downsample:
        xt_ref, w1_ref, w2_ref, bn_ref, wsc_ref, o_ref, out1_scr = refs
    else:
        xt_ref, w1_ref, w2_ref, bn_ref, o_ref, out1_scr = refs
        wsc_ref = None

    s = stride
    TQE = TQ + 2                            # out1 rows incl. conv2 halo
    Cinp = xt_ref.shape[-1]
    Coutp = w1_ref.shape[-1]

    # row-tile index -> first output row of this tile
    q0 = (pl.program_id(0) % R) * TQ if R > 1 else 0

    # ---- conv1 (3x3, stride s) as ONE im2col matmul: K = 9*Cinp -------------
    taps = []
    for kh in range(3):
        a, dh = kh % s, kh // s
        for kw in range(3):
            b, dw = kw % s, kw // s
            tap = xt_ref[0, a * s + b, dh: dh + TQE, dw: dw + Wo, :]
            taps.append(tap.reshape(TQE * Wo, Cinp))
    patch1 = jnp.concatenate(taps, axis=-1)                 # (TQE*Wo, 9*Cinp)
    acc1 = jnp.dot(patch1, w1_ref[...],
                   preferred_element_type=jnp.float32)      # (TQE*Wo, Coutp)
    out1 = jnp.maximum(acc1 * bn_ref[0:1, :] + bn_ref[1:2, :], 0.0)
    out1 = out1.reshape(TQE, Wo, Coutp)

    # out1 halo rows outside the image act as conv2 zero-padding
    t_idx = jax.lax.broadcasted_iota(jnp.int32, (TQE, 1, 1), 0)
    row = q0 - 1 + t_idx
    out1 = jnp.where((row >= 0) & (row < Ho), out1, 0.0)

    # stash out1 (bf16, with zero border columns for conv2) in VMEM scratch
    out1_scr[:, 0:1, :] = jnp.zeros((TQE, 1, Coutp), jnp.bfloat16)
    out1_scr[:, Wo + 1:Wo + 2, :] = jnp.zeros((TQE, 1, Coutp), jnp.bfloat16)
    out1_scr[:, 1:Wo + 1, :] = out1.astype(jnp.bfloat16)

    # ---- conv2 (3x3, stride 1) as ONE im2col matmul: K = 9*Coutp ------------
    taps2 = []
    for kh in range(3):
        for kw in range(3):
            taps2.append(out1_scr[kh:kh + TQ, kw:kw + Wo, :]
                         .reshape(TQ * Wo, Coutp))
    patch2 = jnp.concatenate(taps2, axis=-1)                # (TQ*Wo, 9*Coutp)
    acc2 = jnp.dot(patch2, w2_ref[...],
                   preferred_element_type=jnp.float32)
    out2 = acc2 * bn_ref[2:3, :] + bn_ref[3:4, :]

    # ---- shortcut (identity or 1x1 conv + bn), contiguous phase slice -------
    a_sc = 1 % s
    p_sc = a_sc * s + a_sc
    r0 = (s + 1 - a_sc) // s
    c0 = (1 - a_sc) // s
    xs = xt_ref[0, p_sc, r0:r0 + TQ, c0:c0 + Wo, :]         # (TQ, Wo, Cinp)
    if downsample:
        sc = jnp.dot(xs.reshape(TQ * Wo, Cinp), wsc_ref[...],
                     preferred_element_type=jnp.float32)
        sc = sc * bn_ref[4:5, :] + bn_ref[5:6, :]
    else:
        sc = xs.reshape(TQ * Wo, Cinp).astype(jnp.float32)  # Cinp == Coutp

    o_ref[0] = jnp.maximum(out2 + sc, 0.0).astype(o_ref.dtype)


# ----------------------------------------------------------------------------
# Wrapper: layout plumbing (NCHW<->NHWC, lane padding, space-to-depth, halos)
# ----------------------------------------------------------------------------
def _round_up(n, m):
    return ((n + m - 1) // m) * m


def _bn_fold(gamma, beta, mean, var, eps=1e-5):
    scale = gamma / jnp.sqrt(var + eps)
    return scale, beta - mean * scale


def _pick_row_tile(n):
    for t in (8, 4, 2, 1):
        if n % t == 0:
            return t
    return 1


def basic_block_forward(x_nchw, params, *, stride):
    """Pallas implementation of BasicBlock.forward. Input/output in NCHW."""
    N, Cin, H, W = x_nchw.shape
    planes = params["w1"].shape[0]
    s = stride
    downsample = (s != 1) or (Cin != planes)

    Ho = (H + 2 - 3) // s + 1
    Wo = (W + 2 - 3) // s + 1
    TQ = _pick_row_tile(Ho)            # output rows per grid step
    R = Ho // TQ                       # row tiles per image
    TQE = TQ + 2
    RP = TQE + 2 // s                  # phase rows per tile (incl. halos)
    CP = Wo + 2 // s                   # phase cols

    Cinp = _round_up(Cin, 128)         # lane-dense channel padding
    Coutp = _round_up(planes, 128)

    # ---- activations: NHWC, bf16, channel pad, spatial pad, phase split,
    #      per-row-tile halo gather (all plain-JAX layout plumbing).
    x = jnp.transpose(x_nchw, (0, 2, 3, 1)).astype(jnp.bfloat16)
    x = jnp.pad(x, ((0, 0), (0, 0), (0, 0), (0, Cinp - Cin)))
    RTOT = (R - 1) * TQ + RP
    pad_top = s + 1                    # conv pad (1) + halo slack (s)
    Hpe = max(pad_top + H + 1, s * RTOT)
    Wpe = max(W + 2, s * CP)
    xpe = jnp.pad(x, ((0, 0), (pad_top, Hpe - H - pad_top),
                      (1, Wpe - W - 1), (0, 0)))
    # space-to-depth: stride handled outside the kernel (no in-kernel strides)
    phases = [xpe[:, a::s, b::s, :][:, :RTOT, :CP, :]
              for a in range(s) for b in range(s)]
    xph = jnp.stack(phases, axis=1)                       # (N, s*s, RTOT, CP, Cinp)
    row_idx = jnp.arange(R)[:, None] * TQ + jnp.arange(RP)[None, :]
    x_tiles = jnp.moveaxis(xph[:, :, row_idx, :, :], 2, 1)
    x_tiles = x_tiles.reshape(N * R, s * s, RP, CP, Cinp)

    # ---- weights: im2col slabs, bf16, channel padded
    def conv3_slab(w, cin, cinp):
        wt = jnp.transpose(w, (2, 3, 1, 0))               # (3,3,cin,cout)
        wt = jnp.pad(wt, ((0, 0), (0, 0), (0, cinp - cin), (0, Coutp - planes)))
        return wt.reshape(9 * cinp, Coutp).astype(jnp.bfloat16)

    w1p = conv3_slab(params["w1"], Cin, Cinp)
    w2p = conv3_slab(params["w2"], planes, Coutp)

    # ---- folded BN (inference) packed into one (8, Coutp) f32 table
    s1, b1 = _bn_fold(*params["bn1"])
    s2, b2 = _bn_fold(*params["bn2"])
    bn = jnp.zeros((8, Coutp), jnp.float32)
    bn = bn.at[0, :planes].set(s1).at[1, :planes].set(b1)
    bn = bn.at[2, :planes].set(s2).at[3, :planes].set(b2)

    args = [x_tiles, w1p, w2p]
    in_specs = [
        pl.BlockSpec((1, s * s, RP, CP, Cinp), lambda g: (g, 0, 0, 0, 0)),
        pl.BlockSpec((9 * Cinp, Coutp), lambda g: (0, 0)),
        pl.BlockSpec((9 * Coutp, Coutp), lambda g: (0, 0)),
        pl.BlockSpec((8, Coutp), lambda g: (0, 0)),
    ]
    if downsample:
        ssc, bsc = _bn_fold(*params["bn_sc"])
        bn = bn.at[4, :planes].set(ssc).at[5, :planes].set(bsc)
        wsc = params["w_sc"].reshape(planes, Cin).T
        wsc = jnp.pad(wsc, ((0, Cinp - Cin), (0, Coutp - planes)))
        args += [bn, wsc.astype(jnp.bfloat16)]
        in_specs.append(pl.BlockSpec((Cinp, Coutp), lambda g: (0, 0)))
    else:
        args += [bn]

    kernel = functools.partial(_basic_block_kernel, stride=s, TQ=TQ, Wo=Wo,
                               Ho=Ho, R=R, downsample=downsample)

    out_flat = pl.pallas_call(
        kernel,
        out_shape=jax.ShapeDtypeStruct((N * R, TQ * Wo, Coutp), jnp.float32),
        grid=(N * R,),
        in_specs=in_specs,
        out_specs=pl.BlockSpec((1, TQ * Wo, Coutp), lambda g: (g, 0, 0)),
        scratch_shapes=[pltpu.VMEM((TQE, Wo + 2, Coutp), jnp.bfloat16)],
        compiler_params=pltpu.CompilerParams(
            dimension_semantics=("parallel",),
            vmem_limit_bytes=32 * 1024 * 1024),
    )(*args)

    out = out_flat.reshape(N, Ho, Wo, Coutp)[:, :, :, :planes]
    return jnp.transpose(out, (0, 3, 1, 2))                 # back to NCHW


# ----------------------------------------------------------------------------
# Pure-JAX reference (for verification)
# ----------------------------------------------------------------------------
def _ref_forward(x_nchw, params, *, stride, match_kernel_precision=False):
    f32 = jnp.float32

    def q(a):  # optionally emulate the kernel's bf16 operand rounding
        return a.astype(jnp.bfloat16).astype(f32) if match_kernel_precision else a.astype(f32)

    x = q(jnp.transpose(x_nchw, (0, 2, 3, 1)))

    def conv(v, w, s, pad):
        return jax.lax.conv_general_dilated(
            v, q(jnp.transpose(w, (2, 3, 1, 0))), window_strides=(s, s),
            padding=pad, dimension_numbers=("NHWC", "HWIO", "NHWC"),
            preferred_element_type=f32)

    def bn(v, p):
        sc, bi = _bn_fold(*p)
        return v * sc + bi

    in_planes = x.shape[-1]
    planes = params["w1"].shape[0]
    out1 = jax.nn.relu(bn(conv(x, params["w1"], stride, [(1, 1), (1, 1)]), params["bn1"]))
    out1 = q(out1)
    out = bn(conv(out1, params["w2"], 1, [(1, 1), (1, 1)]), params["bn2"])
    if stride != 1 or in_planes != planes:
        sc = bn(conv(x, params["w_sc"], stride, [(0, 0), (0, 0)]), params["bn_sc"])
    else:
        sc = x
    out = jax.nn.relu(out + sc)
    return jnp.transpose(out, (0, 3, 1, 2))


# ----------------------------------------------------------------------------
def make_params(key, in_planes, planes, stride):
    ks = jax.random.split(key, 8)

    def bn_params(k, c):
        k1, k2, k3, k4 = jax.random.split(k, 4)
        gamma = 1.0 + 0.1 * jax.random.normal(k1, (c,), jnp.float32)
        beta = 0.1 * jax.random.normal(k2, (c,), jnp.float32)
        mean = 0.1 * jax.random.normal(k3, (c,), jnp.float32)
        var = 0.5 + jnp.abs(jax.random.normal(k4, (c,), jnp.float32)) * 0.5
        return (gamma, beta, mean, var)

    params = {
        "w1": 0.1 * jax.random.normal(ks[0], (planes, in_planes, 3, 3), jnp.float32),
        "bn1": bn_params(ks[1], planes),
        "w2": 0.1 * jax.random.normal(ks[2], (planes, planes, 3, 3), jnp.float32),
        "bn2": bn_params(ks[3], planes),
    }
    if stride != 1 or in_planes != planes:
        params["w_sc"] = 0.1 * jax.random.normal(ks[4], (planes, in_planes, 1, 1),
                                                 jnp.float32)
        params["bn_sc"] = bn_params(ks[5], planes)
    return params


if __name__ == "__main__":
    key = jax.random.PRNGKey(0)
    kx1, kp1, kx2, kp2 = jax.random.split(key, 4)

    # --- Case 1: identity shortcut (stride=1, in_planes == planes) ----------
    N, C, H, W = 2, 8, 16, 16
    x1 = jax.random.normal(kx1, (N, C, H, W), jnp.float32)
    p1 = make_params(kp1, in_planes=C, planes=C, stride=1)
    out1 = jax.block_until_ready(basic_block_forward(x1, p1, stride=1))
    ref1_q = _ref_forward(x1, p1, stride=1, match_kernel_precision=True)
    ref1 = _ref_forward(x1, p1, stride=1)
    assert out1.shape == ref1.shape == (N, C, H, W)
    assert jnp.allclose(out1, ref1_q, atol=1e-2, rtol=1e-2), \
        float(jnp.max(jnp.abs(out1 - ref1_q)))
    assert jnp.allclose(out1, ref1, atol=1e-1, rtol=1e-1), \
        float(jnp.max(jnp.abs(out1 - ref1)))

    # --- Case 2: downsample shortcut (stride=2, planes = 2*in_planes) -------
    planes2, stride2 = 16, 2
    x2 = jax.random.normal(kx2, (N, C, H, W), jnp.float32)
    p2 = make_params(kp2, in_planes=C, planes=planes2, stride=stride2)
    out2 = jax.block_until_ready(basic_block_forward(x2, p2, stride=stride2))
    ref2_q = _ref_forward(x2, p2, stride=stride2, match_kernel_precision=True)
    ref2 = _ref_forward(x2, p2, stride=stride2)
    assert out2.shape == ref2.shape == (N, planes2, H // 2, W // 2)
    assert jnp.allclose(out2, ref2_q, atol=1e-2, rtol=1e-2), \
        float(jnp.max(jnp.abs(out2 - ref2_q)))
    assert jnp.allclose(out2, ref2, atol=1e-1, rtol=1e-1), \
        float(jnp.max(jnp.abs(out2 - ref2)))

    print("KERNEL_OK")
</pallas_src>

<mosaic_0001>
module attributes {stable_mosaic.version = 11 : i64} {
  func.func @_basic_block_kernel(%arg0: i32, %arg1: memref<1x1x12x18x128xbf16, #tpu.memory_space<vmem>>, %arg2: memref<1152x128xbf16, #tpu.memory_space<vmem>>, %arg3: memref<1152x128xbf16, #tpu.memory_space<vmem>>, %arg4: memref<8x128xf32, #tpu.memory_space<vmem>>, %arg5: memref<1x128x128xf32, #tpu.memory_space<vmem>>, %arg6: memref<10x18x128xbf16, #tpu.memory_space<vmem>>) attributes {dimension_semantics = [#tpu.dimension_semantics<parallel>], iteration_bounds = array<i64: 4>, scalar_prefetch = 0 : i64, scratch_operands = 1 : i64, tpu.core_type = #tpu.core_type<tc>, window_params = [{transform_indices = @transform_0, window_bounds = array<i64: 1, 1, 12, 18, 128>}, {pipeline_mode = #tpu.pipeline_mode<synchronous>, transform_indices = @transform_1, window_bounds = array<i64: 1152, 128>}, {pipeline_mode = #tpu.pipeline_mode<synchronous>, transform_indices = @transform_2, window_bounds = array<i64: 1152, 128>}, {pipeline_mode = #tpu.pipeline_mode<synchronous>, transform_indices = @transform_3, window_bounds = array<i64: 8, 128>}, {transform_indices = @transform_4, window_bounds = array<i64: 1, 128, 128>}]} {
    %c2_i32 = arith.constant 2 : i32
    %c0_i32 = arith.constant 0 : i32
    %0 = arith.cmpi eq, %c2_i32, %c0_i32 : i32
    %c1_i32 = arith.constant 1 : i32
    %1 = arith.select %0, %c1_i32, %c2_i32 : i32
    %2 = arith.remsi %arg0, %1 : i32
    %c0_i32_0 = arith.constant 0 : i32
    %3 = arith.cmpi ne, %2, %c0_i32_0 : i32
    %c0_i32_1 = arith.constant 0 : i32
    %4 = arith.cmpi slt, %2, %c0_i32_1 : i32
    %c0_i32_2 = arith.constant 0 : i32
    %5 = arith.cmpi slt, %1, %c0_i32_2 : i32
    %6 = arith.xori %4, %5 : i1
    %7 = arith.andi %6, %3 : i1
    %8 = arith.addi %2, %1 : i32
    %9 = arith.select %7, %8, %2 : i32
    %c8_i32 = arith.constant 8 : i32
    %10 = arith.muli %9, %c8_i32 : i32
    %c0 = arith.constant 0 : index
    %c0_3 = arith.constant 0 : index
    %c0_4 = arith.constant 0 : index
    %c0_5 = arith.constant 0 : index
    %c0_6 = arith.constant 0 : index
    %11 = vector.load %arg1[%c0, %c0_3, %c0_4, %c0_5, %c0_6] : memref<1x1x12x18x128xbf16, #tpu.memory_space<vmem>>, vector<1x1x10x16x128xbf16>
    %12 = vector.shape_cast %11 : vector<1x1x10x16x128xbf16> to vector<10x16x128xbf16>
    %13 = vector.shape_cast %12 : vector<10x16x128xbf16> to vector<160x128xbf16>
    %c0_7 = arith.constant 0 : index
    %c0_8 = arith.constant 0 : index
    %c0_9 = arith.constant 0 : index
    %c1 = arith.constant 1 : index
    %c0_10 = arith.constant 0 : index
    %14 = vector.load %arg1[%c0_7, %c0_8, %c0_9, %c1, %c0_10] : memref<1x1x12x18x128xbf16, #tpu.memory_space<vmem>>, vector<1x1x10x16x128xbf16>
    %15 = vector.shape_cast %14 : vector<1x1x10x16x128xbf16> to vector<10x16x128xbf16>
    %16 = vector.shape_cast %15 : vector<10x16x128xbf16> to vector<160x128xbf16>
    %c0_11 = arith.constant 0 : index
    %c0_12 = arith.constant 0 : index
    %c0_13 = arith.constant 0 : index
    %c2 = arith.constant 2 : index
    %c0_14 = arith.constant 0 : index
    %17 = vector.load %arg1[%c0_11, %c0_12, %c0_13, %c2, %c0_14] : memref<1x1x12x18x128xbf16, #tpu.memory_space<vmem>>, vector<1x1x10x16x128xbf16>
    %18 = vector.shape_cast %17 : vector<1x1x10x16x128xbf16> to vector<10x16x128xbf16>
    %19 = vector.shape_cast %18 : vector<10x16x128xbf16> to vector<160x128xbf16>
    %c0_15 = arith.constant 0 : index
    %c0_16 = arith.constant 0 : index
    %c1_17 = arith.constant 1 : index
    %c0_18 = arith.constant 0 : index
    %c0_19 = arith.constant 0 : index
    %20 = vector.load %arg1[%c0_15, %c0_16, %c1_17, %c0_18, %c0_19] : memref<1x1x12x18x128xbf16, #tpu.memory_space<vmem>>, vector<1x1x10x16x128xbf16>
    %21 = vector.shape_cast %20 : vector<1x1x10x16x128xbf16> to vector<10x16x128xbf16>
    %22 = vector.shape_cast %21 : vector<10x16x128xbf16> to vector<160x128xbf16>
    %c0_20 = arith.constant 0 : index
    %c0_21 = arith.constant 0 : index
    %c1_22 = arith.constant 1 : index
    %c1_23 = arith.constant 1 : index
    %c0_24 = arith.constant 0 : index
    %23 = vector.load %arg1[%c0_20, %c0_21, %c1_22, %c1_23, %c0_24] : memref<1x1x12x18x128xbf16, #tpu.memory_space<vmem>>, vector<1x1x10x16x128xbf16>
    %24 = vector.shape_cast %23 : vector<1x1x10x16x128xbf16> to vector<10x16x128xbf16>
    %25 = vector.shape_cast %24 : vector<10x16x128xbf16> to vector<160x128xbf16>
    %c0_25 = arith.constant 0 : index
    %c0_26 = arith.constant 0 : index
    %c1_27 = arith.constant 1 : index
    %c2_28 = arith.constant 2 : index
    %c0_29 = arith.constant 0 : index
    %26 = vector.load %arg1[%c0_25, %c0_26, %c1_27, %c2_28, %c0_29] : memref<1x1x12x18x128xbf16, #tpu.memory_space<vmem>>, vector<1x1x10x16x128xbf16>
    %27 = vector.shape_cast %26 : vector<1x1x10x16x128xbf16> to vector<10x16x128xbf16>
    %28 = vector.shape_cast %27 : vector<10x16x128xbf16> to vector<160x128xbf16>
    %c0_30 = arith.constant 0 : index
    %c0_31 = arith.constant 0 : index
    %c2_32 = arith.constant 2 : index
    %c0_33 = arith.constant 0 : index
    %c0_34 = arith.constant 0 : index
    %29 = vector.load %arg1[%c0_30, %c0_31, %c2_32, %c0_33, %c0_34] : memref<1x1x12x18x128xbf16, #tpu.memory_space<vmem>>, vector<1x1x10x16x128xbf16>
    %30 = vector.shape_cast %29 : vector<1x1x10x16x128xbf16> to vector<10x16x128xbf16>
    %31 = vector.shape_cast %30 : vector<10x16x128xbf16> to vector<160x128xbf16>
    %c0_35 = arith.constant 0 : index
    %c0_36 = arith.constant 0 : index
    %c2_37 = arith.constant 2 : index
    %c1_38 = arith.constant 1 : index
    %c0_39 = arith.constant 0 : index
    %32 = vector.load %arg1[%c0_35, %c0_36, %c2_37, %c1_38, %c0_39] : memref<1x1x12x18x128xbf16, #tpu.memory_space<vmem>>, vector<1x1x10x16x128xbf16>
    %33 = vector.shape_cast %32 : vector<1x1x10x16x128xbf16> to vector<10x16x128xbf16>
    %34 = vector.shape_cast %33 : vector<10x16x128xbf16> to vector<160x128xbf16>
    %c0_40 = arith.constant 0 : index
    %c0_41 = arith.constant 0 : index
    %c2_42 = arith.constant 2 : index
    %c2_43 = arith.constant 2 : index
    %c0_44 = arith.constant 0 : index
    %35 = vector.load %arg1[%c0_40, %c0_41, %c2_42, %c2_43, %c0_44] : memref<1x1x12x18x128xbf16, #tpu.memory_space<vmem>>, vector<1x1x10x16x128xbf16>
    %36 = vector.shape_cast %35 : vector<1x1x10x16x128xbf16> to vector<10x16x128xbf16>
    %37 = vector.shape_cast %36 : vector<10x16x128xbf16> to vector<160x128xbf16>
    %38 = tpu.concatenate %13, %16, %19, %22, %25, %28, %31, %34, %37 in 1 : vector<160x128xbf16>, vector<160x128xbf16>, vector<160x128xbf16>, vector<160x128xbf16>, vector<160x128xbf16>, vector<160x128xbf16>, vector<160x128xbf16>, vector<160x128xbf16>, vector<160x128xbf16> -> vector<160x1152xbf16>
    %c0_45 = arith.constant 0 : index
    %c0_46 = arith.constant 0 : index
    %39 = vector.load %arg2[%c0_45, %c0_46] : memref<1152x128xbf16, #tpu.memory_space<vmem>>, vector<1152x128xbf16>
    %cst = arith.constant dense<0.000000e+00> : vector<160x128xf32>
    %40 = tpu.matmul %38, %39, %cst {dimension_numbers = #tpu.dot_dimension_numbers<[1], [0], [0], [1], [0, 0, 1, 1], [], []>} : vector<160x1152xbf16>, vector<1152x128xbf16>, vector<160x128xf32> -> vector<160x128xf32>
    %c0_47 = arith.constant 0 : index
    %c0_48 = arith.constant 0 : index
    %41 = vector.load %arg4[%c0_47, %c0_48] : memref<8x128xf32, #tpu.memory_space<vmem>>, vector<1x128xf32>
    %42 = vector.broadcast %41 : vector<1x128xf32> to vector<160x128xf32>
    %43 = arith.mulf %40, %42 : vector<160x128xf32>
    %c1_49 = arith.constant 1 : index
    %c0_50 = arith.constant 0 : index
    %44 = vector.load %arg4[%c1_49, %c0_50] : memref<8x128xf32, #tpu.memory_space<vmem>>, vector<1x128xf32>
    %45 = vector.broadcast %44 : vector<1x128xf32> to vector<160x128xf32>
    %46 = arith.addf %43, %45 : vector<160x128xf32>
    %cst_51 = arith.constant 0.000000e+00 : f32
    %47 = vector.broadcast %cst_51 : f32 to vector<160x128xf32>
    %48 = arith.maximumf %46, %47 : vector<160x128xf32>
    %49 = vector.shape_cast %48 : vector<160x128xf32> to vector<10x16x128xf32>
    %50 = tpu.iota {dimensions = array<i32: 0>} : vector<10x1x1xi32>
    %c1_i32_52 = arith.constant 1 : i32
    %51 = arith.subi %10, %c1_i32_52 : i32
    %52 = vector.broadcast %51 : i32 to vector<10x1x1xi32>
    %53 = arith.addi %52, %50 : vector<10x1x1xi32>
    %c0_i32_53 = arith.constant 0 : i32
    %54 = vector.broadcast %c0_i32_53 : i32 to vector<10x1x1xi32>
    %55 = arith.cmpi sge, %53, %54 : vector<10x1x1xi32>
    %c16_i32 = arith.constant 16 : i32
    %56 = vector.broadcast %c16_i32 : i32 to vector<10x1x1xi32>
    %57 = arith.cmpi slt, %53, %56 : vector<10x1x1xi32>
    %58 = arith.andi %55, %57 : vector<10x1x1xi1>
    %cst_54 = arith.constant 0.000000e+00 : f32
    %59 = vector.shape_cast %58 : vector<10x1x1xi1> to vector<10x1x1xi1>
    %60 = vector.broadcast %59 : vector<10x1x1xi1> to vector<10x16x128xi1>
    %61 = vector.broadcast %cst_54 : f32 to vector<10x16x128xf32>
    %62 = arith.select %60, %49, %61 : vector<10x16x128xi1>, vector<10x16x128xf32>
    %cst_55 = arith.constant 0.000000e+00 : bf16
    %63 = vector.broadcast %cst_55 : bf16 to vector<10x1x128xbf16>
    %c0_56 = arith.constant 0 : index
    %c0_57 = arith.constant 0 : index
    %c0_58 = arith.constant 0 : index
    %64 = vector.load %arg6[%c0_56, %c0_57, %c0_58] : memref<10x18x128xbf16, #tpu.memory_space<vmem>>, vector<10x1x128xbf16>
    tpu.vector_store %arg6[%c0_56, %c0_57, %c0_58], %63 {strides = array<i32>} : memref<10x18x128xbf16, #tpu.memory_space<vmem>>, vector<10x1x128xbf16>,
    %cst_59 = arith.constant 0.000000e+00 : bf16
    %65 = vector.broadcast %cst_59 : bf16 to vector<10x1x128xbf16>
    %c0_60 = arith.constant 0 : index
    %c17 = arith.constant 17 : index
    %c0_61 = arith.constant 0 : index
    %66 = vector.load %arg6[%c0_60, %c17, %c0_61] : memref<10x18x128xbf16, #tpu.memory_space<vmem>>, vector<10x1x128xbf16>
    tpu.vector_store %arg6[%c0_60, %c17, %c0_61], %65 {strides = array<i32>} : memref<10x18x128xbf16, #tpu.memory_space<vmem>>, vector<10x1x128xbf16>,
    %67 = arith.truncf %62 : vector<10x16x128xf32> to vector<10x16x128xbf16>
    %c0_62 = arith.constant 0 : index
    %c1_63 = arith.constant 1 : index
    %c0_64 = arith.constant 0 : index
    %68 = vector.load %arg6[%c0_62, %c1_63, %c0_64] : memref<10x18x128xbf16, #tpu.memory_space<vmem>>, vector<10x16x128xbf16>
    tpu.vector_store %arg6[%c0_62, %c1_63, %c0_64], %67 {strides = array<i32>} : memref<10x18x128xbf16, #tpu.memory_space<vmem>>, vector<10x16x128xbf16>,
    %c0_65 = arith.constant 0 : index
    %c0_66 = arith.constant 0 : index
    %c0_67 = arith.constant 0 : index
    %69 = vector.load %arg6[%c0_65, %c0_66, %c0_67] : memref<10x18x128xbf16, #tpu.memory_space<vmem>>, vector<8x16x128xbf16>
    %70 = vector.shape_cast %69 : vector<8x16x128xbf16> to vector<128x128xbf16>
    %c0_68 = arith.constant 0 : index
    %c1_69 = arith.constant 1 : index
    %c0_70 = arith.constant 0 : index
    %71 = vector.load %arg6[%c0_68, %c1_69, %c0_70] : memref<10x18x128xbf16, #tpu.memory_space<vmem>>, vector<8x16x128xbf16>
    %72 = vector.shape_cast %71 : vector<8x16x128xbf16> to vector<128x128xbf16>
    %c0_71 = arith.constant 0 : index
    %c2_72 = arith.constant 2 : index
    %c0_73 = arith.constant 0 : index
    %73 = vector.load %arg6[%c0_71, %c2_72, %c0_73] : memref<10x18x128xbf16, #tpu.memory_space<vmem>>, vector<8x16x128xbf16>
    %74 = vector.shape_cast %73 : vector<8x16x128xbf16> to vector<128x128xbf16>
    %c1_74 = arith.constant 1 : index
    %c0_75 = arith.constant 0 : index
    %c0_76 = arith.constant 0 : index
    %75 = vector.load %arg6[%c1_74, %c0_75, %c0_76] : memref<10x18x128xbf16, #tpu.memory_space<vmem>>, vector<8x16x128xbf16>
    %76 = vector.shape_cast %75 : vector<8x16x128xbf16> to vector<128x128xbf16>
    %c1_77 = arith.constant 1 : index
    %c1_78 = arith.constant 1 : index
    %c0_79 = arith.constant 0 : index
    %77 = vector.load %arg6[%c1_77, %c1_78, %c0_79] : memref<10x18x128xbf16, #tpu.memory_space<vmem>>, vector<8x16x128xbf16>
    %78 = vector.shape_cast %77 : vector<8x16x128xbf16> to vector<128x128xbf16>
    %c1_80 = arith.constant 1 : index
    %c2_81 = arith.constant 2 : index
    %c0_82 = arith.constant 0 : index
    %79 = vector.load %arg6[%c1_80, %c2_81, %c0_82] : memref<10x18x128xbf16, #tpu.memory_space<vmem>>, vector<8x16x128xbf16>
    %80 = vector.shape_cast %79 : vector<8x16x128xbf16> to vector<128x128xbf16>
    %c2_83 = arith.constant 2 : index
    %c0_84 = arith.constant 0 : index
    %c0_85 = arith.constant 0 : index
    %81 = vector.load %arg6[%c2_83, %c0_84, %c0_85] : memref<10x18x128xbf16, #tpu.memory_space<vmem>>, vector<8x16x128xbf16>
    %82 = vector.shape_cast %81 : vector<8x16x128xbf16> to vector<128x128xbf16>
    %c2_86 = arith.constant 2 : index
    %c1_87 = arith.constant 1 : index
    %c0_88 = arith.constant 0 : index
    %83 = vector.load %arg6[%c2_86, %c1_87, %c0_88] : memref<10x18x128xbf16, #tpu.memory_space<vmem>>, vector<8x16x128xbf16>
    %84 = vector.shape_cast %83 : vector<8x16x128xbf16> to vector<128x128xbf16>
    %c2_89 = arith.constant 2 : index
    %c2_90 = arith.constant 2 : index
    %c0_91 = arith.constant 0 : index
    %85 = vector.load %arg6[%c2_89, %c2_90, %c0_91] : memref<10x18x128xbf16, #tpu.memory_space<vmem>>, vector<8x16x128xbf16>
    %86 = vector.shape_cast %85 : vector<8x16x128xbf16> to vector<128x128xbf16>
    %87 = tpu.concatenate %70, %72, %74, %76, %78, %80, %82, %84, %86 in 1 : vector<128x128xbf16>, vector<128x128xbf16>, vector<128x128xbf16>, vector<128x128xbf16>, vector<128x128xbf16>, vector<128x128xbf16>, vector<128x128xbf16>, vector<128x128xbf16>, vector<128x128xbf16> -> vector<128x1152xbf16>
    %c0_92 = arith.constant 0 : index
    %c0_93 = arith.constant 0 : index
    %88 = vector.load %arg3[%c0_92, %c0_93] : memref<1152x128xbf16, #tpu.memory_space<vmem>>, vector<1152x128xbf16>
    %cst_94 = arith.constant dense<0.000000e+00> : vector<128x128xf32>
    %89 = tpu.matmul %87, %88, %cst_94 {dimension_numbers = #tpu.dot_dimension_numbers<[1], [0], [0], [1], [0, 0, 1, 1], [], []>} : vector<128x1152xbf16>, vector<1152x128xbf16>, vector<128x128xf32> -> vector<128x128xf32>
    %c2_95 = arith.constant 2 : index
    %c0_96 = arith.constant 0 : index
    %90 = vector.load %arg4[%c2_95, %c0_96] : memref<8x128xf32, #tpu.memory_space<vmem>>, vector<1x128xf32>
    %91 = vector.broadcast %90 : vector<1x128xf32> to vector<128x128xf32>
    %92 = arith.mulf %89, %91 : vector<128x128xf32>
    %c3 = arith.constant 3 : index
    %c0_97 = arith.constant 0 : index
    %93 = vector.load %arg4[%c3, %c0_97] : memref<8x128xf32, #tpu.memory_space<vmem>>, vector<1x128xf32>
    %94 = vector.broadcast %93 : vector<1x128xf32> to vector<128x128xf32>
    %95 = arith.addf %92, %94 : vector<128x128xf32>
    %c0_98 = arith.constant 0 : index
    %c0_99 = arith.constant 0 : index
    %c2_100 = arith.constant 2 : index
    %c1_101 = arith.constant 1 : index
    %c0_102 = arith.constant 0 : index
    %96 = vector.load %arg1[%c0_98, %c0_99, %c2_100, %c1_101, %c0_102] : memref<1x1x12x18x128xbf16, #tpu.memory_space<vmem>>, vector<1x1x8x16x128xbf16>
    %97 = vector.shape_cast %96 : vector<1x1x8x16x128xbf16> to vector<8x16x128xbf16>
    %98 = vector.shape_cast %97 : vector<8x16x128xbf16> to vector<128x128xbf16>
    %99 = arith.extf %98 : vector<128x128xbf16> to vector<128x128xf32>
    %100 = arith.addf %95, %99 : vector<128x128xf32>
    %cst_103 = arith.constant 0.000000e+00 : f32
    %101 = vector.broadcast %cst_103 : f32 to vector<128x128xf32>
    %102 = arith.maximumf %100, %101 : vector<128x128xf32>
    %c0_104 = arith.constant 0 : index
    %c0_105 = arith.constant 0 : index
    %c0_106 = arith.constant 0 : index
    %103 = vector.load %arg5[%c0_104, %c0_105, %c0_106] : memref<1x128x128xf32, #tpu.memory_space<vmem>>, vector<1x128x128xf32>
    %104 = vector.shape_cast %103 : vector<1x128x128xf32> to vector<128x128xf32>
    %105 = vector.shape_cast %102 : vector<128x128xf32> to vector<1x128x128xf32>
    tpu.vector_store %arg5[%c0_104, %c0_105, %c0_106], %105 {strides = array<i32>} : memref<1x128x128xf32, #tpu.memory_space<vmem>>, vector<1x128x128xf32>,
    return
  }
  func.func @transform_0(%arg0: i32) -> (i32, i32, i32, i32, i32) {
    %c0_i32 = arith.constant 0 : i32
    %c0_i32_0 = arith.constant 0 : i32
    %c0_i32_1 = arith.constant 0 : i32
    %c0_i32_2 = arith.constant 0 : i32
    %c0_i32_3 = arith.constant 0 : i32
    return %arg0, %c0_i32, %c0_i32_0, %c0_i32_1, %c0_i32_2 : i32, i32, i32, i32, i32
  }
  func.func @transform_1(%arg0: i32) -> (i32, i32) {
    %c0_i32 = arith.constant 0 : i32
    %c0_i32_0 = arith.constant 0 : i32
    %c0_i32_1 = arith.constant 0 : i32
    return %c0_i32, %c0_i32_0 : i32, i32
  }
  func.func @transform_2(%arg0: i32) -> (i32, i32) {
    %c0_i32 = arith.constant 0 : i32
    %c0_i32_0 = arith.constant 0 : i32
    %c0_i32_1 = arith.constant 0 : i32
    return %c0_i32, %c0_i32_0 : i32, i32
  }
  func.func @transform_3(%arg0: i32) -> (i32, i32) {
    %c0_i32 = arith.constant 0 : i32
    %c0_i32_0 = arith.constant 0 : i32
    %c0_i32_1 = arith.constant 0 : i32
    return %c0_i32, %c0_i32_0 : i32, i32
  }
  func.func @transform_4(%arg0: i32) -> (i32, i32, i32) {
    %c0_i32 = arith.constant 0 : i32
    %c0_i32_0 = arith.constant 0 : i32
    %c0_i32_1 = arith.constant 0 : i32
    return %arg0, %c0_i32, %c0_i32_0 : i32, i32, i32
  }
}

</mosaic_0001>

<llo_original>
// kernel: tpu_custom_call.1
$region0: #{tpu_custom_call.1}
  #allocation0 [shape = 'u32[]', space=smem, size = 0x4, offset = 0x4, fixed_abs, tag = 'smem constant byte address 0x4 - core index']
  #allocation1 [shape = 'u32[144,128]{1,0:T(1,128)}', space=vmem, size = 0x12000, scoped, tag = 'internal scratch']
  #allocation2 [shape = 'bf16[10,18,128]{2,1,0:T(8,128)(2,1)}', space=vmem, size = 0xf000, scoped, tag = 'scratch operand']
  %s0 = inlined_call_operand.vmem [shape: bf16[4,1,12,18,128], index: 0, kind: input, shape index: {}]
  %s1 = inlined_call_operand.vmem [shape: bf16[1152,128], index: 1, kind: input, shape index: {}]
  %s2 = inlined_call_operand.hbm [shape: bf16[1152,128], index: 2, kind: input, shape index: {}]
  %s3 = inlined_call_operand.vmem [shape: f32[8,128], index: 3, kind: input, shape index: {}]
  %s4 = inlined_call_operand.hbm [shape: f32[4,128,128], index: 4, kind: output, shape index: {}]
  %s5 = sld [smem:[#allocation0]]
  $region53: #{tpu_custom_call.1} parent=0
    _
  %s7 = ssub.s32 1, %s5
  %s8 = scalar_select 0, %s7, %s5
  $region1: #{tpu_custom_call.1} parent=0
    #allocation3 [shape = 'u8[294912]{0}', space=vmem, size = 0x48000, scoped, tag = 'input window, operand 2, single buffered']
    #allocation4 [shape = 's32[2]{0}', space=sflag, size = 0x8, scoped, tag = 'scoped memory for tpu_custom_call.1']
    #allocation5 [shape = 's32[2]{0}', space=sflag, size = 0x8, scoped, tag = 'scoped memory for tpu_custom_call.1']
    #allocation6 [shape = 'u8[131072]{0}', space=vmem, size = 0x20000, scoped, tag = 'output window, operand 0']
    %9 = vsyncpa [#allocation4], 0
    %10 = vsyncpa [#allocation5], 0
    %s11 = scalar_lea.sflag [#allocation5], 1
    %12 = vsyncpa %s11, 0
    loop: start=0, step=1, limit=6
    $region2: #{tpu_custom_call.1} parent=1 // loop_pre_header
      _
    $region3: #{tpu_custom_call.1} parent=1 // loop_header
      %s14 = sphi 0, %s18
      %p15 = scmp.ge.s32.totalorder %s14, 6
      %s24 = sphi 0, %s26
      %s27 = sphi 0, %s24
      %s28 = sphi 0, %s27
      %s44 = sphi 0, %s28
      %s48 = sphi 0, %s48
      %s50 = sphi 0, %s48
      %s51 = sphi 0, %s50
      %s65 = sphi 0, %s51
      %s69 = sphi 0, %s69
      %s71 = sphi 0, %s69
      %s72 = sphi 0, %s71
      %s86 = sphi 0, %s72
      %s90 = sphi 0, %s90
      %s92 = sphi 0, %s90
      %s93 = sphi 0, %s92
      %s107 = sphi 0, %s93
      %s113 = sphi 0, %s115
      %s116 = sphi 0, %s113
      %s117 = sphi 0, %s116
      %s133 = sphi 0, %s117
    $region4: #{tpu_custom_call.1} parent=1 // loop_header_branch
      %17 = sbr.rel (%p15) target = $region8
    $region5: #{tpu_custom_call.1} parent=1 // loop_body
      %s19 = ssub.s32 %s14, 1
      %s20 = ssub.s32 %s14, 2
      %s21 = sadd.s32 %s14, 1
      %s22 = ssub.s32 %s14, %s21
      %p23 = scmp.eq.s32.totalorder %s22, 0
      %s25 = sadd.s32 %s24, 1
      %s26 = scalar_select %p23, %s24, %s25
      %p29 = pneg %p23
      %p30 = scmp.eq.s32.totalorder %s14, 3
      %p31 = por %p29, %p30
      %p32 = scmp.ne.s32.totalorder %s24, %s27
      %p33 = scmp.eq.s32.totalorder %s14, 0
      %p34 = por %p32, %p33
      %p35 = scmp.ne.s32.totalorder %s24, %s27
      %p36 = scmp.eq.s32.totalorder %s19, 3
      %p37 = por %p35, %p36
      %p38 = scmp.ne.s32.totalorder %s27, %s28
      %p39 = scmp.eq.s32.totalorder %s19, 0
      %p40 = por %p38, %p39
      %p41 = scmp.ne.s32.totalorder %s27, %s28
      %p42 = scmp.eq.s32.totalorder %s20, 3
      %p43 = por %p41, %p42
      %p45 = scmp.ne.s32.totalorder %s28, %s44
      %p46 = scmp.eq.s32.totalorder %s20, 0
      %p47 = por %p45, %p46
      %s49 = sadd.s32 %s48, 1
      %p52 = scmp.eq.s32.totalorder %s14, 3
      %p53 = scmp.ne.s32.totalorder %s48, %s50
      %p54 = scmp.eq.s32.totalorder %s14, 0
      %p55 = por %p53, %p54
      %p56 = scmp.ne.s32.totalorder %s48, %s50
      %p57 = scmp.eq.s32.totalorder %s19, 3
      %p58 = por %p56, %p57
      %p59 = scmp.ne.s32.totalorder %s50, %s51
      %p60 = scmp.eq.s32.totalorder %s19, 0
      %p61 = por %p59, %p60
      %p62 = scmp.ne.s32.totalorder %s50, %s51
      %p63 = scmp.eq.s32.totalorder %s20, 3
      %p64 = por %p62, %p63
      %p66 = scmp.ne.s32.totalorder %s51, %s65
      %p67 = scmp.eq.s32.totalorder %s20, 0
      %p68 = por %p66, %p67
      %s70 = sadd.s32 %s69, 1
      %p73 = scmp.eq.s32.totalorder %s14, 3
      %p74 = scmp.ne.s32.totalorder %s69, %s71
      %p75 = scmp.eq.s32.totalorder %s14, 0
      %p76 = por %p74, %p75
      %p77 = scmp.ne.s32.totalorder %s69, %s71
      %p78 = scmp.eq.s32.totalorder %s19, 3
      %p79 = por %p77, %p78
      %p80 = scmp.ne.s32.totalorder %s71, %s72
      %p81 = scmp.eq.s32.totalorder %s19, 0
      %p82 = por %p80, %p81
      %p83 = scmp.ne.s32.totalorder %s71, %s72
      %p84 = scmp.eq.s32.totalorder %s20, 3
      %p85 = por %p83, %p84
      %p87 = scmp.ne.s32.totalorder %s72, %s86
      %p88 = scmp.eq.s32.totalorder %s20, 0
      %p89 = por %p87, %p88
      %s91 = sadd.s32 %s90, 1
      %p94 = scmp.eq.s32.totalorder %s14, 3
      %p95 = scmp.ne.s32.totalorder %s90, %s92
      %p96 = scmp.eq.s32.totalorder %s14, 0
      %p97 = por %p95, %p96
      %p98 = scmp.ne.s32.totalorder %s90, %s92
      %p99 = scmp.eq.s32.totalorder %s19, 3
      %p100 = por %p98, %p99
      %p101 = scmp.ne.s32.totalorder %s92, %s93
      %p102 = scmp.eq.s32.totalorder %s19, 0
      %p103 = por %p101, %p102
      %p104 = scmp.ne.s32.totalorder %s92, %s93
      %p105 = scmp.eq.s32.totalorder %s20, 3
      %p106 = por %p104, %p105
      %p108 = scmp.ne.s32.totalorder %s93, %s107
      %p109 = scmp.eq.s32.totalorder %s20, 0
      %p110 = por %p108, %p109
      %s111 = ssub.s32 %s14, %s21
      %p112 = scmp.eq.s32.totalorder %s111, 0
      %s114 = sadd.s32 %s113, 1
      %s115 = scalar_select %p112, %s113, %s114
      %p118 = pneg %p112
      %p119 = scmp.eq.s32.totalorder %s14, 3
      %p120 = por %p118, %p119
      %p121 = scmp.ne.s32.totalorder %s113, %s116
      %p122 = scmp.eq.s32.totalorder %s14, 0
      %p123 = por %p121, %p122
      %p124 = scmp.ne.s32.totalorder %s113, %s116
      %p125 = scmp.eq.s32.totalorder %s19, 3
      %p126 = por %p124, %p125
      %p127 = scmp.ne.s32.totalorder %s116, %s117
      %p128 = scmp.eq.s32.totalorder %s19, 0
      %p129 = por %p127, %p128
      %p130 = scmp.ne.s32.totalorder %s116, %s117
      %p131 = scmp.eq.s32.totalorder %s20, 3
      %p132 = por %p130, %p131
      %p134 = scmp.ne.s32.totalorder %s117, %s133
      %p135 = scmp.eq.s32.totalorder %s20, 0
      %p136 = por %p134, %p135
      %p137 = scmp.le.s32.totalorder 1, %s14
      %p138 = scmp.lt.s32.totalorder %s14, 5
      %p139 = pnand %p137, %p138
      %p140 = pneg %p139
      // Predicated region
      $region9: #{tpu_custom_call.1} parent=5 // pred_check
        _
      $region10: #{tpu_custom_call.1} parent=5 // pred_check_branch
        %142 = sbr.rel (%p139) target = $region12
      $region11: #{tpu_custom_call.1} parent=5 // pred_region
        %s143 = ssub.s32 %s14, 1
        // Predicated region
        $region13: #{tpu_custom_call.1} parent=11 // pred_check
          %p144 = pneg %p61
        $region14: #{tpu_custom_call.1} parent=11 // pred_check_branch
          %146 = sbr.rel (%p144) target = $region16
        $region15: #{tpu_custom_call.1} parent=11 // pred_region
          _
        $region16: #{tpu_custom_call.1} parent=11 // pred_fallthru
          _
        // Predicated region
        $region17: #{tpu_custom_call.1} parent=11 // pred_check
          %p147 = pneg %p82
        $region18: #{tpu_custom_call.1} parent=11 // pred_check_branch
          %149 = sbr.rel (%p147) target = $region20
        $region19: #{tpu_custom_call.1} parent=11 // pred_region
          %s151 = ssub.s32 9216, 9216
          %152 = vsyncadd [#allocation4], %s151
          %s153 = sshll.u32 [#allocation3], 4
          %s154 = int_to_ptr.vmem [resolvable:$true] %s153
          %159 = dma.hbm_to_vmem [thread:$0]  %s2, 9216, %s154, [#allocation4], 64, 64, 4
        $region20: #{tpu_custom_call.1} parent=11 // pred_fallthru
          _
        // Predicated region
        $region21: #{tpu_custom_call.1} parent=11 // pred_check
          %p160 = pneg %p103
        $region22: #{tpu_custom_call.1} parent=11 // pred_check_branch
          %162 = sbr.rel (%p160) target = $region24
        $region23: #{tpu_custom_call.1} parent=11 // pred_region
          _
        $region24: #{tpu_custom_call.1} parent=11 // pred_fallthru
          _
      $region12: #{tpu_custom_call.1} parent=5 // pred_fallthru
        _
      %p163 = scmp.lt.s32.totalorder %s14, 4
      // Predicated region
      $region25: #{tpu_custom_call.1} parent=5 // pred_check
        %p164 = pneg %p163
      $region26: #{tpu_custom_call.1} parent=5 // pred_check_branch
        %166 = sbr.rel (%p164) target = $region28
      $region27: #{tpu_custom_call.1} parent=5 // pred_region
        // Predicated region
        $region29: #{tpu_custom_call.1} parent=27 // pred_check
          %p167 = pneg %p34
        $region30: #{tpu_custom_call.1} parent=27 // pred_check_branch
          %169 = sbr.rel (%p167) target = $region32
        $region31: #{tpu_custom_call.1} parent=27 // pred_region
          %p170 = scmp.lt.s32.totalorder %s14, 3
          %s171 = scalar_select %p170, %s14, 3
          %s172 = smul.addr %s171, 36
          %s173 = smul.addr %s172, 4
          %s174 = scalar_lea.vmem %s0, %s173
        $region32: #{tpu_custom_call.1} parent=27 // pred_fallthru
          _
      $region28: #{tpu_custom_call.1} parent=5 // pred_fallthru
        _
      %p175 = scmp.le.s32.totalorder 1, %s14
      %p176 = scmp.lt.s32.totalorder %s14, 5
      %p177 = pnand %p175, %p176
      %p178 = pneg %p177
      // Predicated region
      $region33: #{tpu_custom_call.1} parent=5 // pred_check
        _
      $region34: #{tpu_custom_call.1} parent=5 // pred_check_branch
        %180 = sbr.rel (%p177) target = $region36
      $region35: #{tpu_custom_call.1} parent=5 // pred_region
        %s181 = ssub.s32 %s14, 1
        // Predicated region
        $region37: #{tpu_custom_call.1} parent=35 // pred_check
          %p182 = pneg %p82
        $region38: #{tpu_custom_call.1} parent=35 // pred_check_branch
          %184 = sbr.rel (%p182) target = $region40
        $region39: #{tpu_custom_call.1} parent=35 // pred_region
          %185 = dma.done [#allocation4], 9216
        $region40: #{tpu_custom_call.1} parent=35 // pred_fallthru
          _
        %p186 = scmp.lt.s32.totalorder %s19, 3
        %s187 = scalar_select %p186, %s19, 3
        %s188 = smul.addr %s187, 36
        %s189 = smul.addr %s188, 4
        %s190 = scalar_lea.vmem %s0, %s189
        %p191 = pneg %p40
        %p192 = pneg %p37
        %p193 = pneg %p61
        %p194 = pneg %p58
        %p195 = pneg %p82
        %p196 = pneg %p79
        %p197 = pneg %p103
        %p198 = pneg %p100
        %p199 = pneg %p129
        %p200 = pneg %p126
        %s201 = sand.u32 %s116, 1
        %s202 = scalar_lea.sflag [#allocation5], %s201
        %s203 = sand.u32 %s116, 1
        %s204 = smul.addr %s203, 128
        %s205 = scalar_lea.vmem [#allocation6], %s204
        %p206 = scmp.lt.s32.totalorder %s19, 3
        %s207 = scalar_select %p206, %s19, 3
        %s208 = smul.addr %s207, 36
        %s209 = smul.addr %s208, 4
        %s210 = scalar_lea.vmem %s0, %s209
        %p212 = scmp.lt.s32.totalorder %s19, 0
        %s213 = ssub.s32 0, %s19
        %s214 = scalar_select %p212, %s213, %s19
        %s215 = sand.u32 %s214, 1
        %s216 = ssub.s32 0, %s215
        %s217 = scalar_select %p212, %s216, %s215
        %p218 = scmp.ne.s32.totalorder %s217, 0
        %p219 = scmp.lt.s32.totalorder %s217, 0
        %p220 = pnand %p219, %p218
        %p221 = pneg %p220
        %s222 = sadd.s32 %s217, 2
        %s223 = scalar_select %p221, %s222, %s217
        %s224 = smul.u32 %s223, 8
        %v225 = vld [vmem:[%s210] sm:$0xf]
        %v226 = vld [vmem:[%s210 + $0x4] sm:$0xf]
        %v227 = vld [vmem:[%s210 + $0xc] sm:$0xf]
        %v228 = vld [vmem:[%s210 + $0x10] sm:$0xf]
        %v229 = vld [vmem:[%s210 + $0x18] sm:$0xf]
        %v230 = vld [vmem:[%s210 + $0x1c] sm:$0xf]
        %v231 = vld [vmem:[%s210 + $0x24] sm:$0xf]
        %v232 = vld [vmem:[%s210 + $0x28] sm:$0xf]
        %v233 = vld [vmem:[%s210 + $0x30] sm:$0xf]
        %v234 = vld [vmem:[%s210 + $0x34] sm:$0xf]
        %v235 = vld [vmem:[%s210 + $0x3c] sm:$0xf]
        %v236 = vld [vmem:[%s210 + $0x40] sm:$0xf]
        %v237 = vld [vmem:[%s210 + $0x48] sm:$0xf]
        %v238 = vld [vmem:[%s210 + $0x4c] sm:$0xf]
        %v239 = vld [vmem:[%s210 + $0x54] sm:$0xf]
        %v240 = vld [vmem:[%s210 + $0x58] sm:$0xf]
        %v241 = vld [vmem:[%s210 + $0x60] sm:$0xf]
        %v242 = vld [vmem:[%s210 + $0x64] sm:$0xf]
        %v243 = vld [vmem:[%s210 + $0x6c] sm:$0xf]
        %v244 = vld [vmem:[%s210 + $0x70] sm:$0xf]
        %v245 = vld [vmem:[%s210 + $0x8] sm:$0x1]
        %v246 = vld [vmem:[%s210 + $0x14] sm:$0x1]
        %v247 = vld [vmem:[%s210 + $0x20] sm:$0x1]
        %v248 = vld [vmem:[%s210 + $0x2c] sm:$0x1]
        %v249 = vld [vmem:[%s210 + $0x38] sm:$0x1]
        %v250 = vld [vmem:[%s210 + $0x44] sm:$0x1]
        %v251 = vld [vmem:[%s210 + $0x50] sm:$0x1]
        %v252 = vld [vmem:[%s210 + $0x5c] sm:$0x1]
        %v253 = vld [vmem:[%s210 + $0x68] sm:$0x1]
        %v254 = vld [vmem:[%s210 + $0x74] sm:$0x1]
        %vm255 = vsmask.f32 3328
        %vm256 = vsmask.f32 7440
        %vm257 = vmor %vm255, %vm256
        %v259 = vshrl.u32 %v225, 16
        %v261 = vrot.slane %v259, 4
        %v262 = vshll.u32 %v225, 16
        %v264 = vrot.slane %v262, 5
        %v265 = vor.u32 %v261, %v264
        %v266 = vrot.slane %v265, 4
        %v268 = vshll.u32 %v226, 16
        %v270 = vrot.slane %v268, 5
        %v271 = vsel %vm257, %v266, %v270
        %v272 = vshrl.u32 %v226, 16
        %v274 = vrot.slane %v272, 4
        %v275 = vor.u32 %v274, %v270
        %v276 = vrot.slane %v275, 4
        %v278 = vshll.u32 %v245, 16
        %v280 = vrot.slane %v278, 5
        %v281 = vsel %vm257, %v276, %v280
        %v283 = vshrl.u32 %v227, 16
        %v285 = vrot.slane %v283, 4
        %v286 = vshll.u32 %v227, 16
        %v288 = vrot.slane %v286, 5
        %v289 = vor.u32 %v285, %v288
        %v290 = vrot.slane %v289, 4
        %v292 = vshll.u32 %v228, 16
        %v294 = vrot.slane %v292, 5
        %v295 = vsel %vm257, %v290, %v294
        %v296 = vshrl.u32 %v228, 16
        %v298 = vrot.slane %v296, 4
        %v299 = vor.u32 %v298, %v294
        %v300 = vrot.slane %v299, 4
        %v302 = vshll.u32 %v246, 16
        %v304 = vrot.slane %v302, 5
        %v305 = vsel %vm257, %v300, %v304
        %v307 = vshrl.u32 %v229, 16
        %v309 = vrot.slane %v307, 4
        %v310 = vshll.u32 %v229, 16
        %v312 = vrot.slane %v310, 5
        %v313 = vor.u32 %v309, %v312
        %v314 = vrot.slane %v313, 4
        %v316 = vshll.u32 %v230, 16
        %v318 = vrot.slane %v316, 5
        %v319 = vsel %vm257, %v314, %v318
        %v320 = vshrl.u32 %v230, 16
        %v322 = vrot.slane %v320, 4
        %v323 = vor.u32 %v322, %v318
        %v324 = vrot.slane %v323, 4
        %v326 = vshll.u32 %v247, 16
        %v328 = vrot.slane %v326, 5
        %v329 = vsel %vm257, %v324, %v328
        %v331 = vshrl.u32 %v231, 16
        %v333 = vrot.slane %v331, 4
        %v334 = vshll.u32 %v231, 16
        %v336 = vrot.slane %v334, 5
        %v337 = vor.u32 %v333, %v336
        %v338 = vrot.slane %v337, 4
        %v340 = vshll.u32 %v232, 16
        %v342 = vrot.slane %v340, 5
        %v343 = vsel %vm257, %v338, %v342
        %v344 = vshrl.u32 %v232, 16
        %v346 = vrot.slane %v344, 4
        %v347 = vor.u32 %v346, %v342
        %v348 = vrot.slane %v347, 4
        %v350 = vshll.u32 %v248, 16
        %v352 = vrot.slane %v350, 5
        %v353 = vsel %vm257, %v348, %v352
        %v355 = vshrl.u32 %v233, 16
        %v357 = vrot.slane %v355, 4
        %v358 = vshll.u32 %v233, 16
        %v360 = vrot.slane %v358, 5
        %v361 = vor.u32 %v357, %v360
        %v362 = vrot.slane %v361, 4
        %v364 = vshll.u32 %v234, 16
        %v366 = vrot.slane %v364, 5
        %v367 = vsel %vm257, %v362, %v366
        %v368 = vshrl.u32 %v234, 16
        %v370 = vrot.slane %v368, 4
        %v371 = vor.u32 %v370, %v366
        %v372 = vrot.slane %v371, 4
        %v374 = vshll.u32 %v249, 16
        %v376 = vrot.slane %v374, 5
        %v377 = vsel %vm257, %v372, %v376
        %v379 = vshrl.u32 %v235, 16
        %v381 = vrot.slane %v379, 4
        %v382 = vshll.u32 %v235, 16
        %v384 = vrot.slane %v382, 5
        %v385 = vor.u32 %v381, %v384
        %v386 = vrot.slane %v385, 4
        %v388 = vshll.u32 %v236, 16
        %v390 = vrot.slane %v388, 5
        %v391 = vsel %vm257, %v386, %v390
        %v392 = vshrl.u32 %v236, 16
        %v394 = vrot.slane %v392, 4
        %v395 = vor.u32 %v394, %v390
        %v396 = vrot.slane %v395, 4
        %v398 = vshll.u32 %v250, 16
        %v400 = vrot.slane %v398, 5
        %v401 = vsel %vm257, %v396, %v400
        %v403 = vshrl.u32 %v237, 16
        %v405 = vrot.slane %v403, 4
        %v406 = vshll.u32 %v237, 16
        %v408 = vrot.slane %v406, 5
        %v409 = vor.u32 %v405, %v408
        %v410 = vrot.slane %v409, 4
        %v412 = vshll.u32 %v238, 16
        %v414 = vrot.slane %v412, 5
        %v415 = vsel %vm257, %v410, %v414
        %v416 = vshrl.u32 %v238, 16
        %v418 = vrot.slane %v416, 4
        %v419 = vor.u32 %v418, %v414
        %v420 = vrot.slane %v419, 4
        %v422 = vshll.u32 %v251, 16
        %v424 = vrot.slane %v422, 5
        %v425 = vsel %vm257, %v420, %v424
        %v427 = vshrl.u32 %v239, 16
        %v429 = vrot.slane %v427, 4
        %v430 = vshll.u32 %v239, 16
        %v432 = vrot.slane %v430, 5
        %v433 = vor.u32 %v429, %v432
        %v434 = vrot.slane %v433, 4
        %v436 = vshll.u32 %v240, 16
        %v438 = vrot.slane %v436, 5
        %v439 = vsel %vm257, %v434, %v438
        %v440 = vshrl.u32 %v240, 16
        %v442 = vrot.slane %v440, 4
        %v443 = vor.u32 %v442, %v438
        %v444 = vrot.slane %v443, 4
        %v446 = vshll.u32 %v252, 16
        %v448 = vrot.slane %v446, 5
        %v449 = vsel %vm257, %v444, %v448
        %v451 = vshrl.u32 %v241, 16
        %v453 = vrot.slane %v451, 4
        %v454 = vshll.u32 %v241, 16
        %v456 = vrot.slane %v454, 5
        %v457 = vor.u32 %v453, %v456
        %v458 = vrot.slane %v457, 4
        %v460 = vshll.u32 %v242, 16
        %v462 = vrot.slane %v460, 5
        %v463 = vsel %vm257, %v458, %v462
        %v464 = vshrl.u32 %v242, 16
        %v466 = vrot.slane %v464, 4
        %v467 = vor.u32 %v466, %v462
        %v468 = vrot.slane %v467, 4
        %v470 = vshll.u32 %v253, 16
        %v472 = vrot.slane %v470, 5
        %v473 = vsel %vm257, %v468, %v472
        %v475 = vshrl.u32 %v243, 16
        %v477 = vrot.slane %v475, 4
        %v478 = vshll.u32 %v243, 16
        %v480 = vrot.slane %v478, 5
        %v481 = vor.u32 %v477, %v480
        %v482 = vrot.slane %v481, 4
        %v484 = vshll.u32 %v244, 16
        %v486 = vrot.slane %v484, 5
        %v487 = vsel %vm257, %v482, %v486
        %v488 = vshrl.u32 %v244, 16
        %v490 = vrot.slane %v488, 4
        %v491 = vor.u32 %v490, %v486
        %v492 = vrot.slane %v491, 4
        %v494 = vshll.u32 %v254, 16
        %v496 = vrot.slane %v494, 5
        %v497 = vsel %vm257, %v492, %v496
        %v498 = vld [vmem:[%s210] sm:$0xe]
        %v499 = vld [vmem:[%s210 + $0xc] sm:$0xe]
        %v500 = vld [vmem:[%s210 + $0x18] sm:$0xe]
        %v501 = vld [vmem:[%s210 + $0x24] sm:$0xe]
        %v502 = vld [vmem:[%s210 + $0x30] sm:$0xe]
        %v503 = vld [vmem:[%s210 + $0x3c] sm:$0xe]
        %v504 = vld [vmem:[%s210 + $0x48] sm:$0xe]
        %v505 = vld [vmem:[%s210 + $0x54] sm:$0xe]
        %v506 = vld [vmem:[%s210 + $0x60] sm:$0xe]
        %v507 = vld [vmem:[%s210 + $0x6c] sm:$0xe]
        %vm538 = vcmask 1042432
        %vm539 = vcmask 1046532
        %vm540 = vmor %vm538, %vm539
        %v541 = vrot.slane %v498, 5
        %v542 = vrot.slane %v541, 4
        %v543 = vrot.slane %v226, 5
        %v544 = vsel %vm540, %v542, %v543
        %v545 = vrot.slane %v543, 4
        %v546 = vrot.slane %v245, 5
        %v547 = vsel %vm540, %v545, %v546
        %v548 = vrot.slane %v499, 5
        %v549 = vrot.slane %v548, 4
        %v550 = vrot.slane %v228, 5
        %v551 = vsel %vm540, %v549, %v550
        %v552 = vrot.slane %v550, 4
        %v553 = vrot.slane %v246, 5
        %v554 = vsel %vm540, %v552, %v553
        %v555 = vrot.slane %v500, 5
        %v556 = vrot.slane %v555, 4
        %v557 = vrot.slane %v230, 5
        %v558 = vsel %vm540, %v556, %v557
        %v559 = vrot.slane %v557, 4
        %v560 = vrot.slane %v247, 5
        %v561 = vsel %vm540, %v559, %v560
        %v562 = vrot.slane %v501, 5
        %v563 = vrot.slane %v562, 4
        %v564 = vrot.slane %v232, 5
        %v565 = vsel %vm540, %v563, %v564
        %v566 = vrot.slane %v564, 4
        %v567 = vrot.slane %v248, 5
        %v568 = vsel %vm540, %v566, %v567
        %v569 = vrot.slane %v502, 5
        %v570 = vrot.slane %v569, 4
        %v571 = vrot.slane %v234, 5
        %v572 = vsel %vm540, %v570, %v571
        %v573 = vrot.slane %v571, 4
        %v574 = vrot.slane %v249, 5
        %v575 = vsel %vm540, %v573, %v574
        %v576 = vrot.slane %v503, 5
        %v577 = vrot.slane %v576, 4
        %v578 = vrot.slane %v236, 5
        %v579 = vsel %vm540, %v577, %v578
        %v580 = vrot.slane %v578, 4
        %v581 = vrot.slane %v250, 5
        %v582 = vsel %vm540, %v580, %v581
        %v583 = vrot.slane %v504, 5
        %v584 = vrot.slane %v583, 4
        %v585 = vrot.slane %v238, 5
        %v586 = vsel %vm540, %v584, %v585
        %v587 = vrot.slane %v585, 4
        %v588 = vrot.slane %v251, 5
        %v589 = vsel %vm540, %v587, %v588
        %v590 = vrot.slane %v505, 5
        %v591 = vrot.slane %v590, 4
        %v592 = vrot.slane %v240, 5
        %v593 = vsel %vm540, %v591, %v592
        %v594 = vrot.slane %v592, 4
        %v595 = vrot.slane %v252, 5
        %v596 = vsel %vm540, %v594, %v595
        %v597 = vrot.slane %v506, 5
        %v598 = vrot.slane %v597, 4
        %v599 = vrot.slane %v242, 5
        %v600 = vsel %vm540, %v598, %v599
        %v601 = vrot.slane %v599, 4
        %v602 = vrot.slane %v253, 5
        %v603 = vsel %vm540, %v601, %v602
        %v604 = vrot.slane %v507, 5
        %v605 = vrot.slane %v604, 4
        %v606 = vrot.slane %v244, 5
        %v607 = vsel %vm540, %v605, %v606
        %v608 = vrot.slane %v606, 4
        %v609 = vrot.slane %v254, 5
        %v610 = vsel %vm540, %v608, %v609
        %s611 = scalar_lea.vmem %s210, 12
        %v612 = vld [vmem:[%s611] sm:$0xf]
        %v613 = vld [vmem:[%s611 + $0x4] sm:$0xf]
        %v614 = vld [vmem:[%s611 + $0xc] sm:$0xf]
        %v615 = vld [vmem:[%s611 + $0x10] sm:$0xf]
        %v616 = vld [vmem:[%s611 + $0x18] sm:$0xf]
        %v617 = vld [vmem:[%s611 + $0x1c] sm:$0xf]
        %v618 = vld [vmem:[%s611 + $0x24] sm:$0xf]
        %v619 = vld [vmem:[%s611 + $0x28] sm:$0xf]
        %v620 = vld [vmem:[%s611 + $0x30] sm:$0xf]
        %v621 = vld [vmem:[%s611 + $0x34] sm:$0xf]
        %v622 = vld [vmem:[%s611 + $0x3c] sm:$0xf]
        %v623 = vld [vmem:[%s611 + $0x40] sm:$0xf]
        %v624 = vld [vmem:[%s611 + $0x48] sm:$0xf]
        %v625 = vld [vmem:[%s611 + $0x4c] sm:$0xf]
        %v626 = vld [vmem:[%s611 + $0x54] sm:$0xf]
        %v627 = vld [vmem:[%s611 + $0x58] sm:$0xf]
        %v628 = vld [vmem:[%s611 + $0x60] sm:$0xf]
        %v629 = vld [vmem:[%s611 + $0x64] sm:$0xf]
        %v630 = vld [vmem:[%s611 + $0x6c] sm:$0xf]
        %v631 = vld [vmem:[%s611 + $0x70] sm:$0xf]
        %v632 = vld [vmem:[%s611 + $0x8] sm:$0x1]
        %v633 = vld [vmem:[%s611 + $0x14] sm:$0x1]
        %v634 = vld [vmem:[%s611 + $0x20] sm:$0x1]
        %v635 = vld [vmem:[%s611 + $0x2c] sm:$0x1]
        %v636 = vld [vmem:[%s611 + $0x38] sm:$0x1]
        %v637 = vld [vmem:[%s611 + $0x44] sm:$0x1]
        %v638 = vld [vmem:[%s611 + $0x50] sm:$0x1]
        %v639 = vld [vmem:[%s611 + $0x5c] sm:$0x1]
        %v640 = vld [vmem:[%s611 + $0x68] sm:$0x1]
        %v641 = vld [vmem:[%s611 + $0x74] sm:$0x1]
        %v643 = vshrl.u32 %v612, 16
        %v645 = vrot.slane %v643, 4
        %v646 = vshll.u32 %v612, 16
        %v648 = vrot.slane %v646, 5
        %v649 = vor.u32 %v645, %v648
        %v650 = vrot.slane %v649, 4
        %v652 = vshll.u32 %v613, 16
        %v654 = vrot.slane %v652, 5
        %v655 = vsel %vm257, %v650, %v654
        %v656 = vshrl.u32 %v613, 16
        %v658 = vrot.slane %v656, 4
        %v659 = vor.u32 %v658, %v654
        %v660 = vrot.slane %v659, 4
        %v662 = vshll.u32 %v632, 16
        %v664 = vrot.slane %v662, 5
        %v665 = vsel %vm257, %v660, %v664
        %v667 = vshrl.u32 %v614, 16
        %v669 = vrot.slane %v667, 4
        %v670 = vshll.u32 %v614, 16
        %v672 = vrot.slane %v670, 5
        %v673 = vor.u32 %v669, %v672
        %v674 = vrot.slane %v673, 4
        %v676 = vshll.u32 %v615, 16
        %v678 = vrot.slane %v676, 5
        %v679 = vsel %vm257, %v674, %v678
        %v680 = vshrl.u32 %v615, 16
        %v682 = vrot.slane %v680, 4
        %v683 = vor.u32 %v682, %v678
        %v684 = vrot.slane %v683, 4
        %v686 = vshll.u32 %v633, 16
        %v688 = vrot.slane %v686, 5
        %v689 = vsel %vm257, %v684, %v688
        %v691 = vshrl.u32 %v616, 16
        %v693 = vrot.slane %v691, 4
        %v694 = vshll.u32 %v616, 16
        %v696 = vrot.slane %v694, 5
        %v697 = vor.u32 %v693, %v696
        %v698 = vrot.slane %v697, 4
        %v700 = vshll.u32 %v617, 16
        %v702 = vrot.slane %v700, 5
        %v703 = vsel %vm257, %v698, %v702
        %v704 = vshrl.u32 %v617, 16
        %v706 = vrot.slane %v704, 4
        %v707 = vor.u32 %v706, %v702
        %v708 = vrot.slane %v707, 4
        %v710 = vshll.u32 %v634, 16
        %v712 = vrot.slane %v710, 5
        %v713 = vsel %vm257, %v708, %v712
        %v715 = vshrl.u32 %v618, 16
        %v717 = vrot.slane %v715, 4
        %v718 = vshll.u32 %v618, 16
        %v720 = vrot.slane %v718, 5
        %v721 = vor.u32 %v717, %v720
        %v722 = vrot.slane %v721, 4
        %v724 = vshll.u32 %v619, 16
        %v726 = vrot.slane %v724, 5
        %v727 = vsel %vm257, %v722, %v726
        %v728 = vshrl.u32 %v619, 16
        %v730 = vrot.slane %v728, 4
        %v731 = vor.u32 %v730, %v726
        %v732 = vrot.slane %v731, 4
        %v734 = vshll.u32 %v635, 16
        %v736 = vrot.slane %v734, 5
        %v737 = vsel %vm257, %v732, %v736
        %v739 = vshrl.u32 %v620, 16
        %v741 = vrot.slane %v739, 4
        %v742 = vshll.u32 %v620, 16
        %v744 = vrot.slane %v742, 5
        %v745 = vor.u32 %v741, %v744
        %v746 = vrot.slane %v745, 4
        %v748 = vshll.u32 %v621, 16
        %v750 = vrot.slane %v748, 5
        %v751 = vsel %vm257, %v746, %v750
        %v752 = vshrl.u32 %v621, 16
        %v754 = vrot.slane %v752, 4
        %v755 = vor.u32 %v754, %v750
        %v756 = vrot.slane %v755, 4
        %v758 = vshll.u32 %v636, 16
        %v760 = vrot.slane %v758, 5
        %v761 = vsel %vm257, %v756, %v760
        %v763 = vshrl.u32 %v622, 16
        %v765 = vrot.slane %v763, 4
        %v766 = vshll.u32 %v622, 16
        %v768 = vrot.slane %v766, 5
        %v769 = vor.u32 %v765, %v768
        %v770 = vrot.slane %v769, 4
        %v772 = vshll.u32 %v623, 16
        %v774 = vrot.slane %v772, 5
        %v775 = vsel %vm257, %v770, %v774
        %v776 = vshrl.u32 %v623, 16
        %v778 = vrot.slane %v776, 4
        %v779 = vor.u32 %v778, %v774
        %v780 = vrot.slane %v779, 4
        %v782 = vshll.u32 %v637, 16
        %v784 = vrot.slane %v782, 5
        %v785 = vsel %vm257, %v780, %v784
        %v787 = vshrl.u32 %v624, 16
        %v789 = vrot.slane %v787, 4
        %v790 = vshll.u32 %v624, 16
        %v792 = vrot.slane %v790, 5
        %v793 = vor.u32 %v789, %v792
        %v794 = vrot.slane %v793, 4
        %v796 = vshll.u32 %v625, 16
        %v798 = vrot.slane %v796, 5
        %v799 = vsel %vm257, %v794, %v798
        %v800 = vshrl.u32 %v625, 16
        %v802 = vrot.slane %v800, 4
        %v803 = vor.u32 %v802, %v798
        %v804 = vrot.slane %v803, 4
        %v806 = vshll.u32 %v638, 16
        %v808 = vrot.slane %v806, 5
        %v809 = vsel %vm257, %v804, %v808
        %v811 = vshrl.u32 %v626, 16
        %v813 = vrot.slane %v811, 4
        %v814 = vshll.u32 %v626, 16
        %v816 = vrot.slane %v814, 5
        %v817 = vor.u32 %v813, %v816
        %v818 = vrot.slane %v817, 4
        %v820 = vshll.u32 %v627, 16
        %v822 = vrot.slane %v820, 5
        %v823 = vsel %vm257, %v818, %v822
        %v824 = vshrl.u32 %v627, 16
        %v826 = vrot.slane %v824, 4
        %v827 = vor.u32 %v826, %v822
        %v828 = vrot.slane %v827, 4
        %v830 = vshll.u32 %v639, 16
        %v832 = vrot.slane %v830, 5
        %v833 = vsel %vm257, %v828, %v832
        %v835 = vshrl.u32 %v628, 16
        %v837 = vrot.slane %v835, 4
        %v838 = vshll.u32 %v628, 16
        %v840 = vrot.slane %v838, 5
        %v841 = vor.u32 %v837, %v840
        %v842 = vrot.slane %v841, 4
        %v844 = vshll.u32 %v629, 16
        %v846 = vrot.slane %v844, 5
        %v847 = vsel %vm257, %v842, %v846
        %v848 = vshrl.u32 %v629, 16
        %v850 = vrot.slane %v848, 4
        %v851 = vor.u32 %v850, %v846
        %v852 = vrot.slane %v851, 4
        %v854 = vshll.u32 %v640, 16
        %v856 = vrot.slane %v854, 5
        %v857 = vsel %vm257, %v852, %v856
        %v859 = vshrl.u32 %v630, 16
        %v861 = vrot.slane %v859, 4
        %v862 = vshll.u32 %v630, 16
        %v864 = vrot.slane %v862, 5
        %v865 = vor.u32 %v861, %v864
        %v866 = vrot.slane %v865, 4
        %v868 = vshll.u32 %v631, 16
        %v870 = vrot.slane %v868, 5
        %v871 = vsel %vm257, %v866, %v870
        %v872 = vshrl.u32 %v631, 16
        %v874 = vrot.slane %v872, 4
        %v875 = vor.u32 %v874, %v870
        %v876 = vrot.slane %v875, 4
        %v878 = vshll.u32 %v641, 16
        %v880 = vrot.slane %v878, 5
        %v881 = vsel %vm257, %v876, %v880
        %v882 = vld [vmem:[%s611] sm:$0xe]
        %v883 = vld [vmem:[%s611 + $0xc] sm:$0xe]
        %v884 = vld [vmem:[%s611 + $0x18] sm:$0xe]
        %v885 = vld [vmem:[%s611 + $0x24] sm:$0xe]
        %v886 = vld [vmem:[%s611 + $0x30] sm:$0xe]
        %v887 = vld [vmem:[%s611 + $0x3c] sm:$0xe]
        %v888 = vld [vmem:[%s611 + $0x48] sm:$0xe]
        %v889 = vld [vmem:[%s611 + $0x54] sm:$0xe]
        %v890 = vld [vmem:[%s611 + $0x60] sm:$0xe]
        %v891 = vld [vmem:[%s611 + $0x6c] sm:$0xe]
        %v922 = vrot.slane %v882, 5
        %v923 = vrot.slane %v922, 4
        %v924 = vrot.slane %v613, 5
        %v925 = vsel %vm540, %v923, %v924
        %v926 = vrot.slane %v924, 4
        %v927 = vrot.slane %v632, 5
        %v928 = vsel %vm540, %v926, %v927
        %v929 = vrot.slane %v883, 5
        %v930 = vrot.slane %v929, 4
        %v931 = vrot.slane %v615, 5
        %v932 = vsel %vm540, %v930, %v931
        %v933 = vrot.slane %v931, 4
        %v934 = vrot.slane %v633, 5
        %v935 = vsel %vm540, %v933, %v934
        %v936 = vrot.slane %v884, 5
        %v937 = vrot.slane %v936, 4
        %v938 = vrot.slane %v617, 5
        %v939 = vsel %vm540, %v937, %v938
        %v940 = vrot.slane %v938, 4
        %v941 = vrot.slane %v634, 5
        %v942 = vsel %vm540, %v940, %v941
        %v943 = vrot.slane %v885, 5
        %v944 = vrot.slane %v943, 4
        %v945 = vrot.slane %v619, 5
        %v946 = vsel %vm540, %v944, %v945
        %v947 = vrot.slane %v945, 4
        %v948 = vrot.slane %v635, 5
        %v949 = vsel %vm540, %v947, %v948
        %v950 = vrot.slane %v886, 5
        %v951 = vrot.slane %v950, 4
        %v952 = vrot.slane %v621, 5
        %v953 = vsel %vm540, %v951, %v952
        %v954 = vrot.slane %v952, 4
        %v955 = vrot.slane %v636, 5
        %v956 = vsel %vm540, %v954, %v955
        %v957 = vrot.slane %v887, 5
        %v958 = vrot.slane %v957, 4
        %v959 = vrot.slane %v623, 5
        %v960 = vsel %vm540, %v958, %v959
        %v961 = vrot.slane %v959, 4
        %v962 = vrot.slane %v637, 5
        %v963 = vsel %vm540, %v961, %v962
        %v964 = vrot.slane %v888, 5
        %v965 = vrot.slane %v964, 4
        %v966 = vrot.slane %v625, 5
        %v967 = vsel %vm540, %v965, %v966
        %v968 = vrot.slane %v966, 4
        %v969 = vrot.slane %v638, 5
        %v970 = vsel %vm540, %v968, %v969
        %v971 = vrot.slane %v889, 5
        %v972 = vrot.slane %v971, 4
        %v973 = vrot.slane %v627, 5
        %v974 = vsel %vm540, %v972, %v973
        %v975 = vrot.slane %v973, 4
        %v976 = vrot.slane %v639, 5
        %v977 = vsel %vm540, %v975, %v976
        %v978 = vrot.slane %v890, 5
        %v979 = vrot.slane %v978, 4
        %v980 = vrot.slane %v629, 5
        %v981 = vsel %vm540, %v979, %v980
        %v982 = vrot.slane %v980, 4
        %v983 = vrot.slane %v640, 5
        %v984 = vsel %vm540, %v982, %v983
        %v985 = vrot.slane %v891, 5
        %v986 = vrot.slane %v985, 4
        %v987 = vrot.slane %v631, 5
        %v988 = vsel %vm540, %v986, %v987
        %v989 = vrot.slane %v987, 4
        %v990 = vrot.slane %v641, 5
        %v991 = vsel %vm540, %v989, %v990
        %s992 = scalar_lea.vmem %s210, 24
        %v993 = vld [vmem:[%s992] sm:$0xf]
        %v994 = vld [vmem:[%s992 + $0x4] sm:$0xf]
        %v995 = vld [vmem:[%s992 + $0xc] sm:$0xf]
        %v996 = vld [vmem:[%s992 + $0x10] sm:$0xf]
        %v997 = vld [vmem:[%s992 + $0x18] sm:$0xf]
        %v998 = vld [vmem:[%s992 + $0x1c] sm:$0xf]
        %v999 = vld [vmem:[%s992 + $0x24] sm:$0xf]
        %v1000 = vld [vmem:[%s992 + $0x28] sm:$0xf]
        %v1001 = vld [vmem:[%s992 + $0x30] sm:$0xf]
        %v1002 = vld [vmem:[%s992 + $0x34] sm:$0xf]
        %v1003 = vld [vmem:[%s992 + $0x3c] sm:$0xf]
        %v1004 = vld [vmem:[%s992 + $0x40] sm:$0xf]
        %v1005 = vld [vmem:[%s992 + $0x48] sm:$0xf]
        %v1006 = vld [vmem:[%s992 + $0x4c] sm:$0xf]
        %v1007 = vld [vmem:[%s992 + $0x54] sm:$0xf]
        %v1008 = vld [vmem:[%s992 + $0x58] sm:$0xf]
        %v1009 = vld [vmem:[%s992 + $0x60] sm:$0xf]
        %v1010 = vld [vmem:[%s992 + $0x64] sm:$0xf]
        %v1011 = vld [vmem:[%s992 + $0x6c] sm:$0xf]
        %v1012 = vld [vmem:[%s992 + $0x70] sm:$0xf]
        %v1013 = vld [vmem:[%s992 + $0x8] sm:$0x1]
        %v1014 = vld [vmem:[%s992 + $0x14] sm:$0x1]
        %v1015 = vld [vmem:[%s992 + $0x20] sm:$0x1]
        %v1016 = vld [vmem:[%s992 + $0x2c] sm:$0x1]
        %v1017 = vld [vmem:[%s992 + $0x38] sm:$0x1]
        %v1018 = vld [vmem:[%s992 + $0x44] sm:$0x1]
        %v1019 = vld [vmem:[%s992 + $0x50] sm:$0x1]
        %v1020 = vld [vmem:[%s992 + $0x5c] sm:$0x1]
        %v1021 = vld [vmem:[%s992 + $0x68] sm:$0x1]
        %v1022 = vld [vmem:[%s992 + $0x74] sm:$0x1]
        %v1024 = vshrl.u32 %v993, 16
        %v1026 = vrot.slane %v1024, 4
        %v1027 = vshll.u32 %v993, 16
        %v1029 = vrot.slane %v1027, 5
        %v1030 = vor.u32 %v1026, %v1029
        %v1031 = vrot.slane %v1030, 4
        %v1033 = vshll.u32 %v994, 16
        %v1035 = vrot.slane %v1033, 5
        %v1036 = vsel %vm257, %v1031, %v1035
        %v1037 = vshrl.u32 %v994, 16
        %v1039 = vrot.slane %v1037, 4
        %v1040 = vor.u32 %v1039, %v1035
        %v1041 = vrot.slane %v1040, 4
        %v1043 = vshll.u32 %v1013, 16
        %v1045 = vrot.slane %v1043, 5
        %v1046 = vsel %vm257, %v1041, %v1045
        %v1048 = vshrl.u32 %v995, 16
        %v1050 = vrot.slane %v1048, 4
        %v1051 = vshll.u32 %v995, 16
        %v1053 = vrot.slane %v1051, 5
        %v1054 = vor.u32 %v1050, %v1053
        %v1055 = vrot.slane %v1054, 4
        %v1057 = vshll.u32 %v996, 16
        %v1059 = vrot.slane %v1057, 5
        %v1060 = vsel %vm257, %v1055, %v1059
        %v1061 = vshrl.u32 %v996, 16
        %v1063 = vrot.slane %v1061, 4
        %v1064 = vor.u32 %v1063, %v1059
        %v1065 = vrot.slane %v1064, 4
        %v1067 = vshll.u32 %v1014, 16
        %v1069 = vrot.slane %v1067, 5
        %v1070 = vsel %vm257, %v1065, %v1069
        %v1072 = vshrl.u32 %v997, 16
        %v1074 = vrot.slane %v1072, 4
        %v1075 = vshll.u32 %v997, 16
        %v1077 = vrot.slane %v1075, 5
        %v1078 = vor.u32 %v1074, %v1077
        %v1079 = vrot.slane %v1078, 4
        %v1081 = vshll.u32 %v998, 16
        %v1083 = vrot.slane %v1081, 5
        %v1084 = vsel %vm257, %v1079, %v1083
        %v1085 = vshrl.u32 %v998, 16
        %v1087 = vrot.slane %v1085, 4
        %v1088 = vor.u32 %v1087, %v1083
        %v1089 = vrot.slane %v1088, 4
        %v1091 = vshll.u32 %v1015, 16
        %v1093 = vrot.slane %v1091, 5
        %v1094 = vsel %vm257, %v1089, %v1093
        %v1096 = vshrl.u32 %v999, 16
        %v1098 = vrot.slane %v1096, 4
        %v1099 = vshll.u32 %v999, 16
        %v1101 = vrot.slane %v1099, 5
        %v1102 = vor.u32 %v1098, %v1101
        %v1103 = vrot.slane %v1102, 4
        %v1105 = vshll.u32 %v1000, 16
        %v1107 = vrot.slane %v1105, 5
        %v1108 = vsel %vm257, %v1103, %v1107
        %v1109 = vshrl.u32 %v1000, 16
        %v1111 = vrot.slane %v1109, 4
        %v1112 = vor.u32 %v1111, %v1107
        %v1113 = vrot.slane %v1112, 4
        %v1115 = vshll.u32 %v1016, 16
        %v1117 = vrot.slane %v1115, 5
        %v1118 = vsel %vm257, %v1113, %v1117
        %v1120 = vshrl.u32 %v1001, 16
        %v1122 = vrot.slane %v1120, 4
        %v1123 = vshll.u32 %v1001, 16
        %v1125 = vrot.slane %v1123, 5
        %v1126 = vor.u32 %v1122, %v1125
        %v1127 = vrot.slane %v1126, 4
        %v1129 = vshll.u32 %v1002, 16
        %v1131 = vrot.slane %v1129, 5
        %v1132 = vsel %vm257, %v1127, %v1131
        %v1133 = vshrl.u32 %v1002, 16
        %v1135 = vrot.slane %v1133, 4
        %v1136 = vor.u32 %v1135, %v1131
        %v1137 = vrot.slane %v1136, 4
        %v1139 = vshll.u32 %v1017, 16
        %v1141 = vrot.slane %v1139, 5
        %v1142 = vsel %vm257, %v1137, %v1141
        %v1144 = vshrl.u32 %v1003, 16
        %v1146 = vrot.slane %v1144, 4
        %v1147 = vshll.u32 %v1003, 16
        %v1149 = vrot.slane %v1147, 5
        %v1150 = vor.u32 %v1146, %v1149
        %v1151 = vrot.slane %v1150, 4
        %v1153 = vshll.u32 %v1004, 16
        %v1155 = vrot.slane %v1153, 5
        %v1156 = vsel %vm257, %v1151, %v1155
        %v1157 = vshrl.u32 %v1004, 16
        %v1159 = vrot.slane %v1157, 4
        %v1160 = vor.u32 %v1159, %v1155
        %v1161 = vrot.slane %v1160, 4
        %v1163 = vshll.u32 %v1018, 16
        %v1165 = vrot.slane %v1163, 5
        %v1166 = vsel %vm257, %v1161, %v1165
        %v1168 = vshrl.u32 %v1005, 16
        %v1170 = vrot.slane %v1168, 4
        %v1171 = vshll.u32 %v1005, 16
        %v1173 = vrot.slane %v1171, 5
        %v1174 = vor.u32 %v1170, %v1173
        %v1175 = vrot.slane %v1174, 4
        %v1177 = vshll.u32 %v1006, 16
        %v1179 = vrot.slane %v1177, 5
        %v1180 = vsel %vm257, %v1175, %v1179
        %v1181 = vshrl.u32 %v1006, 16
        %v1183 = vrot.slane %v1181, 4
        %v1184 = vor.u32 %v1183, %v1179
        %v1185 = vrot.slane %v1184, 4
        %v1187 = vshll.u32 %v1019, 16
        %v1189 = vrot.slane %v1187, 5
        %v1190 = vsel %vm257, %v1185, %v1189
        %v1192 = vshrl.u32 %v1007, 16
        %v1194 = vrot.slane %v1192, 4
        %v1195 = vshll.u32 %v1007, 16
        %v1197 = vrot.slane %v1195, 5
        %v1198 = vor.u32 %v1194, %v1197
        %v1199 = vrot.slane %v1198, 4
        %v1201 = vshll.u32 %v1008, 16
        %v1203 = vrot.slane %v1201, 5
        %v1204 = vsel %vm257, %v1199, %v1203
        %v1205 = vshrl.u32 %v1008, 16
        %v1207 = vrot.slane %v1205, 4
        %v1208 = vor.u32 %v1207, %v1203
        %v1209 = vrot.slane %v1208, 4
        %v1211 = vshll.u32 %v1020, 16
        %v1213 = vrot.slane %v1211, 5
        %v1214 = vsel %vm257, %v1209, %v1213
        %v1216 = vshrl.u32 %v1009, 16
        %v1218 = vrot.slane %v1216, 4
        %v1219 = vshll.u32 %v1009, 16
        %v1221 = vrot.slane %v1219, 5
        %v1222 = vor.u32 %v1218, %v1221
        %v1223 = vrot.slane %v1222, 4
        %v1225 = vshll.u32 %v1010, 16
        %v1227 = vrot.slane %v1225, 5
        %v1228 = vsel %vm257, %v1223, %v1227
        %v1229 = vshrl.u32 %v1010, 16
        %v1231 = vrot.slane %v1229, 4
        %v1232 = vor.u32 %v1231, %v1227
        %v1233 = vrot.slane %v1232, 4
        %v1235 = vshll.u32 %v1021, 16
        %v1237 = vrot.slane %v1235, 5
        %v1238 = vsel %vm257, %v1233, %v1237
        %v1240 = vshrl.u32 %v1011, 16
        %v1242 = vrot.slane %v1240, 4
        %v1243 = vshll.u32 %v1011, 16
        %v1245 = vrot.slane %v1243, 5
        %v1246 = vor.u32 %v1242, %v1245
        %v1247 = vrot.slane %v1246, 4
        %v1249 = vshll.u32 %v1012, 16
        %v1251 = vrot.slane %v1249, 5
        %v1252 = vsel %vm257, %v1247, %v1251
        %v1253 = vshrl.u32 %v1012, 16
        %v1255 = vrot.slane %v1253, 4
        %v1256 = vor.u32 %v1255, %v1251
        %v1257 = vrot.slane %v1256, 4
        %v1259 = vshll.u32 %v1022, 16
        %v1261 = vrot.slane %v1259, 5
        %v1262 = vsel %vm257, %v1257, %v1261
        %v1263 = vld [vmem:[%s992] sm:$0xe]
        %v1264 = vld [vmem:[%s992 + $0xc] sm:$0xe]
        %v1265 = vld [vmem:[%s992 + $0x18] sm:$0xe]
        %v1266 = vld [vmem:[%s992 + $0x24] sm:$0xe]
        %v1267 = vld [vmem:[%s992 + $0x30] sm:$0xe]
        %v1268 = vld [vmem:[%s992 + $0x3c] sm:$0xe]
        %v1269 = vld [vmem:[%s992 + $0x48] sm:$0xe]
        %v1270 = vld [vmem:[%s992 + $0x54] sm:$0xe]
        %v1271 = vld [vmem:[%s992 + $0x60] sm:$0xe]
        %v1272 = vld [vmem:[%s992 + $0x6c] sm:$0xe]
        %v1303 = vrot.slane %v1263, 5
        %v1304 = vrot.slane %v1303, 4
        %v1305 = vrot.slane %v994, 5
        %v1306 = vsel %vm540, %v1304, %v1305
        %v1307 = vrot.slane %v1305, 4
        %v1308 = vrot.slane %v1013, 5
        %v1309 = vsel %vm540, %v1307, %v1308
        %v1310 = vrot.slane %v1264, 5
        %v1311 = vrot.slane %v1310, 4
        %v1312 = vrot.slane %v996, 5
        %v1313 = vsel %vm540, %v1311, %v1312
        %v1314 = vrot.slane %v1312, 4
        %v1315 = vrot.slane %v1014, 5
        %v1316 = vsel %vm540, %v1314, %v1315
        %v1317 = vrot.slane %v1265, 5
        %v1318 = vrot.slane %v1317, 4
        %v1319 = vrot.slane %v998, 5
        %v1320 = vsel %vm540, %v1318, %v1319
        %v1321 = vrot.slane %v1319, 4
        %v1322 = vrot.slane %v1015, 5
        %v1323 = vsel %vm540, %v1321, %v1322
        %v1324 = vrot.slane %v1266, 5
        %v1325 = vrot.slane %v1324, 4
        %v1326 = vrot.slane %v1000, 5
        %v1327 = vsel %vm540, %v1325, %v1326
        %v1328 = vrot.slane %v1326, 4
        %v1329 = vrot.slane %v1016, 5
        %v1330 = vsel %vm540, %v1328, %v1329
        %v1331 = vrot.slane %v1267, 5
        %v1332 = vrot.slane %v1331, 4
        %v1333 = vrot.slane %v1002, 5
        %v1334 = vsel %vm540, %v1332, %v1333
        %v1335 = vrot.slane %v1333, 4
        %v1336 = vrot.slane %v1017, 5
        %v1337 = vsel %vm540, %v1335, %v1336
        %v1338 = vrot.slane %v1268, 5
        %v1339 = vrot.slane %v1338, 4
        %v1340 = vrot.slane %v1004, 5
        %v1341 = vsel %vm540, %v1339, %v1340
        %v1342 = vrot.slane %v1340, 4
        %v1343 = vrot.slane %v1018, 5
        %v1344 = vsel %vm540, %v1342, %v1343
        %v1345 = vrot.slane %v1269, 5
        %v1346 = vrot.slane %v1345, 4
        %v1347 = vrot.slane %v1006, 5
        %v1348 = vsel %vm540, %v1346, %v1347
        %v1349 = vrot.slane %v1347, 4
        %v1350 = vrot.slane %v1019, 5
        %v1351 = vsel %vm540, %v1349, %v1350
        %v1352 = vrot.slane %v1270, 5
        %v1353 = vrot.slane %v1352, 4
        %v1354 = vrot.slane %v1008, 5
        %v1355 = vsel %vm540, %v1353, %v1354
        %v1356 = vrot.slane %v1354, 4
        %v1357 = vrot.slane %v1020, 5
        %v1358 = vsel %vm540, %v1356, %v1357
        %v1359 = vrot.slane %v1271, 5
        %v1360 = vrot.slane %v1359, 4
        %v1361 = vrot.slane %v1010, 5
        %v1362 = vsel %vm540, %v1360, %v1361
        %v1363 = vrot.slane %v1361, 4
        %v1364 = vrot.slane %v1021, 5
        %v1365 = vsel %vm540, %v1363, %v1364
        %v1366 = vrot.slane %v1272, 5
        %v1367 = vrot.slane %v1366, 4
        %v1368 = vrot.slane %v1012, 5
        %v1369 = vsel %vm540, %v1367, %v1368
        %v1370 = vrot.slane %v1368, 4
        %v1371 = vrot.slane %v1022, 5
        %v1372 = vsel %vm540, %v1370, %v1371
        %v1383 = vunpack.c.l.b16 %v225
        %v1384 = vunpack.c.l.b16 %v226
        %v1385 = vunpack.c.l.b16 %v227
        %v1386 = vunpack.c.l.b16 %v228
        %v1387 = vunpack.c.l.b16 %v229
        %v1388 = vunpack.c.l.b16 %v230
        %v1389 = vunpack.c.l.b16 %v231
        %v1390 = vunpack.c.l.b16 %v232
        %v1391 = vunpack.c.l.b16 %v233
        %v1392 = vunpack.c.l.b16 %v234
        %v1393 = vunpack.c.l.b16 %v235
        %v1394 = vunpack.c.l.b16 %v236
        %v1395 = vunpack.c.l.b16 %v237
        %v1396 = vunpack.c.l.b16 %v238
        %v1397 = vunpack.c.l.b16 %v239
        %v1398 = vunpack.c.l.b16 %v240
        %v1399 = vunpack.c.l.b16 %v241
        %v1400 = vunpack.c.l.b16 %v242
        %v1401 = vunpack.c.l.b16 %v243
        %v1402 = vunpack.c.l.b16 %v244
        %v1403 = vpack.c.b16 %v1384, %v1383
        %v1404 = vpack.c.b16 %v1386, %v1385
        %v1405 = vpack.c.b16 %v1388, %v1387
        %v1406 = vpack.c.b16 %v1390, %v1389
        %v1407 = vpack.c.b16 %v1392, %v1391
        %v1408 = vpack.c.b16 %v1394, %v1393
        %v1409 = vpack.c.b16 %v1396, %v1395
        %v1410 = vpack.c.b16 %v1398, %v1397
        %v1411 = vpack.c.b16 %v1400, %v1399
        %v1412 = vpack.c.b16 %v1402, %v1401
        %v1423 = vunpack.c.l.b16 %v271
        %v1424 = vunpack.c.l.b16 %v281
        %v1425 = vunpack.c.l.b16 %v295
        %v1426 = vunpack.c.l.b16 %v305
        %v1427 = vunpack.c.l.b16 %v319
        %v1428 = vunpack.c.l.b16 %v329
        %v1429 = vunpack.c.l.b16 %v343
        %v1430 = vunpack.c.l.b16 %v353
        %v1431 = vunpack.c.l.b16 %v367
        %v1432 = vunpack.c.l.b16 %v377
        %v1433 = vunpack.c.l.b16 %v391
        %v1434 = vunpack.c.l.b16 %v401
        %v1435 = vunpack.c.l.b16 %v415
        %v1436 = vunpack.c.l.b16 %v425
        %v1437 = vunpack.c.l.b16 %v439
        %v1438 = vunpack.c.l.b16 %v449
        %v1439 = vunpack.c.l.b16 %v463
        %v1440 = vunpack.c.l.b16 %v473
        %v1441 = vunpack.c.l.b16 %v487
        %v1442 = vunpack.c.l.b16 %v497
        %v1443 = vpack.c.b16 %v1424, %v1423
        %v1444 = vpack.c.b16 %v1426, %v1425
        %v1445 = vpack.c.b16 %v1428, %v1427
        %v1446 = vpack.c.b16 %v1430, %v1429
        %v1447 = vpack.c.b16 %v1432, %v1431
        %v1448 = vpack.c.b16 %v1434, %v1433
        %v1449 = vpack.c.b16 %v1436, %v1435
        %v1450 = vpack.c.b16 %v1438, %v1437
        %v1451 = vpack.c.b16 %v1440, %v1439
        %v1452 = vpack.c.b16 %v1442, %v1441
        %v1463 = vunpack.c.l.b16 %v544
        %v1464 = vunpack.c.l.b16 %v547
        %v1465 = vunpack.c.l.b16 %v551
        %v1466 = vunpack.c.l.b16 %v554
        %v1467 = vunpack.c.l.b16 %v558
        %v1468 = vunpack.c.l.b16 %v561
        %v1469 = vunpack.c.l.b16 %v565
        %v1470 = vunpack.c.l.b16 %v568
        %v1471 = vunpack.c.l.b16 %v572
        %v1472 = vunpack.c.l.b16 %v575
        %v1473 = vunpack.c.l.b16 %v579
        %v1474 = vunpack.c.l.b16 %v582
        %v1475 = vunpack.c.l.b16 %v586
        %v1476 = vunpack.c.l.b16 %v589
        %v1477 = vunpack.c.l.b16 %v593
        %v1478 = vunpack.c.l.b16 %v596
        %v1479 = vunpack.c.l.b16 %v600
        %v1480 = vunpack.c.l.b16 %v603
        %v1481 = vunpack.c.l.b16 %v607
        %v1482 = vunpack.c.l.b16 %v610
        %v1483 = vpack.c.b16 %v1464, %v1463
        %v1484 = vpack.c.b16 %v1466, %v1465
        %v1485 = vpack.c.b16 %v1468, %v1467
        %v1486 = vpack.c.b16 %v1470, %v1469
        %v1487 = vpack.c.b16 %v1472, %v1471
        %v1488 = vpack.c.b16 %v1474, %v1473
        %v1489 = vpack.c.b16 %v1476, %v1475
        %v1490 = vpack.c.b16 %v1478, %v1477
        %v1491 = vpack.c.b16 %v1480, %v1479
        %v1492 = vpack.c.b16 %v1482, %v1481
        %v1513 = vunpack.c.l.b16 %v612
        %v1514 = vunpack.c.l.b16 %v613
        %v1515 = vunpack.c.l.b16 %v614
        %v1516 = vunpack.c.l.b16 %v615
        %v1517 = vunpack.c.l.b16 %v616
        %v1518 = vunpack.c.l.b16 %v617
        %v1519 = vunpack.c.l.b16 %v618
        %v1520 = vunpack.c.l.b16 %v619
        %v1521 = vunpack.c.l.b16 %v620
        %v1522 = vunpack.c.l.b16 %v621
        %v1523 = vunpack.c.l.b16 %v622
        %v1524 = vunpack.c.l.b16 %v623
        %v1525 = vunpack.c.l.b16 %v624
        %v1526 = vunpack.c.l.b16 %v625
        %v1527 = vunpack.c.l.b16 %v626
        %v1528 = vunpack.c.l.b16 %v627
        %v1529 = vunpack.c.l.b16 %v628
        %v1530 = vunpack.c.l.b16 %v629
        %v1531 = vunpack.c.l.b16 %v630
        %v1532 = vunpack.c.l.b16 %v631
        %v1533 = vpack.c.b16 %v1514, %v1513
        %v1534 = vpack.c.b16 %v1516, %v1515
        %v1535 = vpack.c.b16 %v1518, %v1517
        %v1536 = vpack.c.b16 %v1520, %v1519
        %v1537 = vpack.c.b16 %v1522, %v1521
        %v1538 = vpack.c.b16 %v1524, %v1523
        %v1539 = vpack.c.b16 %v1526, %v1525
        %v1540 = vpack.c.b16 %v1528, %v1527
        %v1541 = vpack.c.b16 %v1530, %v1529
        %v1542 = vpack.c.b16 %v1532, %v1531
        %v1553 = vunpack.c.l.b16 %v655
        %v1554 = vunpack.c.l.b16 %v665
        %v1555 = vunpack.c.l.b16 %v679
        %v1556 = vunpack.c.l.b16 %v689
        %v1557 = vunpack.c.l.b16 %v703
        %v1558 = vunpack.c.l.b16 %v713
        %v1559 = vunpack.c.l.b16 %v727
        %v1560 = vunpack.c.l.b16 %v737
        %v1561 = vunpack.c.l.b16 %v751
        %v1562 = vunpack.c.l.b16 %v761
        %v1563 = vunpack.c.l.b16 %v775
        %v1564 = vunpack.c.l.b16 %v785
        %v1565 = vunpack.c.l.b16 %v799
        %v1566 = vunpack.c.l.b16 %v809
        %v1567 = vunpack.c.l.b16 %v823
        %v1568 = vunpack.c.l.b16 %v833
        %v1569 = vunpack.c.l.b16 %v847
        %v1570 = vunpack.c.l.b16 %v857
        %v1571 = vunpack.c.l.b16 %v871
        %v1572 = vunpack.c.l.b16 %v881
        %v1573 = vpack.c.b16 %v1554, %v1553
        %v1574 = vpack.c.b16 %v1556, %v1555
        %v1575 = vpack.c.b16 %v1558, %v1557
        %v1576 = vpack.c.b16 %v1560, %v1559
        %v1577 = vpack.c.b16 %v1562, %v1561
        %v1578 = vpack.c.b16 %v1564, %v1563
        %v1579 = vpack.c.b16 %v1566, %v1565
        %v1580 = vpack.c.b16 %v1568, %v1567
        %v1581 = vpack.c.b16 %v1570, %v1569
        %v1582 = vpack.c.b16 %v1572, %v1571
        %v1593 = vunpack.c.l.b16 %v925
        %v1594 = vunpack.c.l.b16 %v928
        %v1595 = vunpack.c.l.b16 %v932
        %v1596 = vunpack.c.l.b16 %v935
        %v1597 = vunpack.c.l.b16 %v939
        %v1598 = vunpack.c.l.b16 %v942
        %v1599 = vunpack.c.l.b16 %v946
        %v1600 = vunpack.c.l.b16 %v949
        %v1601 = vunpack.c.l.b16 %v953
        %v1602 = vunpack.c.l.b16 %v956
        %v1603 = vunpack.c.l.b16 %v960
        %v1604 = vunpack.c.l.b16 %v963
        %v1605 = vunpack.c.l.b16 %v967
        %v1606 = vunpack.c.l.b16 %v970
        %v1607 = vunpack.c.l.b16 %v974
        %v1608 = vunpack.c.l.b16 %v977
        %v1609 = vunpack.c.l.b16 %v981
        %v1610 = vunpack.c.l.b16 %v984
        %v1611 = vunpack.c.l.b16 %v988
        %v1612 = vunpack.c.l.b16 %v991
        %v1613 = vpack.c.b16 %v1594, %v1593
        %v1614 = vpack.c.b16 %v1596, %v1595
        %v1615 = vpack.c.b16 %v1598, %v1597
        %v1616 = vpack.c.b16 %v1600, %v1599
        %v1617 = vpack.c.b16 %v1602, %v1601
        %v1618 = vpack.c.b16 %v1604, %v1603
        %v1619 = vpack.c.b16 %v1606, %v1605
        %v1620 = vpack.c.b16 %v1608, %v1607
        %v1621 = vpack.c.b16 %v1610, %v1609
        %v1622 = vpack.c.b16 %v1612, %v1611
        %v1643 = vunpack.c.l.b16 %v993
        %v1644 = vunpack.c.l.b16 %v994
        %v1645 = vunpack.c.l.b16 %v995
        %v1646 = vunpack.c.l.b16 %v996
        %v1647 = vunpack.c.l.b16 %v997
        %v1648 = vunpack.c.l.b16 %v998
        %v1649 = vunpack.c.l.b16 %v999
        %v1650 = vunpack.c.l.b16 %v1000
        %v1651 = vunpack.c.l.b16 %v1001
        %v1652 = vunpack.c.l.b16 %v1002
        %v1653 = vunpack.c.l.b16 %v1003
        %v1654 = vunpack.c.l.b16 %v1004
        %v1655 = vunpack.c.l.b16 %v1005
        %v1656 = vunpack.c.l.b16 %v1006
        %v1657 = vunpack.c.l.b16 %v1007
        %v1658 = vunpack.c.l.b16 %v1008
        %v1659 = vunpack.c.l.b16 %v1009
        %v1660 = vunpack.c.l.b16 %v1010
        %v1661 = vunpack.c.l.b16 %v1011
        %v1662 = vunpack.c.l.b16 %v1012
        %v1663 = vpack.c.b16 %v1644, %v1643
        %v1664 = vpack.c.b16 %v1646, %v1645
        %v1665 = vpack.c.b16 %v1648, %v1647
        %v1666 = vpack.c.b16 %v1650, %v1649
        %v1667 = vpack.c.b16 %v1652, %v1651
        %v1668 = vpack.c.b16 %v1654, %v1653
        %v1669 = vpack.c.b16 %v1656, %v1655
        %v1670 = vpack.c.b16 %v1658, %v1657
        %v1671 = vpack.c.b16 %v1660, %v1659
        %v1672 = vpack.c.b16 %v1662, %v1661
        %v1683 = vunpack.c.l.b16 %v1036
        %v1684 = vunpack.c.l.b16 %v1046
        %v1685 = vunpack.c.l.b16 %v1060
        %v1686 = vunpack.c.l.b16 %v1070
        %v1687 = vunpack.c.l.b16 %v1084
        %v1688 = vunpack.c.l.b16 %v1094
        %v1689 = vunpack.c.l.b16 %v1108
        %v1690 = vunpack.c.l.b16 %v1118
        %v1691 = vunpack.c.l.b16 %v1132
        %v1692 = vunpack.c.l.b16 %v1142
        %v1693 = vunpack.c.l.b16 %v1156
        %v1694 = vunpack.c.l.b16 %v1166
        %v1695 = vunpack.c.l.b16 %v1180
        %v1696 = vunpack.c.l.b16 %v1190
        %v1697 = vunpack.c.l.b16 %v1204
        %v1698 = vunpack.c.l.b16 %v1214
        %v1699 = vunpack.c.l.b16 %v1228
        %v1700 = vunpack.c.l.b16 %v1238
        %v1701 = vunpack.c.l.b16 %v1252
        %v1702 = vunpack.c.l.b16 %v1262
        %v1703 = vpack.c.b16 %v1684, %v1683
        %v1704 = vpack.c.b16 %v1686, %v1685
        %v1705 = vpack.c.b16 %v1688, %v1687
        %v1706 = vpack.c.b16 %v1690, %v1689
        %v1707 = vpack.c.b16 %v1692, %v1691
        %v1708 = vpack.c.b16 %v1694, %v1693
        %v1709 = vpack.c.b16 %v1696, %v1695
        %v1710 = vpack.c.b16 %v1698, %v1697
        %v1711 = vpack.c.b16 %v1700, %v1699
        %v1712 = vpack.c.b16 %v1702, %v1701
        %v1723 = vunpack.c.l.b16 %v1306
        %v1724 = vunpack.c.l.b16 %v1309
        %v1725 = vunpack.c.l.b16 %v1313
        %v1726 = vunpack.c.l.b16 %v1316
        %v1727 = vunpack.c.l.b16 %v1320
        %v1728 = vunpack.c.l.b16 %v1323
        %v1729 = vunpack.c.l.b16 %v1327
        %v1730 = vunpack.c.l.b16 %v1330
        %v1731 = vunpack.c.l.b16 %v1334
        %v1732 = vunpack.c.l.b16 %v1337
        %v1733 = vunpack.c.l.b16 %v1341
        %v1734 = vunpack.c.l.b16 %v1344
        %v1735 = vunpack.c.l.b16 %v1348
        %v1736 = vunpack.c.l.b16 %v1351
        %v1737 = vunpack.c.l.b16 %v1355
        %v1738 = vunpack.c.l.b16 %v1358
        %v1739 = vunpack.c.l.b16 %v1362
        %v1740 = vunpack.c.l.b16 %v1365
        %v1741 = vunpack.c.l.b16 %v1369
        %v1742 = vunpack.c.l.b16 %v1372
        %v1743 = vpack.c.b16 %v1724, %v1723
        %v1744 = vpack.c.b16 %v1726, %v1725
        %v1745 = vpack.c.b16 %v1728, %v1727
        %v1746 = vpack.c.b16 %v1730, %v1729
        %v1747 = vpack.c.b16 %v1732, %v1731
        %v1748 = vpack.c.b16 %v1734, %v1733
        %v1749 = vpack.c.b16 %v1736, %v1735
        %v1750 = vpack.c.b16 %v1738, %v1737
        %v1751 = vpack.c.b16 %v1740, %v1739
        %v1752 = vpack.c.b16 %v1742, %v1741
        %v1763 = vld [vmem:[%s1] sm:$0xf]
        %v1764 = vld [vmem:[%s1 + $0x4] sm:$0xf]
        %v1765 = vld [vmem:[%s1 + $0x8] sm:$0xf]
        %v1766 = vld [vmem:[%s1 + $0xc] sm:$0xf]
        %v1767 = vld [vmem:[%s1 + $0x10] sm:$0xf]
        %v1768 = vld [vmem:[%s1 + $0x14] sm:$0xf]
        %v1769 = vld [vmem:[%s1 + $0x18] sm:$0xf]
        %v1770 = vld [vmem:[%s1 + $0x1c] sm:$0xf]
        %v1771 = vld [vmem:[%s1 + $0x20] sm:$0xf]
        %v1772 = vld [vmem:[%s1 + $0x24] sm:$0xf]
        %v1773 = vld [vmem:[%s1 + $0x28] sm:$0xf]
        %v1774 = vld [vmem:[%s1 + $0x2c] sm:$0xf]
        %v1775 = vld [vmem:[%s1 + $0x30] sm:$0xf]
        %v1776 = vld [vmem:[%s1 + $0x34] sm:$0xf]
        %v1777 = vld [vmem:[%s1 + $0x38] sm:$0xf]
        %v1778 = vld [vmem:[%s1 + $0x3c] sm:$0xf]
        %v1779 = vld [vmem:[%s1 + $0x40] sm:$0xf]
        %v1780 = vld [vmem:[%s1 + $0x44] sm:$0xf]
        %v1781 = vld [vmem:[%s1 + $0x48] sm:$0xf]
        %v1782 = vld [vmem:[%s1 + $0x4c] sm:$0xf]
        %v1783 = vld [vmem:[%s1 + $0x50] sm:$0xf]
        %v1784 = vld [vmem:[%s1 + $0x54] sm:$0xf]
        %v1785 = vld [vmem:[%s1 + $0x58] sm:$0xf]
        %v1786 = vld [vmem:[%s1 + $0x5c] sm:$0xf]
        %v1787 = vld [vmem:[%s1 + $0x60] sm:$0xf]
        %v1788 = vld [vmem:[%s1 + $0x64] sm:$0xf]
        %v1789 = vld [vmem:[%s1 + $0x68] sm:$0xf]
        %v1790 = vld [vmem:[%s1 + $0x6c] sm:$0xf]
        %v1791 = vld [vmem:[%s1 + $0x70] sm:$0xf]
        %v1792 = vld [vmem:[%s1 + $0x74] sm:$0xf]
        %v1793 = vld [vmem:[%s1 + $0x78] sm:$0xf]
        %v1794 = vld [vmem:[%s1 + $0x7c] sm:$0xf]
        %v1795 = vld [vmem:[%s1 + $0x80] sm:$0xf]
        %v1796 = vld [vmem:[%s1 + $0x84] sm:$0xf]
        %v1797 = vld [vmem:[%s1 + $0x88] sm:$0xf]
        %v1798 = vld [vmem:[%s1 + $0x8c] sm:$0xf]
        %v1799 = vld [vmem:[%s1 + $0x90] sm:$0xf]
        %v1800 = vld [vmem:[%s1 + $0x94] sm:$0xf]
        %v1801 = vld [vmem:[%s1 + $0x98] sm:$0xf]
        %v1802 = vld [vmem:[%s1 + $0x9c] sm:$0xf]
        %v1803 = vld [vmem:[%s1 + $0xa0] sm:$0xf]
        %v1804 = vld [vmem:[%s1 + $0xa4] sm:$0xf]
        %v1805 = vld [vmem:[%s1 + $0xa8] sm:$0xf]
        %v1806 = vld [vmem:[%s1 + $0xac] sm:$0xf]
        %v1807 = vld [vmem:[%s1 + $0xb0] sm:$0xf]
        %v1808 = vld [vmem:[%s1 + $0xb4] sm:$0xf]
        %v1809 = vld [vmem:[%s1 + $0xb8] sm:$0xf]
        %v1810 = vld [vmem:[%s1 + $0xbc] sm:$0xf]
        %v1811 = vld [vmem:[%s1 + $0xc0] sm:$0xf]
        %v1812 = vld [vmem:[%s1 + $0xc4] sm:$0xf]
        %v1813 = vld [vmem:[%s1 + $0xc8] sm:$0xf]
        %v1814 = vld [vmem:[%s1 + $0xcc] sm:$0xf]
        %v1815 = vld [vmem:[%s1 + $0xd0] sm:$0xf]
        %v1816 = vld [vmem:[%s1 + $0xd4] sm:$0xf]
        %v1817 = vld [vmem:[%s1 + $0xd8] sm:$0xf]
        %v1818 = vld [vmem:[%s1 + $0xdc] sm:$0xf]
        %v1819 = vld [vmem:[%s1 + $0xe0] sm:$0xf]
        %v1820 = vld [vmem:[%s1 + $0xe4] sm:$0xf]
        %v1821 = vld [vmem:[%s1 + $0xe8] sm:$0xf]
        %v1822 = vld [vmem:[%s1 + $0xec] sm:$0xf]
        %v1823 = vld [vmem:[%s1 + $0xf0] sm:$0xf]
        %v1824 = vld [vmem:[%s1 + $0xf4] sm:$0xf]
        %v1825 = vld [vmem:[%s1 + $0xf8] sm:$0xf]
        %v1826 = vld [vmem:[%s1 + $0xfc] sm:$0xf]
        %v1827 = vld [vmem:[%s1 + $0x100] sm:$0xf]
        %v1828 = vld [vmem:[%s1 + $0x104] sm:$0xf]
        %v1829 = vld [vmem:[%s1 + $0x108] sm:$0xf]
        %v1830 = vld [vmem:[%s1 + $0x10c] sm:$0xf]
        %v1831 = vld [vmem:[%s1 + $0x110] sm:$0xf]
        %v1832 = vld [vmem:[%s1 + $0x114] sm:$0xf]
        %v1833 = vld [vmem:[%s1 + $0x118] sm:$0xf]
        %v1834 = vld [vmem:[%s1 + $0x11c] sm:$0xf]
        %v1835 = vld [vmem:[%s1 + $0x120] sm:$0xf]
        %v1836 = vld [vmem:[%s1 + $0x124] sm:$0xf]
        %v1837 = vld [vmem:[%s1 + $0x128] sm:$0xf]
        %v1838 = vld [vmem:[%s1 + $0x12c] sm:$0xf]
        %v1839 = vld [vmem:[%s1 + $0x130] sm:$0xf]
        %v1840 = vld [vmem:[%s1 + $0x134] sm:$0xf]
        %v1841 = vld [vmem:[%s1 + $0x138] sm:$0xf]
        %v1842 = vld [vmem:[%s1 + $0x13c] sm:$0xf]
        %v1843 = vld [vmem:[%s1 + $0x140] sm:$0xf]
        %v1844 = vld [vmem:[%s1 + $0x144] sm:$0xf]
        %v1845 = vld [vmem:[%s1 + $0x148] sm:$0xf]
        %v1846 = vld [vmem:[%s1 + $0x14c] sm:$0xf]
        %v1847 = vld [vmem:[%s1 + $0x150] sm:$0xf]
        %v1848 = vld [vmem:[%s1 + $0x154] sm:$0xf]
        %v1849 = vld [vmem:[%s1 + $0x158] sm:$0xf]
        %v1850 = vld [vmem:[%s1 + $0x15c] sm:$0xf]
        %v1851 = vld [vmem:[%s1 + $0x160] sm:$0xf]
        %v1852 = vld [vmem:[%s1 + $0x164] sm:$0xf]
        %v1853 = vld [vmem:[%s1 + $0x168] sm:$0xf]
        %v1854 = vld [vmem:[%s1 + $0x16c] sm:$0xf]
        %v1855 = vld [vmem:[%s1 + $0x170] sm:$0xf]
        %v1856 = vld [vmem:[%s1 + $0x174] sm:$0xf]
        %v1857 = vld [vmem:[%s1 + $0x178] sm:$0xf]
        %v1858 = vld [vmem:[%s1 + $0x17c] sm:$0xf]
        %v1859 = vld [vmem:[%s1 + $0x180] sm:$0xf]
        %v1860 = vld [vmem:[%s1 + $0x184] sm:$0xf]
        %v1861 = vld [vmem:[%s1 + $0x188] sm:$0xf]
        %v1862 = vld [vmem:[%s1 + $0x18c] sm:$0xf]
        %v1863 = vld [vmem:[%s1 + $0x190] sm:$0xf]
        %v1864 = vld [vmem:[%s1 + $0x194] sm:$0xf]
        %v1865 = vld [vmem:[%s1 + $0x198] sm:$0xf]
        %v1866 = vld [vmem:[%s1 + $0x19c] sm:$0xf]
        %v1867 = vld [vmem:[%s1 + $0x1a0] sm:$0xf]
        %v1868 = vld [vmem:[%s1 + $0x1a4] sm:$0xf]
        %v1869 = vld [vmem:[%s1 + $0x1a8] sm:$0xf]
        %v1870 = vld [vmem:[%s1 + $0x1ac] sm:$0xf]
        %v1871 = vld [vmem:[%s1 + $0x1b0] sm:$0xf]
        %v1872 = vld [vmem:[%s1 + $0x1b4] sm:$0xf]
        %v1873 = vld [vmem:[%s1 + $0x1b8] sm:$0xf]
        %v1874 = vld [vmem:[%s1 + $0x1bc] sm:$0xf]
        %v1875 = vld [vmem:[%s1 + $0x1c0] sm:$0xf]
        %v1876 = vld [vmem:[%s1 + $0x1c4] sm:$0xf]
        %v1877 = vld [vmem:[%s1 + $0x1c8] sm:$0xf]
        %v1878 = vld [vmem:[%s1 + $0x1cc] sm:$0xf]
        %v1879 = vld [vmem:[%s1 + $0x1d0] sm:$0xf]
        %v1880 = vld [vmem:[%s1 + $0x1d4] sm:$0xf]
        %v1881 = vld [vmem:[%s1 + $0x1d8] sm:$0xf]
        %v1882 = vld [vmem:[%s1 + $0x1dc] sm:$0xf]
        %v1883 = vld [vmem:[%s1 + $0x1e0] sm:$0xf]
        %v1884 = vld [vmem:[%s1 + $0x1e4] sm:$0xf]
        %v1885 = vld [vmem:[%s1 + $0x1e8] sm:$0xf]
        %v1886 = vld [vmem:[%s1 + $0x1ec] sm:$0xf]
        %v1887 = vld [vmem:[%s1 + $0x1f0] sm:$0xf]
        %v1888 = vld [vmem:[%s1 + $0x1f4] sm:$0xf]
        %v1889 = vld [vmem:[%s1 + $0x1f8] sm:$0xf]
        %v1890 = vld [vmem:[%s1 + $0x1fc] sm:$0xf]
        %v1891 = vld [vmem:[%s1 + $0x200] sm:$0xf]
        %v1892 = vld [vmem:[%s1 + $0x204] sm:$0xf]
        %v1893 = vld [vmem:[%s1 + $0x208] sm:$0xf]
        %v1894 = vld [vmem:[%s1 + $0x20c] sm:$0xf]
        %v1895 = vld [vmem:[%s1 + $0x210] sm:$0xf]
        %v1896 = vld [vmem:[%s1 + $0x214] sm:$0xf]
        %v1897 = vld [vmem:[%s1 + $0x218] sm:$0xf]
        %v1898 = vld [vmem:[%s1 + $0x21c] sm:$0xf]
        %v1899 = vld [vmem:[%s1 + $0x220] sm:$0xf]
        %v1900 = vld [vmem:[%s1 + $0x224] sm:$0xf]
        %v1901 = vld [vmem:[%s1 + $0x228] sm:$0xf]
        %v1902 = vld [vmem:[%s1 + $0x22c] sm:$0xf]
        %v1903 = vld [vmem:[%s1 + $0x230] sm:$0xf]
        %v1904 = vld [vmem:[%s1 + $0x234] sm:$0xf]
        %v1905 = vld [vmem:[%s1 + $0x238] sm:$0xf]
        %v1906 = vld [vmem:[%s1 + $0x23c] sm:$0xf]
        %v2051 = vunpack.c.l.b16 %v1763
        %v2052 = vunpack.c.l.b16 %v1764
        %v2053 = vunpack.c.l.b16 %v1765
        %v2054 = vunpack.c.l.b16 %v1766
        %v2055 = vunpack.c.l.b16 %v1767
        %v2056 = vunpack.c.l.b16 %v1768
        %v2057 = vunpack.c.l.b16 %v1769
        %v2058 = vunpack.c.l.b16 %v1770
        %v2059 = vunpack.c.l.b16 %v1771
        %v2060 = vunpack.c.l.b16 %v1772
        %v2061 = vunpack.c.l.b16 %v1773
        %v2062 = vunpack.c.l.b16 %v1774
        %v2063 = vunpack.c.l.b16 %v1775
        %v2064 = vunpack.c.l.b16 %v1776
        %v2065 = vunpack.c.l.b16 %v1777
        %v2066 = vunpack.c.l.b16 %v1778
        %v2067 = vunpack.c.l.b16 %v1779
        %v2068 = vunpack.c.l.b16 %v1780
        %v2069 = vunpack.c.l.b16 %v1781
        %v2070 = vunpack.c.l.b16 %v1782
        %v2071 = vunpack.c.l.b16 %v1783
        %v2072 = vunpack.c.l.b16 %v1784
        %v2073 = vunpack.c.l.b16 %v1785
        %v2074 = vunpack.c.l.b16 %v1786
        %v2075 = vunpack.c.l.b16 %v1787
        %v2076 = vunpack.c.l.b16 %v1788
        %v2077 = vunpack.c.l.b16 %v1789
        %v2078 = vunpack.c.l.b16 %v1790
        %v2079 = vunpack.c.l.b16 %v1791
        %v2080 = vunpack.c.l.b16 %v1792
        %v2081 = vunpack.c.l.b16 %v1793
        %v2082 = vunpack.c.l.b16 %v1794
        %v2083 = vunpack.c.l.b16 %v1795
        %v2084 = vunpack.c.l.b16 %v1796
        %v2085 = vunpack.c.l.b16 %v1797
        %v2086 = vunpack.c.l.b16 %v1798
        %v2087 = vunpack.c.l.b16 %v1799
        %v2088 = vunpack.c.l.b16 %v1800
        %v2089 = vunpack.c.l.b16 %v1801
        %v2090 = vunpack.c.l.b16 %v1802
        %v2091 = vunpack.c.l.b16 %v1803
        %v2092 = vunpack.c.l.b16 %v1804
        %v2093 = vunpack.c.l.b16 %v1805
        %v2094 = vunpack.c.l.b16 %v1806
        %v2095 = vunpack.c.l.b16 %v1807
        %v2096 = vunpack.c.l.b16 %v1808
        %v2097 = vunpack.c.l.b16 %v1809
        %v2098 = vunpack.c.l.b16 %v1810
        %v2099 = vunpack.c.l.b16 %v1811
        %v2100 = vunpack.c.l.b16 %v1812
        %v2101 = vunpack.c.l.b16 %v1813
        %v2102 = vunpack.c.l.b16 %v1814
        %v2103 = vunpack.c.l.b16 %v1815
        %v2104 = vunpack.c.l.b16 %v1816
        %v2105 = vunpack.c.l.b16 %v1817
        %v2106 = vunpack.c.l.b16 %v1818
        %v2107 = vunpack.c.l.b16 %v1819
        %v2108 = vunpack.c.l.b16 %v1820
        %v2109 = vunpack.c.l.b16 %v1821
        %v2110 = vunpack.c.l.b16 %v1822
        %v2111 = vunpack.c.l.b16 %v1823
        %v2112 = vunpack.c.l.b16 %v1824
        %v2113 = vunpack.c.l.b16 %v1825
        %v2114 = vunpack.c.l.b16 %v1826
        %v2115 = vunpack.c.l.b16 %v1827
        %v2116 = vunpack.c.l.b16 %v1828
        %v2117 = vunpack.c.l.b16 %v1829
        %v2118 = vunpack.c.l.b16 %v1830
        %v2119 = vunpack.c.l.b16 %v1831
        %v2120 = vunpack.c.l.b16 %v1832
        %v2121 = vunpack.c.l.b16 %v1833
        %v2122 = vunpack.c.l.b16 %v1834
        %v2123 = vunpack.c.l.b16 %v1835
        %v2124 = vunpack.c.l.b16 %v1836
        %v2125 = vunpack.c.l.b16 %v1837
        %v2126 = vunpack.c.l.b16 %v1838
        %v2127 = vunpack.c.l.b16 %v1839
        %v2128 = vunpack.c.l.b16 %v1840
        %v2129 = vunpack.c.l.b16 %v1841
        %v2130 = vunpack.c.l.b16 %v1842
        %v2131 = vunpack.c.l.b16 %v1843
        %v2132 = vunpack.c.l.b16 %v1844
        %v2133 = vunpack.c.l.b16 %v1845
        %v2134 = vunpack.c.l.b16 %v1846
        %v2135 = vunpack.c.l.b16 %v1847
        %v2136 = vunpack.c.l.b16 %v1848
        %v2137 = vunpack.c.l.b16 %v1849
        %v2138 = vunpack.c.l.b16 %v1850
        %v2139 = vunpack.c.l.b16 %v1851
        %v2140 = vunpack.c.l.b16 %v1852
        %v2141 = vunpack.c.l.b16 %v1853
        %v2142 = vunpack.c.l.b16 %v1854
        %v2143 = vunpack.c.l.b16 %v1855
        %v2144 = vunpack.c.l.b16 %v1856
        %v2145 = vunpack.c.l.b16 %v1857
        %v2146 = vunpack.c.l.b16 %v1858
        %v2147 = vunpack.c.l.b16 %v1859
        %v2148 = vunpack.c.l.b16 %v1860
        %v2149 = vunpack.c.l.b16 %v1861
        %v2150 = vunpack.c.l.b16 %v1862
        %v2151 = vunpack.c.l.b16 %v1863
        %v2152 = vunpack.c.l.b16 %v1864
        %v2153 = vunpack.c.l.b16 %v1865
        %v2154 = vunpack.c.l.b16 %v1866
        %v2155 = vunpack.c.l.b16 %v1867
        %v2156 = vunpack.c.l.b16 %v1868
        %v2157 = vunpack.c.l.b16 %v1869
        %v2158 = vunpack.c.l.b16 %v1870
        %v2159 = vunpack.c.l.b16 %v1871
        %v2160 = vunpack.c.l.b16 %v1872
        %v2161 = vunpack.c.l.b16 %v1873
        %v2162 = vunpack.c.l.b16 %v1874
        %v2163 = vunpack.c.l.b16 %v1875
        %v2164 = vunpack.c.l.b16 %v1876
        %v2165 = vunpack.c.l.b16 %v1877
        %v2166 = vunpack.c.l.b16 %v1878
        %v2167 = vunpack.c.l.b16 %v1879
        %v2168 = vunpack.c.l.b16 %v1880
        %v2169 = vunpack.c.l.b16 %v1881
        %v2170 = vunpack.c.l.b16 %v1882
        %v2171 = vunpack.c.l.b16 %v1883
        %v2172 = vunpack.c.l.b16 %v1884
        %v2173 = vunpack.c.l.b16 %v1885
        %v2174 = vunpack.c.l.b16 %v1886
        %v2175 = vunpack.c.l.b16 %v1887
        %v2176 = vunpack.c.l.b16 %v1888
        %v2177 = vunpack.c.l.b16 %v1889
        %v2178 = vunpack.c.l.b16 %v1890
        %v2179 = vunpack.c.l.b16 %v1891
        %v2180 = vunpack.c.l.b16 %v1892
        %v2181 = vunpack.c.l.b16 %v1893
        %v2182 = vunpack.c.l.b16 %v1894
        %v2183 = vunpack.c.l.b16 %v1895
        %v2184 = vunpack.c.l.b16 %v1896
        %v2185 = vunpack.c.l.b16 %v1897
        %v2186 = vunpack.c.l.b16 %v1898
        %v2187 = vunpack.c.l.b16 %v1899
        %v2188 = vunpack.c.l.b16 %v1900
        %v2189 = vunpack.c.l.b16 %v1901
        %v2190 = vunpack.c.l.b16 %v1902
        %v2191 = vunpack.c.l.b16 %v1903
        %v2192 = vunpack.c.l.b16 %v1904
        %v2193 = vunpack.c.l.b16 %v1905
        %v2194 = vunpack.c.l.b16 %v1906
        %v2195 = vpack.c.b16 %v2052, %v2051
        %v2196 = vpack.c.b16 %v2054, %v2053
        %v2197 = vpack.c.b16 %v2056, %v2055
        %v2198 = vpack.c.b16 %v2058, %v2057
        %v2199 = vpack.c.b16 %v2060, %v2059
        %v2200 = vpack.c.b16 %v2062, %v2061
        %v2201 = vpack.c.b16 %v2064, %v2063
        %v2202 = vpack.c.b16 %v2066, %v2065
        %v2203 = vpack.c.b16 %v2068, %v2067
        %v2204 = vpack.c.b16 %v2070, %v2069
        %v2205 = vpack.c.b16 %v2072, %v2071
        %v2206 = vpack.c.b16 %v2074, %v2073
        %v2207 = vpack.c.b16 %v2076, %v2075
        %v2208 = vpack.c.b16 %v2078, %v2077
        %v2209 = vpack.c.b16 %v2080, %v2079
        %v2210 = vpack.c.b16 %v2082, %v2081
        %v2211 = vpack.c.b16 %v2084, %v2083
        %v2212 = vpack.c.b16 %v2086, %v2085
        %v2213 = vpack.c.b16 %v2088, %v2087
        %v2214 = vpack.c.b16 %v2090, %v2089
        %v2215 = vpack.c.b16 %v2092, %v2091
        %v2216 = vpack.c.b16 %v2094, %v2093
        %v2217 = vpack.c.b16 %v2096, %v2095
        %v2218 = vpack.c.b16 %v2098, %v2097
        %v2219 = vpack.c.b16 %v2100, %v2099
        %v2220 = vpack.c.b16 %v2102, %v2101
        %v2221 = vpack.c.b16 %v2104, %v2103
        %v2222 = vpack.c.b16 %v2106, %v2105
        %v2223 = vpack.c.b16 %v2108, %v2107
        %v2224 = vpack.c.b16 %v2110, %v2109
        %v2225 = vpack.c.b16 %v2112, %v2111
        %v2226 = vpack.c.b16 %v2114, %v2113
        %v2227 = vpack.c.b16 %v2116, %v2115
        %v2228 = vpack.c.b16 %v2118, %v2117
        %v2229 = vpack.c.b16 %v2120, %v2119
        %v2230 = vpack.c.b16 %v2122, %v2121
        %v2231 = vpack.c.b16 %v2124, %v2123
        %v2232 = vpack.c.b16 %v2126, %v2125
        %v2233 = vpack.c.b16 %v2128, %v2127
        %v2234 = vpack.c.b16 %v2130, %v2129
        %v2235 = vpack.c.b16 %v2132, %v2131
        %v2236 = vpack.c.b16 %v2134, %v2133
        %v2237 = vpack.c.b16 %v2136, %v2135
        %v2238 = vpack.c.b16 %v2138, %v2137
        %v2239 = vpack.c.b16 %v2140, %v2139
        %v2240 = vpack.c.b16 %v2142, %v2141
        %v2241 = vpack.c.b16 %v2144, %v2143
        %v2242 = vpack.c.b16 %v2146, %v2145
        %v2243 = vpack.c.b16 %v2148, %v2147
        %v2244 = vpack.c.b16 %v2150, %v2149
        %v2245 = vpack.c.b16 %v2152, %v2151
        %v2246 = vpack.c.b16 %v2154, %v2153
        %v2247 = vpack.c.b16 %v2156, %v2155
        %v2248 = vpack.c.b16 %v2158, %v2157
        %v2249 = vpack.c.b16 %v2160, %v2159
        %v2250 = vpack.c.b16 %v2162, %v2161
        %v2251 = vpack.c.b16 %v2164, %v2163
        %v2252 = vpack.c.b16 %v2166, %v2165
        %v2253 = vpack.c.b16 %v2168, %v2167
        %v2254 = vpack.c.b16 %v2170, %v2169
        %v2255 = vpack.c.b16 %v2172, %v2171
        %v2256 = vpack.c.b16 %v2174, %v2173
        %v2257 = vpack.c.b16 %v2176, %v2175
        %v2258 = vpack.c.b16 %v2178, %v2177
        %v2259 = vpack.c.b16 %v2180, %v2179
        %v2260 = vpack.c.b16 %v2182, %v2181
        %v2261 = vpack.c.b16 %v2184, %v2183
        %v2262 = vpack.c.b16 %v2186, %v2185
        %v2263 = vpack.c.b16 %v2188, %v2187
        %v2264 = vpack.c.b16 %v2190, %v2189
        %v2265 = vpack.c.b16 %v2192, %v2191
        %v2266 = vpack.c.b16 %v2194, %v2193
        %2339 = vmatprep.subr.bf16.mxu0 0
        %2340 = vmatpush1.bf16.msra.mxu0 %v2195
        %2341 = vmatprep.subr.bf16.mxu0 0
        %2342 = vmatpush1.bf16.msra.mxu0 %v2196
        %2343 = vmatprep.subr.bf16.mxu0 0
        %2344 = vmatpush1.bf16.msra.mxu0 %v2197
        %2345 = vmatprep.subr.bf16.mxu0 0
        %2346 = vmatpush1.bf16.msra.mxu0 %v2198
        %2347 = vmatprep.subr.bf16.mxu0 0
        %2348 = vmatpush1.bf16.msra.mxu0 %v2199
        %2349 = vmatprep.subr.bf16.mxu0 0
        %2350 = vmatpush1.bf16.msra.mxu0 %v2200
        %2351 = vmatprep.subr.bf16.mxu0 0
        %2352 = vmatpush1.bf16.msra.mxu0 %v2201
        %2353 = vmatprep.subr.bf16.mxu0 0
        %2354 = vmatpush1.bf16.msra.mxu0 %v2202
        %2355 = vmatprep.subr.bf16.mxu0 0
        %2356 = vmatpush1.bf16.msra.mxu0 %v2203
        %2357 = vmatprep.subr.bf16.mxu0 0
        %2358 = vmatpush1.bf16.msra.mxu0 %v2204
        %2359 = vmatprep.subr.bf16.mxu0 0
        %2360 = vmatpush1.bf16.msra.mxu0 %v2205
        %2361 = vmatprep.subr.bf16.mxu0 0
        %2362 = vmatpush1.bf16.msra.mxu0 %v2206
        %2363 = vmatprep.subr.bf16.mxu0 0
        %2364 = vmatpush1.bf16.msra.mxu0 %v2207
        %2365 = vmatprep.subr.bf16.mxu0 0
        %2366 = vmatpush1.bf16.msra.mxu0 %v2208
        %2367 = vmatprep.subr.bf16.mxu0 0
        %2368 = vmatpush1.bf16.msra.mxu0 %v2209
        %2369 = vmatprep.subr.bf16.mxu0 0
        %2370 = vmatpush1.bf16.msra.mxu0 %v2210
        %2371 = vmatprep.mubr.bf16.mxu0 %v1443
        %2372 = vmatmul.mubr.bf16.gmra.mrb[0].mxu0 %v1403
        %v2373 = vpop.f32.mrb[0].mxu0
        %v2374 = vadd.f32 0.0, %v2373
        %v2375 = vpop.f32.mrb[0].mxu0
        %v2376 = vpop.f32.mrb[0].mxu0
        %v2377 = vadd.f32 0.0, %v2376
        %v2378 = vpop.f32.mrb[0].mxu0
        %2379 = vmatprep.mubr.bf16.mxu0 %v1444
        %2380 = vmatmul.mubr.bf16.gmra.mrb[0].mxu0 %v1404
        %v2381 = vpop.f32.mrb[0].mxu0
        %v2382 = vadd.f32 0.0, %v2381
        %v2383 = vpop.f32.mrb[0].mxu0
        %v2384 = vpop.f32.mrb[0].mxu0
        %v2385 = vadd.f32 0.0, %v2384
        %v2386 = vpop.f32.mrb[0].mxu0
        %2387 = vmatprep.mubr.bf16.mxu0 %v1445
        %2388 = vmatmul.mubr.bf16.gmra.mrb[0].mxu0 %v1405
        %v2389 = vpop.f32.mrb[0].mxu0
        %v2390 = vadd.f32 0.0, %v2389
        %v2391 = vpop.f32.mrb[0].mxu0
        %v2392 = vpop.f32.mrb[0].mxu0
        %v2393 = vadd.f32 0.0, %v2392
        %v2394 = vpop.f32.mrb[0].mxu0
        %2395 = vmatprep.mubr.bf16.mxu0 %v1446
        %2396 = vmatmul.mubr.bf16.gmra.mrb[0].mxu0 %v1406
        %v2397 = vpop.f32.mrb[0].mxu0
        %v2398 = vadd.f32 0.0, %v2397
        %v2399 = vpop.f32.mrb[0].mxu0
        %v2400 = vpop.f32.mrb[0].mxu0
        %v2401 = vadd.f32 0.0, %v2400
        %v2402 = vpop.f32.mrb[0].mxu0
        %2403 = vmatprep.mubr.bf16.mxu0 %v1447
        %2404 = vmatmul.mubr.bf16.gmra.mrb[0].mxu0 %v1407
        %v2405 = vpop.f32.mrb[0].mxu0
        %v2406 = vadd.f32 0.0, %v2405
        %v2407 = vpop.f32.mrb[0].mxu0
        %v2408 = vpop.f32.mrb[0].mxu0
        %v2409 = vadd.f32 0.0, %v2408
        %v2410 = vpop.f32.mrb[0].mxu0
        %2411 = vmatprep.mubr.bf16.mxu0 %v1448
        %2412 = vmatmul.mubr.bf16.gmra.mrb[0].mxu0 %v1408
        %v2413 = vpop.f32.mrb[0].mxu0
        %v2414 = vadd.f32 0.0, %v2413
        %v2415 = vpop.f32.mrb[0].mxu0
        %v2416 = vpop.f32.mrb[0].mxu0
        %v2417 = vadd.f32 0.0, %v2416
        %v2418 = vpop.f32.mrb[0].mxu0
        %2419 = vmatprep.mubr.bf16.mxu0 %v1449
        %2420 = vmatmul.mubr.bf16.gmra.mrb[0].mxu0 %v1409
        %v2421 = vpop.f32.mrb[0].mxu0
        %v2422 = vadd.f32 0.0, %v2421
        %v2423 = vpop.f32.mrb[0].mxu0
        %v2424 = vpop.f32.mrb[0].mxu0
        %v2425 = vadd.f32 0.0, %v2424
        %v2426 = vpop.f32.mrb[0].mxu0
        %2427 = vmatprep.mubr.bf16.mxu0 %v1450
        %2428 = vmatmul.mubr.bf16.gmra.mrb[0].mxu0 %v1410
        %v2429 = vpop.f32.mrb[0].mxu0
        %v2430 = vadd.f32 0.0, %v2429
        %v2431 = vpop.f32.mrb[0].mxu0
        %v2432 = vpop.f32.mrb[0].mxu0
        %v2433 = vadd.f32 0.0, %v2432
        %v2434 = vpop.f32.mrb[0].mxu0
        %2435 = vmatprep.mubr.bf16.mxu0 %v1451
        %2436 = vmatmul.mubr.bf16.gmra.mrb[0].mxu0 %v1411
        %v2437 = vpop.f32.mrb[0].mxu0
        %v2438 = vadd.f32 0.0, %v2437
        %v2439 = vpop.f32.mrb[0].mxu0
        %v2440 = vpop.f32.mrb[0].mxu0
        %v2441 = vadd.f32 0.0, %v2440
        %v2442 = vpop.f32.mrb[0].mxu0
        %2443 = vmatprep.mubr.bf16.mxu0 %v1452
        %2444 = vmatmul.mubr.bf16.gmra.mrb[0].mxu0 %v1412
        %v2445 = vpop.f32.mrb[0].mxu0
        %v2446 = vadd.f32 0.0, %v2445
        %v2447 = vpop.f32.mrb[0].mxu0
        %v2448 = vpop.f32.mrb[0].mxu0
        %v2449 = vadd.f32 0.0, %v2448
        %v2450 = vpop.f32.mrb[0].mxu0
        %2451 = vdwg.mxu0
        %2452 = vmatprep.subr.bf16.mxu0 0
        %2453 = vmatpush1.bf16.msra.mxu0 %v2211
        %2454 = vmatprep.subr.bf16.mxu0 0
        %2455 = vmatpush1.bf16.msra.mxu0 %v2212
        %2456 = vmatprep.subr.bf16.mxu0 0
        %2457 = vmatpush1.bf16.msra.mxu0 %v2213
        %2458 = vmatprep.subr.bf16.mxu0 0
        %2459 = vmatpush1.bf16.msra.mxu0 %v2214
        %2460 = vmatprep.subr.bf16.mxu0 0
        %2461 = vmatpush1.bf16.msra.mxu0 %v2215
        %2462 = vmatprep.subr.bf16.mxu0 0
        %2463 = vmatpush1.bf16.msra.mxu0 %v2216
        %2464 = vmatprep.subr.bf16.mxu0 0
        %2465 = vmatpush1.bf16.msra.mxu0 %v2217
        %2466 = vmatprep.subr.bf16.mxu0 0
        %2467 = vmatpush1.bf16.msra.mxu0 %v2218
        %2468 = vmatprep.subr.bf16.mxu0 0
        %2469 = vmatpush1.bf16.msra.mxu0 %v2219
        %2470 = vmatprep.subr.bf16.mxu0 0
        %2471 = vmatpush1.bf16.msra.mxu0 %v2220
        %2472 = vmatprep.subr.bf16.mxu0 0
        %2473 = vmatpush1.bf16.msra.mxu0 %v2221
        %2474 = vmatprep.subr.bf16.mxu0 0
        %2475 = vmatpush1.bf16.msra.mxu0 %v2222
        %2476 = vmatprep.subr.bf16.mxu0 0
        %2477 = vmatpush1.bf16.msra.mxu0 %v2223
        %2478 = vmatprep.subr.bf16.mxu0 0
        %2479 = vmatpush1.bf16.msra.mxu0 %v2224
        %2480 = vmatprep.subr.bf16.mxu0 0
        %2481 = vmatpush1.bf16.msra.mxu0 %v2225
        %2482 = vmatprep.subr.bf16.mxu0 0
        %2483 = vmatpush1.bf16.msra.mxu0 %v2226
        %2484 = vmatprep.mubr.bf16.mxu0 %v1533
        %2485 = vmatmul.mubr.bf16.gmra.mrb[0].mxu0 %v1483
        %v2486 = vpop.f32.mrb[0].mxu0
        %v2487 = vadd.f32 %v2374, %v2486
        %v2488 = vpop.f32.mrb[0].mxu0
        %v2489 = vpop.f32.mrb[0].mxu0
        %v2490 = vadd.f32 %v2377, %v2489
        %v2491 = vpop.f32.mrb[0].mxu0
        %2492 = vmatprep.mubr.bf16.mxu0 %v1534
        %2493 = vmatmul.mubr.bf16.gmra.mrb[0].mxu0 %v1484
        %v2494 = vpop.f32.mrb[0].mxu0
        %v2495 = vadd.f32 %v2382, %v2494
        %v2496 = vpop.f32.mrb[0].mxu0
        %v2497 = vpop.f32.mrb[0].mxu0
        %v2498 = vadd.f32 %v2385, %v2497
        %v2499 = vpop.f32.mrb[0].mxu0
        %2500 = vmatprep.mubr.bf16.mxu0 %v1535
        %2501 = vmatmul.mubr.bf16.gmra.mrb[0].mxu0 %v1485
        %v2502 = vpop.f32.mrb[0].mxu0
        %v2503 = vadd.f32 %v2390, %v2502
        %v2504 = vpop.f32.mrb[0].mxu0
        %v2505 = vpop.f32.mrb[0].mxu0
        %v2506 = vadd.f32 %v2393, %v2505
        %v2507 = vpop.f32.mrb[0].mxu0
        %2508 = vmatprep.mubr.bf16.mxu0 %v1536
        %2509 = vmatmul.mubr.bf16.gmra.mrb[0].mxu0 %v1486
        %v2510 = vpop.f32.mrb[0].mxu0
        %v2511 = vadd.f32 %v2398, %v2510
        %v2512 = vpop.f32.mrb[0].mxu0
        %v2513 = vpop.f32.mrb[0].mxu0
        %v2514 = vadd.f32 %v2401, %v2513
        %v2515 = vpop.f32.mrb[0].mxu0
        %2516 = vmatprep.mubr.bf16.mxu0 %v1537
        %2517 = vmatmul.mubr.bf16.gmra.mrb[0].mxu0 %v1487
        %v2518 = vpop.f32.mrb[0].mxu0
        %v2519 = vadd.f32 %v2406, %v2518
        %v2520 = vpop.f32.mrb[0].mxu0
        %v2521 = vpop.f32.mrb[0].mxu0
        %v2522 = vadd.f32 %v2409, %v2521
        %v2523 = vpop.f32.mrb[0].mxu0
        %2524 = vmatprep.mubr.bf16.mxu0 %v1538
        %2525 = vmatmul.mubr.bf16.gmra.mrb[0].mxu0 %v1488
        %v2526 = vpop.f32.mrb[0].mxu0
        %v2527 = vadd.f32 %v2414, %v2526
        %v2528 = vpop.f32.mrb[0].mxu0
        %v2529 = vpop.f32.mrb[0].mxu0
        %v2530 = vadd.f32 %v2417, %v2529
        %v2531 = vpop.f32.mrb[0].mxu0
        %2532 = vmatprep.mubr.bf16.mxu0 %v1539
        %2533 = vmatmul.mubr.bf16.gmra.mrb[0].mxu0 %v1489
        %v2534 = vpop.f32.mrb[0].mxu0
        %v2535 = vadd.f32 %v2422, %v2534
        %v2536 = vpop.f32.mrb[0].mxu0
        %v2537 = vpop.f32.mrb[0].mxu0
        %v2538 = vadd.f32 %v2425, %v2537
        %v2539 = vpop.f32.mrb[0].mxu0
        %2540 = vmatprep.mubr.bf16.mxu0 %v1540
        %2541 = vmatmul.mubr.bf16.gmra.mrb[0].mxu0 %v1490
        %v2542 = vpop.f32.mrb[0].mxu0
        %v2543 = vadd.f32 %v2430, %v2542
        %v2544 = vpop.f32.mrb[0].mxu0
        %v2545 = vpop.f32.mrb[0].mxu0
        %v2546 = vadd.f32 %v2433, %v2545
        %v2547 = vpop.f32.mrb[0].mxu0
        %2548 = vmatprep.mubr.bf16.mxu0 %v1541
        %2549 = vmatmul.mubr.bf16.gmra.mrb[0].mxu0 %v1491
        %v2550 = vpop.f32.mrb[0].mxu0
        %v2551 = vadd.f32 %v2438, %v2550
        %v2552 = vpop.f32.mrb[0].mxu0
        %v2553 = vpop.f32.mrb[0].mxu0
        %v2554 = vadd.f32 %v2441, %v2553
        %v2555 = vpop.f32.mrb[0].mxu0
        %2556 = vmatprep.mubr.bf16.mxu0 %v1542
        %2557 = vmatmul.mubr.bf16.gmra.mrb[0].mxu0 %v1492
        %v2558 = vpop.f32.mrb[0].mxu0
        %v2559 = vadd.f32 %v2446, %v2558
        %v2560 = vpop.f32.mrb[0].mxu0
        %v2561 = vpop.f32.mrb[0].mxu0
        %v2562 = vadd.f32 %v2449, %v2561
        %v2563 = vpop.f32.mrb[0].mxu0
        %2564 = vdwg.mxu0
        %2565 = vmatprep.subr.bf16.mxu0 0
        %2566 = vmatpush1.bf16.msra.mxu0 %v2227
        %2567 = vmatprep.subr.bf16.mxu0 0
        %2568 = vmatpush1.bf16.msra.mxu0 %v2228
        %2569 = vmatprep.subr.bf16.mxu0 0
        %2570 = vmatpush1.bf16.msra.mxu0 %v2229
        %2571 = vmatprep.subr.bf16.mxu0 0
        %2572 = vmatpush1.bf16.msra.mxu0 %v2230
        %2573 = vmatprep.subr.bf16.mxu0 0
        %2574 = vmatpush1.bf16.msra.mxu0 %v2231
        %2575 = vmatprep.subr.bf16.mxu0 0
        %2576 = vmatpush1.bf16.msra.mxu0 %v2232
        %2577 = vmatprep.subr.bf16.mxu0 0
        %2578 = vmatpush1.bf16.msra.mxu0 %v2233
        %2579 = vmatprep.subr.bf16.mxu0 0
        %2580 = vmatpush1.bf16.msra.mxu0 %v2234
        %2581 = vmatprep.subr.bf16.mxu0 0
        %2582 = vmatpush1.bf16.msra.mxu0 %v2235
        %2583 = vmatprep.subr.bf16.mxu0 0
        %2584 = vmatpush1.bf16.msra.mxu0 %v2236
        %2585 = vmatprep.subr.bf16.mxu0 0
        %2586 = vmatpush1.bf16.msra.mxu0 %v2237
        %2587 = vmatprep.subr.bf16.mxu0 0
        %2588 = vmatpush1.bf16.msra.mxu0 %v2238
        %2589 = vmatprep.subr.bf16.mxu0 0
        %2590 = vmatpush1.bf16.msra.mxu0 %v2239
        %2591 = vmatprep.subr.bf16.mxu0 0
        %2592 = vmatpush1.bf16.msra.mxu0 %v2240
        %2593 = vmatprep.subr.bf16.mxu0 0
        %2594 = vmatpush1.bf16.msra.mxu0 %v2241
        %2595 = vmatprep.subr.bf16.mxu0 0
        %2596 = vmatpush1.bf16.msra.mxu0 %v2242
        %2597 = vmatprep.mubr.bf16.mxu0 %v1613
        %2598 = vmatmul.mubr.bf16.gmra.mrb[0].mxu0 %v1573
        %v2599 = vpop.f32.mrb[0].mxu0
        %v2600 = vadd.f32 %v2487, %v2599
        %v2601 = vpop.f32.mrb[0].mxu0
        %v2602 = vpop.f32.mrb[0].mxu0
        %v2603 = vadd.f32 %v2490, %v2602
        %v2604 = vpop.f32.mrb[0].mxu0
        %2605 = vmatprep.mubr.bf16.mxu0 %v1614
        %2606 = vmatmul.mubr.bf16.gmra.mrb[0].mxu0 %v1574
        %v2607 = vpop.f32.mrb[0].mxu0
        %v2608 = vadd.f32 %v2495, %v2607
        %v2609 = vpop.f32.mrb[0].mxu0
        %v2610 = vpop.f32.mrb[0].mxu0
        %v2611 = vadd.f32 %v2498, %v2610
        %v2612 = vpop.f32.mrb[0].mxu0
        %2613 = vmatprep.mubr.bf16.mxu0 %v1615
        %2614 = vmatmul.mubr.bf16.gmra.mrb[0].mxu0 %v1575
        %v2615 = vpop.f32.mrb[0].mxu0
        %v2616 = vadd.f32 %v2503, %v2615
        %v2617 = vpop.f32.mrb[0].mxu0
        %v2618 = vpop.f32.mrb[0].mxu0
        %v2619 = vadd.f32 %v2506, %v2618
        %v2620 = vpop.f32.mrb[0].mxu0
        %2621 = vmatprep.mubr.bf16.mxu0 %v1616
        %2622 = vmatmul.mubr.bf16.gmra.mrb[0].mxu0 %v1576
        %v2623 = vpop.f32.mrb[0].mxu0
        %v2624 = vadd.f32 %v2511, %v2623
        %v2625 = vpop.f32.mrb[0].mxu0
        %v2626 = vpop.f32.mrb[0].mxu0
        %v2627 = vadd.f32 %v2514, %v2626
        %v2628 = vpop.f32.mrb[0].mxu0
        %2629 = vmatprep.mubr.bf16.mxu0 %v1617
        %2630 = vmatmul.mubr.bf16.gmra.mrb[0].mxu0 %v1577
        %v2631 = vpop.f32.mrb[0].mxu0
        %v2632 = vadd.f32 %v2519, %v2631
        %v2633 = vpop.f32.mrb[0].mxu0
        %v2634 = vpop.f32.mrb[0].mxu0
        %v2635 = vadd.f32 %v2522, %v2634
        %v2636 = vpop.f32.mrb[0].mxu0
        %2637 = vmatprep.mubr.bf16.mxu0 %v1618
        %2638 = vmatmul.mubr.bf16.gmra.mrb[0].mxu0 %v1578
        %v2639 = vpop.f32.mrb[0].mxu0
        %v2640 = vadd.f32 %v2527, %v2639
        %v2641 = vpop.f32.mrb[0].mxu0
        %v2642 = vpop.f32.mrb[0].mxu0
        %v2643 = vadd.f32 %v2530, %v2642
        %v2644 = vpop.f32.mrb[0].mxu0
        %2645 = vmatprep.mubr.bf16.mxu0 %v1619
        %2646 = vmatmul.mubr.bf16.gmra.mrb[0].mxu0 %v1579
        %v2647 = vpop.f32.mrb[0].mxu0
        %v2648 = vadd.f32 %v2535, %v2647
        %v2649 = vpop.f32.mrb[0].mxu0
        %v2650 = vpop.f32.mrb[0].mxu0
        %v2651 = vadd.f32 %v2538, %v2650
        %v2652 = vpop.f32.mrb[0].mxu0
        %2653 = vmatprep.mubr.bf16.mxu0 %v1620
        %2654 = vmatmul.mubr.bf16.gmra.mrb[0].mxu0 %v1580
        %v2655 = vpop.f32.mrb[0].mxu0
        %v2656 = vadd.f32 %v2543, %v2655
        %v2657 = vpop.f32.mrb[0].mxu0
        %v2658 = vpop.f32.mrb[0].mxu0
        %v2659 = vadd.f32 %v2546, %v2658
        %v2660 = vpop.f32.mrb[0].mxu0
        %2661 = vmatprep.mubr.bf16.mxu0 %v1621
        %2662 = vmatmul.mubr.bf16.gmra.mrb[0].mxu0 %v1581
        %v2663 = vpop.f32.mrb[0].mxu0
        %v2664 = vadd.f32 %v2551, %v2663
        %v2665 = vpop.f32.mrb[0].mxu0
        %v2666 = vpop.f32.mrb[0].mxu0
        %v2667 = vadd.f32 %v2554, %v2666
        %v2668 = vpop.f32.mrb[0].mxu0
        %2669 = vmatprep.mubr.bf16.mxu0 %v1622
        %2670 = vmatmul.mubr.bf16.gmra.mrb[0].mxu0 %v1582
        %v2671 = vpop.f32.mrb[0].mxu0
        %v2672 = vadd.f32 %v2559, %v2671
        %v2673 = vpop.f32.mrb[0].mxu0
        %v2674 = vpop.f32.mrb[0].mxu0
        %v2675 = vadd.f32 %v2562, %v2674
        %v2676 = vpop.f32.mrb[0].mxu0
        %2677 = vdwg.mxu0
        %2678 = vmatprep.subr.bf16.mxu0 0
        %2679 = vmatpush1.bf16.msra.mxu0 %v2243
        %2680 = vmatprep.subr.bf16.mxu0 0
        %2681 = vmatpush1.bf16.msra.mxu0 %v2244
        %2682 = vmatprep.subr.bf16.mxu0 0
        %2683 = vmatpush1.bf16.msra.mxu0 %v2245
        %2684 = vmatprep.subr.bf16.mxu0 0
        %2685 = vmatpush1.bf16.msra.mxu0 %v2246
        %2686 = vmatprep.subr.bf16.mxu0 0
        %2687 = vmatpush1.bf16.msra.mxu0 %v2247
        %2688 = vmatprep.subr.bf16.mxu0 0
        %2689 = vmatpush1.bf16.msra.mxu0 %v2248
        %2690 = vmatprep.subr.bf16.mxu0 0
        %2691 = vmatpush1.bf16.msra.mxu0 %v2249
        %2692 = vmatprep.subr.bf16.mxu0 0
        %2693 = vmatpush1.bf16.msra.mxu0 %v2250
        %2694 = vmatprep.subr.bf16.mxu0 0
        %2695 = vmatpush1.bf16.msra.mxu0 %v2251
        %2696 = vmatprep.subr.bf16.mxu0 0
        %2697 = vmatpush1.bf16.msra.mxu0 %v2252
        %2698 = vmatprep.subr.bf16.mxu0 0
        %2699 = vmatpush1.bf16.msra.mxu0 %v2253
        %2700 = vmatprep.subr.bf16.mxu0 0
        %2701 = vmatpush1.bf16.msra.mxu0 %v2254
        %2702 = vmatprep.subr.bf16.mxu0 0
        %2703 = vmatpush1.bf16.msra.mxu0 %v2255
        %2704 = vmatprep.subr.bf16.mxu0 0
        %2705 = vmatpush1.bf16.msra.mxu0 %v2256
        %2706 = vmatprep.subr.bf16.mxu0 0
        %2707 = vmatpush1.bf16.msra.mxu0 %v2257
        %2708 = vmatprep.subr.bf16.mxu0 0
        %2709 = vmatpush1.bf16.msra.mxu0 %v2258
        %2710 = vmatprep.mubr.bf16.mxu0 %v1703
        %2711 = vmatmul.mubr.bf16.gmra.mrb[0].mxu0 %v1663
        %v2712 = vpop.f32.mrb[0].mxu0
        %v2713 = vadd.f32 %v2600, %v2712
        %v2714 = vpop.f32.mrb[0].mxu0
        %v2715 = vpop.f32.mrb[0].mxu0
        %v2716 = vadd.f32 %v2603, %v2715
        %v2717 = vpop.f32.mrb[0].mxu0
        %2718 = vmatprep.mubr.bf16.mxu0 %v1704
        %2719 = vmatmul.mubr.bf16.gmra.mrb[0].mxu0 %v1664
        %v2720 = vpop.f32.mrb[0].mxu0
        %v2721 = vadd.f32 %v2608, %v2720
        %v2722 = vpop.f32.mrb[0].mxu0
        %v2723 = vpop.f32.mrb[0].mxu0
        %v2724 = vadd.f32 %v2611, %v2723
        %v2725 = vpop.f32.mrb[0].mxu0
        %2726 = vmatprep.mubr.bf16.mxu0 %v1705
        %2727 = vmatmul.mubr.bf16.gmra.mrb[0].mxu0 %v1665
        %v2728 = vpop.f32.mrb[0].mxu0
        %v2729 = vadd.f32 %v2616, %v2728
        %v2730 = vpop.f32.mrb[0].mxu0
        %v2731 = vpop.f32.mrb[0].mxu0
        %v2732 = vadd.f32 %v2619, %v2731
        %v2733 = vpop.f32.mrb[0].mxu0
        %2734 = vmatprep.mubr.bf16.mxu0 %v1706
        %2735 = vmatmul.mubr.bf16.gmra.mrb[0].mxu0 %v1666
        %v2736 = vpop.f32.mrb[0].mxu0
        %v2737 = vadd.f32 %v2624, %v2736
        %v2738 = vpop.f32.mrb[0].mxu0
        %v2739 = vpop.f32.mrb[0].mxu0
        %v2740 = vadd.f32 %v2627, %v2739
        %v2741 = vpop.f32.mrb[0].mxu0
        %2742 = vmatprep.mubr.bf16.mxu0 %v1707
        %2743 = vmatmul.mubr.bf16.gmra.mrb[0].mxu0 %v1667
        %v2744 = vpop.f32.mrb[0].mxu0
        %v2745 = vadd.f32 %v2632, %v2744
        %v2746 = vpop.f32.mrb[0].mxu0
        %v2747 = vpop.f32.mrb[0].mxu0
        %v2748 = vadd.f32 %v2635, %v2747
        %v2749 = vpop.f32.mrb[0].mxu0
        %2750 = vmatprep.mubr.bf16.mxu0 %v1708
        %2751 = vmatmul.mubr.bf16.gmra.mrb[0].mxu0 %v1668
        %v2752 = vpop.f32.mrb[0].mxu0
        %v2753 = vadd.f32 %v2640, %v2752
        %v2754 = vpop.f32.mrb[0].mxu0
        %v2755 = vpop.f32.mrb[0].mxu0
        %v2756 = vadd.f32 %v2643, %v2755
        %v2757 = vpop.f32.mrb[0].mxu0
        %2758 = vmatprep.mubr.bf16.mxu0 %v1709
        %2759 = vmatmul.mubr.bf16.gmra.mrb[0].mxu0 %v1669
        %v2760 = vpop.f32.mrb[0].mxu0
        %v2761 = vadd.f32 %v2648, %v2760
        %v2762 = vpop.f32.mrb[0].mxu0
        %v2763 = vpop.f32.mrb[0].mxu0
        %v2764 = vadd.f32 %v2651, %v2763
        %v2765 = vpop.f32.mrb[0].mxu0
        %2766 = vmatprep.mubr.bf16.mxu0 %v1710
        %2767 = vmatmul.mubr.bf16.gmra.mrb[0].mxu0 %v1670
        %v2768 = vpop.f32.mrb[0].mxu0
        %v2769 = vadd.f32 %v2656, %v2768
        %v2770 = vpop.f32.mrb[0].mxu0
        %v2771 = vpop.f32.mrb[0].mxu0
        %v2772 = vadd.f32 %v2659, %v2771
        %v2773 = vpop.f32.mrb[0].mxu0
        %2774 = vmatprep.mubr.bf16.mxu0 %v1711
        %2775 = vmatmul.mubr.bf16.gmra.mrb[0].mxu0 %v1671
        %v2776 = vpop.f32.mrb[0].mxu0
        %v2777 = vadd.f32 %v2664, %v2776
        %v2778 = vpop.f32.mrb[0].mxu0
        %v2779 = vpop.f32.mrb[0].mxu0
        %v2780 = vadd.f32 %v2667, %v2779
        %v2781 = vpop.f32.mrb[0].mxu0
        %2782 = vmatprep.mubr.bf16.mxu0 %v1712
        %2783 = vmatmul.mubr.bf16.gmra.mrb[0].mxu0 %v1672
        %v2784 = vpop.f32.mrb[0].mxu0
        %v2785 = vadd.f32 %v2672, %v2784
        %v2786 = vpop.f32.mrb[0].mxu0
        %v2787 = vpop.f32.mrb[0].mxu0
        %v2788 = vadd.f32 %v2675, %v2787
        %v2789 = vpop.f32.mrb[0].mxu0
        %2790 = vdwg.mxu0
        %2791 = vmatprep.subr.bf16.mxu0 0
        %2792 = vmatpush1.bf16.msra.mxu0 %v2259
        %2793 = vmatprep.subr.bf16.mxu0 0
        %2794 = vmatpush1.bf16.msra.mxu0 %v2260
        %2795 = vmatprep.subr.bf16.mxu0 0
        %2796 = vmatpush1.bf16.msra.mxu0 %v2261
        %2797 = vmatprep.subr.bf16.mxu0 0
        %2798 = vmatpush1.bf16.msra.mxu0 %v2262
        %2799 = vmatprep.subr.bf16.mxu0 0
        %2800 = vmatpush1.bf16.msra.mxu0 %v2263
        %2801 = vmatprep.subr.bf16.mxu0 0
        %2802 = vmatpush1.bf16.msra.mxu0 %v2264
        %2803 = vmatprep.subr.bf16.mxu0 0
        %2804 = vmatpush1.bf16.msra.mxu0 %v2265
        %2805 = vmatprep.subr.bf16.mxu0 0
        %2806 = vmatpush1.bf16.msra.mxu0 %v2266
        %2807 = vmatprep.subr.bf16.mxu0 0
        %2808 = vmatpush1.bf16.msra.mxu0 0
        %2809 = vmatprep.subr.bf16.mxu0 0
        %2810 = vmatpush1.bf16.msra.mxu0 0
        %2811 = vmatprep.subr.bf16.mxu0 0
        %2812 = vmatpush1.bf16.msra.mxu0 0
        %2813 = vmatprep.subr.bf16.mxu0 0
        %2814 = vmatpush1.bf16.msra.mxu0 0
        %2815 = vmatprep.subr.bf16.mxu0 0
        %2816 = vmatpush1.bf16.msra.mxu0 0
        %2817 = vmatprep.subr.bf16.mxu0 0
        %2818 = vmatpush1.bf16.msra.mxu0 0
        %2819 = vmatprep.subr.bf16.mxu0 0
        %2820 = vmatpush1.bf16.msra.mxu0 0
        %2821 = vmatprep.subr.bf16.mxu0 0
        %2822 = vmatpush1.bf16.msra.mxu0 0
        %2823 = vmatprep.mubr.bf16.mxu0 0
        %2824 = vmatmul.mubr.bf16.gmra.mrb[0].mxu0 %v1743
        %v2825 = vpop.f32.mrb[0].mxu0
        %v2826 = vadd.f32 %v2713, %v2825
        %v2827 = vpop.f32.mrb[0].mxu0
        %v2828 = vpop.f32.mrb[0].mxu0
        %v2829 = vadd.f32 %v2716, %v2828
        %v2830 = vpop.f32.mrb[0].mxu0
        %2831 = vmatprep.mubr.bf16.mxu0 0
        %2832 = vmatmul.mubr.bf16.gmra.mrb[0].mxu0 %v1744
        %v2833 = vpop.f32.mrb[0].mxu0
        %v2834 = vadd.f32 %v2721, %v2833
        %v2835 = vpop.f32.mrb[0].mxu0
        %v2836 = vpop.f32.mrb[0].mxu0
        %v2837 = vadd.f32 %v2724, %v2836
        %v2838 = vpop.f32.mrb[0].mxu0
        %2839 = vmatprep.mubr.bf16.mxu0 0
        %2840 = vmatmul.mubr.bf16.gmra.mrb[0].mxu0 %v1745
        %v2841 = vpop.f32.mrb[0].mxu0
        %v2842 = vadd.f32 %v2729, %v2841
        %v2843 = vpop.f32.mrb[0].mxu0
        %v2844 = vpop.f32.mrb[0].mxu0
        %v2845 = vadd.f32 %v2732, %v2844
        %v2846 = vpop.f32.mrb[0].mxu0
        %2847 = vmatprep.mubr.bf16.mxu0 0
        %2848 = vmatmul.mubr.bf16.gmra.mrb[0].mxu0 %v1746
        %v2849 = vpop.f32.mrb[0].mxu0
        %v2850 = vadd.f32 %v2737, %v2849
        %v2851 = vpop.f32.mrb[0].mxu0
        %v2852 = vpop.f32.mrb[0].mxu0
        %v2853 = vadd.f32 %v2740, %v2852
        %v2854 = vpop.f32.mrb[0].mxu0
        %2855 = vmatprep.mubr.bf16.mxu0 0
        %2856 = vmatmul.mubr.bf16.gmra.mrb[0].mxu0 %v1747
        %v2857 = vpop.f32.mrb[0].mxu0
        %v2858 = vadd.f32 %v2745, %v2857
        %v2859 = vpop.f32.mrb[0].mxu0
        %v2860 = vpop.f32.mrb[0].mxu0
        %v2861 = vadd.f32 %v2748, %v2860
        %v2862 = vpop.f32.mrb[0].mxu0
        %2863 = vmatprep.mubr.bf16.mxu0 0
        %2864 = vmatmul.mubr.bf16.gmra.mrb[0].mxu0 %v1748
        %v2865 = vpop.f32.mrb[0].mxu0
        %v2866 = vadd.f32 %v2753, %v2865
        %v2867 = vpop.f32.mrb[0].mxu0
        %v2868 = vpop.f32.mrb[0].mxu0
        %v2869 = vadd.f32 %v2756, %v2868
        %v2870 = vpop.f32.mrb[0].mxu0
        %2871 = vmatprep.mubr.bf16.mxu0 0
        %2872 = vmatmul.mubr.bf16.gmra.mrb[0].mxu0 %v1749
        %v2873 = vpop.f32.mrb[0].mxu0
        %v2874 = vadd.f32 %v2761, %v2873
        %v2875 = vpop.f32.mrb[0].mxu0
        %v2876 = vpop.f32.mrb[0].mxu0
        %v2877 = vadd.f32 %v2764, %v2876
        %v2878 = vpop.f32.mrb[0].mxu0
        %2879 = vmatprep.mubr.bf16.mxu0 0
        %2880 = vmatmul.mubr.bf16.gmra.mrb[0].mxu0 %v1750
        %v2881 = vpop.f32.mrb[0].mxu0
        %v2882 = vadd.f32 %v2769, %v2881
        %v2883 = vpop.f32.mrb[0].mxu0
        %v2884 = vpop.f32.mrb[0].mxu0
        %v2885 = vadd.f32 %v2772, %v2884
        %v2886 = vpop.f32.mrb[0].mxu0
        %2887 = vmatprep.mubr.bf16.mxu0 0
        %2888 = vmatmul.mubr.bf16.gmra.mrb[0].mxu0 %v1751
        %v2889 = vpop.f32.mrb[0].mxu0
        %v2890 = vadd.f32 %v2777, %v2889
        %v2891 = vpop.f32.mrb[0].mxu0
        %v2892 = vpop.f32.mrb[0].mxu0
        %v2893 = vadd.f32 %v2780, %v2892
        %v2894 = vpop.f32.mrb[0].mxu0
        %2895 = vmatprep.mubr.bf16.mxu0 0
        %2896 = vmatmul.mubr.bf16.gmra.mrb[0].mxu0 %v1752
        %v2897 = vpop.f32.mrb[0].mxu0
        %v2898 = vadd.f32 %v2785, %v2897
        %v2899 = vpop.f32.mrb[0].mxu0
        %v2900 = vpop.f32.mrb[0].mxu0
        %v2901 = vadd.f32 %v2788, %v2900
        %v2902 = vpop.f32.mrb[0].mxu0
        %2903 = vdwg.mxu0
        %v2904 = vld [vmem:[%s3] sm:$0x1]
        %v2905 = vlaneseq
        %v2906 = vshrl.u32 %v2905, 7
        %v2907 = vsub.s32 0, %v2906
        %v2908 = vrot.slane %v2904, %v2907
        %v2909 = vmul.f32 %v2826, %v2908
        %v2910 = vmul.f32 %v2829, %v2908
        %v2911 = vmul.f32 %v2834, %v2908
        %v2912 = vmul.f32 %v2837, %v2908
        %v2913 = vmul.f32 %v2842, %v2908
        %v2914 = vmul.f32 %v2845, %v2908
        %v2915 = vmul.f32 %v2850, %v2908
        %v2916 = vmul.f32 %v2853, %v2908
        %v2917 = vmul.f32 %v2858, %v2908
        %v2918 = vmul.f32 %v2861, %v2908
        %v2919 = vmul.f32 %v2866, %v2908
        %v2920 = vmul.f32 %v2869, %v2908
        %v2921 = vmul.f32 %v2874, %v2908
        %v2922 = vmul.f32 %v2877, %v2908
        %v2923 = vmul.f32 %v2882, %v2908
        %v2924 = vmul.f32 %v2885, %v2908
        %v2925 = vmul.f32 %v2890, %v2908
        %v2926 = vmul.f32 %v2893, %v2908
        %v2927 = vmul.f32 %v2898, %v2908
        %v2928 = vmul.f32 %v2901, %v2908
        %v2929 = vld [vmem:[%s3 + $0x1] sm:$0x1]
        %v2930 = vlaneseq
        %v2931 = vshrl.u32 %v2930, 7
        %v2932 = vsub.s32 0, %v2931
        %v2933 = vrot.slane %v2929, %v2932
        %v2934 = vadd.f32 %v2909, %v2933
        %v2935 = vadd.f32 %v2910, %v2933
        %v2936 = vadd.f32 %v2911, %v2933
        %v2937 = vadd.f32 %v2912, %v2933
        %v2938 = vadd.f32 %v2913, %v2933
        %v2939 = vadd.f32 %v2914, %v2933
        %v2940 = vadd.f32 %v2915, %v2933
        %v2941 = vadd.f32 %v2916, %v2933
        %v2942 = vadd.f32 %v2917, %v2933
        %v2943 = vadd.f32 %v2918, %v2933
        %v2944 = vadd.f32 %v2919, %v2933
        %v2945 = vadd.f32 %v2920, %v2933
        %v2946 = vadd.f32 %v2921, %v2933
        %v2947 = vadd.f32 %v2922, %v2933
        %v2948 = vadd.f32 %v2923, %v2933
        %v2949 = vadd.f32 %v2924, %v2933
        %v2950 = vadd.f32 %v2925, %v2933
        %v2951 = vadd.f32 %v2926, %v2933
        %v2952 = vadd.f32 %v2927, %v2933
        %v2953 = vadd.f32 %v2928, %v2933
        %v2954 = vmax.f32 %v2934, 0.0
        %v2955 = vmax.f32 %v2935, 0.0
        %v2956 = vmax.f32 %v2936, 0.0
        %v2957 = vmax.f32 %v2937, 0.0
        %v2958 = vmax.f32 %v2938, 0.0
        %v2959 = vmax.f32 %v2939, 0.0
        %v2960 = vmax.f32 %v2940, 0.0
        %v2961 = vmax.f32 %v2941, 0.0
        %v2962 = vmax.f32 %v2942, 0.0
        %v2963 = vmax.f32 %v2943, 0.0
        %v2964 = vmax.f32 %v2944, 0.0
        %v2965 = vmax.f32 %v2945, 0.0
        %v2966 = vmax.f32 %v2946, 0.0
        %v2967 = vmax.f32 %v2947, 0.0
        %v2968 = vmax.f32 %v2948, 0.0
        %v2969 = vmax.f32 %v2949, 0.0
        %v2970 = vmax.f32 %v2950, 0.0
        %v2971 = vmax.f32 %v2951, 0.0
        %v2972 = vmax.f32 %v2952, 0.0
        %v2973 = vmax.f32 %v2953, 0.0
        %s2974 = ssub.s32 %s224, 1
        %v2975 = vstv %s2974
        %v2976 = vadd.s32 %v2975, 1
        %v2977 = vadd.s32 %v2975, 2
        %v2978 = vadd.s32 %v2975, 3
        %v2979 = vadd.s32 %v2975, 4
        %v2980 = vadd.s32 %v2975, 5
        %v2981 = vadd.s32 %v2975, 6
        %v2982 = vadd.s32 %v2975, 7
        %v2983 = vadd.s32 %v2975, 8
        %v2984 = vadd.s32 %v2975, 9
        %vm2985 = vcmp.ge.s32.totalorder %v2975, 0
        %vm2986 = vcmp.ge.s32.totalorder %v2976, 0
        %vm2987 = vcmp.ge.s32.totalorder %v2977, 0
        %vm2988 = vcmp.ge.s32.totalorder %v2978, 0
        %vm2989 = vcmp.ge.s32.totalorder %v2979, 0
        %vm2990 = vcmp.ge.s32.totalorder %v2980, 0
        %vm2991 = vcmp.ge.s32.totalorder %v2981, 0
        %vm2992 = vcmp.ge.s32.totalorder %v2982, 0
        %vm2993 = vcmp.ge.s32.totalorder %v2983, 0
        %vm2994 = vcmp.ge.s32.totalorder %v2984, 0
        %vm2995 = vcmp.lt.s32.totalorder %v2975, 16
        %vm2996 = vcmp.lt.s32.totalorder %v2976, 16
        %vm2997 = vcmp.lt.s32.totalorder %v2977, 16
        %vm2998 = vcmp.lt.s32.totalorder %v2978, 16
        %vm2999 = vcmp.lt.s32.totalorder %v2979, 16
        %vm3000 = vcmp.lt.s32.totalorder %v2980, 16
        %vm3001 = vcmp.lt.s32.totalorder %v2981, 16
        %vm3002 = vcmp.lt.s32.totalorder %v2982, 16
        %vm3003 = vcmp.lt.s32.totalorder %v2983, 16
        %vm3004 = vcmp.lt.s32.totalorder %v2984, 16
        %vm3005 = vmand %vm2985, %vm2995
        %vm3006 = vmand %vm2986, %vm2996
        %vm3007 = vmand %vm2987, %vm2997
        %vm3008 = vmand %vm2988, %vm2998
        %vm3009 = vmand %vm2989, %vm2999
        %vm3010 = vmand %vm2990, %vm3000
        %vm3011 = vmand %vm2991, %vm3001
        %vm3012 = vmand %vm2992, %vm3002
        %vm3013 = vmand %vm2993, %vm3003
        %vm3014 = vmand %vm2994, %vm3004
        %v3015 = vsel %vm3005, 1, 0
        %v3016 = vsel %vm3006, 1, 0
        %v3017 = vsel %vm3007, 1, 0
        %v3018 = vsel %vm3008, 1, 0
        %v3019 = vsel %vm3009, 1, 0
        %v3020 = vsel %vm3010, 1, 0
        %v3021 = vsel %vm3011, 1, 0
        %v3022 = vsel %vm3012, 1, 0
        %v3023 = vsel %vm3013, 1, 0
        %v3024 = vsel %vm3014, 1, 0
        %vm3025 = vcmp.eq.s32.totalorder %v3015, 1
        %vm3026 = vcmp.eq.s32.totalorder %v3016, 1
        %vm3027 = vcmp.eq.s32.totalorder %v3017, 1
        %vm3028 = vcmp.eq.s32.totalorder %v3018, 1
        %vm3029 = vcmp.eq.s32.totalorder %v3019, 1
        %vm3030 = vcmp.eq.s32.totalorder %v3020, 1
        %vm3031 = vcmp.eq.s32.totalorder %v3021, 1
        %vm3032 = vcmp.eq.s32.totalorder %v3022, 1
        %vm3033 = vcmp.eq.s32.totalorder %v3023, 1
        %vm3034 = vcmp.eq.s32.totalorder %v3024, 1
        %v3035 = vsel %vm3025, %v2954, 0.0
        %v3036 = vsel %vm3025, %v2955, 0.0
        %v3037 = vsel %vm3026, %v2956, 0.0
        %v3038 = vsel %vm3026, %v2957, 0.0
        %v3039 = vsel %vm3027, %v2958, 0.0
        %v3040 = vsel %vm3027, %v2959, 0.0
        %v3041 = vsel %vm3028, %v2960, 0.0
        %v3042 = vsel %vm3028, %v2961, 0.0
        %v3043 = vsel %vm3029, %v2962, 0.0
        %v3044 = vsel %vm3029, %v2963, 0.0
        %v3045 = vsel %vm3030, %v2964, 0.0
        %v3046 = vsel %vm3030, %v2965, 0.0
        %v3047 = vsel %vm3031, %v2966, 0.0
        %v3048 = vsel %vm3031, %v2967, 0.0
        %v3049 = vsel %vm3032, %v2968, 0.0
        %v3050 = vsel %vm3032, %v2969, 0.0
        %v3051 = vsel %vm3033, %v2970, 0.0
        %v3052 = vsel %vm3033, %v2971, 0.0
        %v3053 = vsel %vm3034, %v2972, 0.0
        %v3054 = vsel %vm3034, %v2973, 0.0
        %vm3055 = vcmask 1040384
        %vm3056 = vsmask.f32 256
        %vm3057 = vmand %vm3055, %vm3056
        %v3058 = vld [vmem:[#allocation2] sm:$0x1]
        %v3059 = vsel %vm3057, 0, %v3058
        %3060 = vst [vmem:[#allocation2] sm:$0x1] %v3059
        %v3061 = vld [vmem:[#allocation2 + $0xc] sm:$0x1]
        %v3062 = vsel %vm3057, 0, %v3061
        %3063 = vst [vmem:[#allocation2 + $0xc] sm:$0x1] %v3062
        %v3064 = vld [vmem:[#allocation2 + $0x18] sm:$0x1]
        %v3065 = vsel %vm3057, 0, %v3064
        %3066 = vst [vmem:[#allocation2 + $0x18] sm:$0x1] %v3065
        %v3067 = vld [vmem:[#allocation2 + $0x24] sm:$0x1]
        %v3068 = vsel %vm3057, 0, %v3067
        %3069 = vst [vmem:[#allocation2 + $0x24] sm:$0x1] %v3068
        %v3070 = vld [vmem:[#allocation2 + $0x30] sm:$0x1]
        %v3071 = vsel %vm3057, 0, %v3070
        %3072 = vst [vmem:[#allocation2 + $0x30] sm:$0x1] %v3071
        %v3073 = vld [vmem:[#allocation2 + $0x3c] sm:$0x1]
        %v3074 = vsel %vm3057, 0, %v3073
        %3075 = vst [vmem:[#allocation2 + $0x3c] sm:$0x1] %v3074
        %v3076 = vld [vmem:[#allocation2 + $0x48] sm:$0x1]
        %v3077 = vsel %vm3057, 0, %v3076
        %3078 = vst [vmem:[#allocation2 + $0x48] sm:$0x1] %v3077
        %v3079 = vld [vmem:[#allocation2 + $0x54] sm:$0x1]
        %v3080 = vsel %vm3057, 0, %v3079
        %3081 = vst [vmem:[#allocation2 + $0x54] sm:$0x1] %v3080
        %v3082 = vld [vmem:[#allocation2 + $0x60] sm:$0x1]
        %v3083 = vsel %vm3057, 0, %v3082
        %3084 = vst [vmem:[#allocation2 + $0x60] sm:$0x1] %v3083
        %v3085 = vld [vmem:[#allocation2 + $0x6c] sm:$0x1]
        %v3086 = vsel %vm3057, 0, %v3085
        %3087 = vst [vmem:[#allocation2 + $0x6c] sm:$0x1] %v3086
        %vm3088 = vsmask.f32 7938
        %vm3089 = vmand %vm3055, %vm3088
        %v3090 = vld [vmem:[#allocation2 + $0x8] sm:$0x1]
        %v3091 = vsel %vm3089, 0, %v3090
        %3092 = vst [vmem:[#allocation2 + $0x8] sm:$0x1] %v3091
        %v3093 = vld [vmem:[#allocation2 + $0x14] sm:$0x1]
        %v3094 = vsel %vm3089, 0, %v3093
        %3095 = vst [vmem:[#allocation2 + $0x14] sm:$0x1] %v3094
        %v3096 = vld [vmem:[#allocation2 + $0x20] sm:$0x1]
        %v3097 = vsel %vm3089, 0, %v3096
        %3098 = vst [vmem:[#allocation2 + $0x20] sm:$0x1] %v3097
        %v3099 = vld [vmem:[#allocation2 + $0x2c] sm:$0x1]
        %v3100 = vsel %vm3089, 0, %v3099
        %3101 = vst [vmem:[#allocation2 + $0x2c] sm:$0x1] %v3100
        %v3102 = vld [vmem:[#allocation2 + $0x38] sm:$0x1]
        %v3103 = vsel %vm3089, 0, %v3102
        %3104 = vst [vmem:[#allocation2 + $0x38] sm:$0x1] %v3103
        %v3105 = vld [vmem:[#allocation2 + $0x44] sm:$0x1]
        %v3106 = vsel %vm3089, 0, %v3105
        %3107 = vst [vmem:[#allocation2 + $0x44] sm:$0x1] %v3106
        %v3108 = vld [vmem:[#allocation2 + $0x50] sm:$0x1]
        %v3109 = vsel %vm3089, 0, %v3108
        %3110 = vst [vmem:[#allocation2 + $0x50] sm:$0x1] %v3109
        %v3111 = vld [vmem:[#allocation2 + $0x5c] sm:$0x1]
        %v3112 = vsel %vm3089, 0, %v3111
        %3113 = vst [vmem:[#allocation2 + $0x5c] sm:$0x1] %v3112
        %v3114 = vld [vmem:[#allocation2 + $0x68] sm:$0x1]
        %v3115 = vsel %vm3089, 0, %v3114
        %3116 = vst [vmem:[#allocation2 + $0x68] sm:$0x1] %v3115
        %v3117 = vld [vmem:[#allocation2 + $0x74] sm:$0x1]
        %v3118 = vsel %vm3089, 0, %v3117
        %3119 = vst [vmem:[#allocation2 + $0x74] sm:$0x1] %v3118
        %v3120 = vpack.c.bf16 %v3036, %v3035
        %v3121 = vpack.c.bf16 %v3038, %v3037
        %v3122 = vpack.c.bf16 %v3040, %v3039
        %v3123 = vpack.c.bf16 %v3042, %v3041
        %v3124 = vpack.c.bf16 %v3044, %v3043
        %v3125 = vpack.c.bf16 %v3046, %v3045
        %v3126 = vpack.c.bf16 %v3048, %v3047
        %v3127 = vpack.c.bf16 %v3050, %v3049
        %v3128 = vpack.c.bf16 %v3052, %v3051
        %v3129 = vpack.c.bf16 %v3054, %v3053
        %v3140 = vunpack.c.l.b16 %v3120
        %v3141 = vunpack.c.h.b16 %v3120
        %v3142 = vunpack.c.l.b16 %v3121
        %v3143 = vunpack.c.h.b16 %v3121
        %v3144 = vunpack.c.l.b16 %v3122
        %v3145 = vunpack.c.h.b16 %v3122
        %v3146 = vunpack.c.l.b16 %v3123
        %v3147 = vunpack.c.h.b16 %v3123
        %v3148 = vunpack.c.l.b16 %v3124
        %v3149 = vunpack.c.h.b16 %v3124
        %v3150 = vunpack.c.l.b16 %v3125
        %v3151 = vunpack.c.h.b16 %v3125
        %v3152 = vunpack.c.l.b16 %v3126
        %v3153 = vunpack.c.h.b16 %v3126
        %v3154 = vunpack.c.l.b16 %v3127
        %v3155 = vunpack.c.h.b16 %v3127
        %v3156 = vunpack.c.l.b16 %v3128
        %v3157 = vunpack.c.h.b16 %v3128
        %v3158 = vunpack.c.l.b16 %v3129
        %v3159 = vunpack.c.h.b16 %v3129
        %v3160 = vpack.c.b16 %v3140, %v3140
        %v3161 = vpack.c.b16 %v3141, %v3141
        %v3162 = vpack.c.b16 %v3142, %v3142
        %v3163 = vpack.c.b16 %v3143, %v3143
        %v3164 = vpack.c.b16 %v3144, %v3144
        %v3165 = vpack.c.b16 %v3145, %v3145
        %v3166 = vpack.c.b16 %v3146, %v3146
        %v3167 = vpack.c.b16 %v3147, %v3147
        %v3168 = vpack.c.b16 %v3148, %v3148
        %v3169 = vpack.c.b16 %v3149, %v3149
        %v3170 = vpack.c.b16 %v3150, %v3150
        %v3171 = vpack.c.b16 %v3151, %v3151
        %v3172 = vpack.c.b16 %v3152, %v3152
        %v3173 = vpack.c.b16 %v3153, %v3153
        %v3174 = vpack.c.b16 %v3154, %v3154
        %v3175 = vpack.c.b16 %v3155, %v3155
        %v3176 = vpack.c.b16 %v3156, %v3156
        %v3177 = vpack.c.b16 %v3157, %v3157
        %v3178 = vpack.c.b16 %v3158, %v3158
        %v3179 = vpack.c.b16 %v3159, %v3159
        %vm3180 = vsmask.f32 4368
        %vm3181 = vmor %vm3056, %vm3180
        %v3183 = vshrl.u32 %v3160, 16
        %v3185 = vrot.slane %v3183, 7
        %v3186 = vshll.u32 %v3160, 16
        %v3188 = vor.u32 %v3185, %v3186
        %v3189 = vrot.slane %v3185, 4
        %v3191 = vshrl.u32 %v3161, 16
        %v3193 = vrot.slane %v3191, 7
        %v3194 = vshll.u32 %v3161, 16
        %v3196 = vor.u32 %v3193, %v3194
        %v3197 = vsel %vm3181, %v3189, %v3196
        %v3198 = vrot.slane %v3193, 4
        %v3200 = vshrl.u32 %v3162, 16
        %v3202 = vrot.slane %v3200, 7
        %v3203 = vshll.u32 %v3162, 16
        %v3205 = vor.u32 %v3202, %v3203
        %v3206 = vrot.slane %v3202, 4
        %v3208 = vshrl.u32 %v3163, 16
        %v3210 = vrot.slane %v3208, 7
        %v3211 = vshll.u32 %v3163, 16
        %v3213 = vor.u32 %v3210, %v3211
        %v3214 = vsel %vm3181, %v3206, %v3213
        %v3215 = vrot.slane %v3210, 4
        %v3217 = vshrl.u32 %v3164, 16
        %v3219 = vrot.slane %v3217, 7
        %v3220 = vshll.u32 %v3164, 16
        %v3222 = vor.u32 %v3219, %v3220
        %v3223 = vrot.slane %v3219, 4
        %v3225 = vshrl.u32 %v3165, 16
        %v3227 = vrot.slane %v3225, 7
        %v3228 = vshll.u32 %v3165, 16
        %v3230 = vor.u32 %v3227, %v3228
        %v3231 = vsel %vm3181, %v3223, %v3230
        %v3232 = vrot.slane %v3227, 4
        %v3234 = vshrl.u32 %v3166, 16
        %v3236 = vrot.slane %v3234, 7
        %v3237 = vshll.u32 %v3166, 16
        %v3239 = vor.u32 %v3236, %v3237
        %v3240 = vrot.slane %v3236, 4
        %v3242 = vshrl.u32 %v3167, 16
        %v3244 = vrot.slane %v3242, 7
        %v3245 = vshll.u32 %v3167, 16
        %v3247 = vor.u32 %v3244, %v3245
        %v3248 = vsel %vm3181, %v3240, %v3247
        %v3249 = vrot.slane %v3244, 4
        %v3251 = vshrl.u32 %v3168, 16
        %v3253 = vrot.slane %v3251, 7
        %v3254 = vshll.u32 %v3168, 16
        %v3256 = vor.u32 %v3253, %v3254
        %v3257 = vrot.slane %v3253, 4
        %v3259 = vshrl.u32 %v3169, 16
        %v3261 = vrot.slane %v3259, 7
        %v3262 = vshll.u32 %v3169, 16
        %v3264 = vor.u32 %v3261, %v3262
        %v3265 = vsel %vm3181, %v3257, %v3264
        %v3266 = vrot.slane %v3261, 4
        %v3268 = vshrl.u32 %v3170, 16
        %v3270 = vrot.slane %v3268, 7
        %v3271 = vshll.u32 %v3170, 16
        %v3273 = vor.u32 %v3270, %v3271
        %v3274 = vrot.slane %v3270, 4
        %v3276 = vshrl.u32 %v3171, 16
        %v3278 = vrot.slane %v3276, 7
        %v3279 = vshll.u32 %v3171, 16
        %v3281 = vor.u32 %v3278, %v3279
        %v3282 = vsel %vm3181, %v3274, %v3281
        %v3283 = vrot.slane %v3278, 4
        %v3285 = vshrl.u32 %v3172, 16
        %v3287 = vrot.slane %v3285, 7
        %v3288 = vshll.u32 %v3172, 16
        %v3290 = vor.u32 %v3287, %v3288
        %v3291 = vrot.slane %v3287, 4
        %v3293 = vshrl.u32 %v3173, 16
        %v3295 = vrot.slane %v3293, 7
        %v3296 = vshll.u32 %v3173, 16
        %v3298 = vor.u32 %v3295, %v3296
        %v3299 = vsel %vm3181, %v3291, %v3298
        %v3300 = vrot.slane %v3295, 4
        %v3302 = vshrl.u32 %v3174, 16
        %v3304 = vrot.slane %v3302, 7
        %v3305 = vshll.u32 %v3174, 16
        %v3307 = vor.u32 %v3304, %v3305
        %v3308 = vrot.slane %v3304, 4
        %v3310 = vshrl.u32 %v3175, 16
        %v3312 = vrot.slane %v3310, 7
        %v3313 = vshll.u32 %v3175, 16
        %v3315 = vor.u32 %v3312, %v3313
        %v3316 = vsel %vm3181, %v3308, %v3315
        %v3317 = vrot.slane %v3312, 4
        %v3319 = vshrl.u32 %v3176, 16
        %v3321 = vrot.slane %v3319, 7
        %v3322 = vshll.u32 %v3176, 16
        %v3324 = vor.u32 %v3321, %v3322
        %v3325 = vrot.slane %v3321, 4
        %v3327 = vshrl.u32 %v3177, 16
        %v3329 = vrot.slane %v3327, 7
        %v3330 = vshll.u32 %v3177, 16
        %v3332 = vor.u32 %v3329, %v3330
        %v3333 = vsel %vm3181, %v3325, %v3332
        %v3334 = vrot.slane %v3329, 4
        %v3336 = vshrl.u32 %v3178, 16
        %v3338 = vrot.slane %v3336, 7
        %v3339 = vshll.u32 %v3178, 16
        %v3341 = vor.u32 %v3338, %v3339
        %v3342 = vrot.slane %v3338, 4
        %v3344 = vshrl.u32 %v3179, 16
        %v3346 = vrot.slane %v3344, 7
        %v3347 = vshll.u32 %v3179, 16
        %v3349 = vor.u32 %v3346, %v3347
        %v3350 = vsel %vm3181, %v3342, %v3349
        %v3351 = vrot.slane %v3346, 4
        %vm3382 = vcmask 1043456
        %vm3383 = vmand %vm3382, %vm3088
        %v3384 = vld [vmem:[#allocation2] sm:$0xf]
        %v3385 = vsel %vm3383, %v3188, %v3384
        %3386 = vst [vmem:[#allocation2] sm:$0xf] %v3385
        %3387 = vst [vmem:[#allocation2 + $0x4] sm:$0xf] %v3197
        %v3388 = vld [vmem:[#allocation2 + $0x8] sm:$0x1]
        %v3389 = vsel %vm3057, %v3198, %v3388
        %3390 = vst [vmem:[#allocation2 + $0x8] sm:$0x1] %v3389
        %v3391 = vld [vmem:[#allocation2 + $0xc] sm:$0xf]
        %v3392 = vsel %vm3383, %v3205, %v3391
        %3393 = vst [vmem:[#allocation2 + $0xc] sm:$0xf] %v3392
        %3394 = vst [vmem:[#allocation2 + $0x10] sm:$0xf] %v3214
        %v3395 = vld [vmem:[#allocation2 + $0x14] sm:$0x1]
        %v3396 = vsel %vm3057, %v3215, %v3395
        %3397 = vst [vmem:[#allocation2 + $0x14] sm:$0x1] %v3396
        %v3398 = vld [vmem:[#allocation2 + $0x18] sm:$0xf]
        %v3399 = vsel %vm3383, %v3222, %v3398
        %3400 = vst [vmem:[#allocation2 + $0x18] sm:$0xf] %v3399
        %3401 = vst [vmem:[#allocation2 + $0x1c] sm:$0xf] %v3231
        %v3402 = vld [vmem:[#allocation2 + $0x20] sm:$0x1]
        %v3403 = vsel %vm3057, %v3232, %v3402
        %3404 = vst [vmem:[#allocation2 + $0x20] sm:$0x1] %v3403
        %v3405 = vld [vmem:[#allocation2 + $0x24] sm:$0xf]
        %v3406 = vsel %vm3383, %v3239, %v3405
        %3407 = vst [vmem:[#allocation2 + $0x24] sm:$0xf] %v3406
        %3408 = vst [vmem:[#allocation2 + $0x28] sm:$0xf] %v3248
        %v3409 = vld [vmem:[#allocation2 + $0x2c] sm:$0x1]
        %v3410 = vsel %vm3057, %v3249, %v3409
        %3411 = vst [vmem:[#allocation2 + $0x2c] sm:$0x1] %v3410
        %v3412 = vld [vmem:[#allocation2 + $0x30] sm:$0xf]
        %v3413 = vsel %vm3383, %v3256, %v3412
        %3414 = vst [vmem:[#allocation2 + $0x30] sm:$0xf] %v3413
        %3415 = vst [vmem:[#allocation2 + $0x34] sm:$0xf] %v3265
        %v3416 = vld [vmem:[#allocation2 + $0x38] sm:$0x1]
        %v3417 = vsel %vm3057, %v3266, %v3416
        %3418 = vst [vmem:[#allocation2 + $0x38] sm:$0x1] %v3417
        %v3419 = vld [vmem:[#allocation2 + $0x3c] sm:$0xf]
        %v3420 = vsel %vm3383, %v3273, %v3419
        %3421 = vst [vmem:[#allocation2 + $0x3c] sm:$0xf] %v3420
        %3422 = vst [vmem:[#allocation2 + $0x40] sm:$0xf] %v3282
        %v3423 = vld [vmem:[#allocation2 + $0x44] sm:$0x1]
        %v3424 = vsel %vm3057, %v3283, %v3423
        %3425 = vst [vmem:[#allocation2 + $0x44] sm:$0x1] %v3424
        %v3426 = vld [vmem:[#allocation2 + $0x48] sm:$0xf]
        %v3427 = vsel %vm3383, %v3290, %v3426
        %3428 = vst [vmem:[#allocation2 + $0x48] sm:$0xf] %v3427
        %3429 = vst [vmem:[#allocation2 + $0x4c] sm:$0xf] %v3299
        %v3430 = vld [vmem:[#allocation2 + $0x50] sm:$0x1]
        %v3431 = vsel %vm3057, %v3300, %v3430
        %3432 = vst [vmem:[#allocation2 + $0x50] sm:$0x1] %v3431
        %v3433 = vld [vmem:[#allocation2 + $0x54] sm:$0xf]
        %v3434 = vsel %vm3383, %v3307, %v3433
        %3435 = vst [vmem:[#allocation2 + $0x54] sm:$0xf] %v3434
        %3436 = vst [vmem:[#allocation2 + $0x58] sm:$0xf] %v3316
        %v3437 = vld [vmem:[#allocation2 + $0x5c] sm:$0x1]
        %v3438 = vsel %vm3057, %v3317, %v3437
        %3439 = vst [vmem:[#allocation2 + $0x5c] sm:$0x1] %v3438
        %v3440 = vld [vmem:[#allocation2 + $0x60] sm:$0xf]
        %v3441 = vsel %vm3383, %v3324, %v3440
        %3442 = vst [vmem:[#allocation2 + $0x60] sm:$0xf] %v3441
        %3443 = vst [vmem:[#allocation2 + $0x64] sm:$0xf] %v3333
        %v3444 = vld [vmem:[#allocation2 + $0x68] sm:$0x1]
        %v3445 = vsel %vm3057, %v3334, %v3444
        %3446 = vst [vmem:[#allocation2 + $0x68] sm:$0x1] %v3445
        %v3447 = vld [vmem:[#allocation2 + $0x6c] sm:$0xf]
        %v3448 = vsel %vm3383, %v3341, %v3447
        %3449 = vst [vmem:[#allocation2 + $0x6c] sm:$0xf] %v3448
        %3450 = vst [vmem:[#allocation2 + $0x70] sm:$0xf] %v3350
        %v3451 = vld [vmem:[#allocation2 + $0x74] sm:$0x1]
        %v3452 = vsel %vm3057, %v3351, %v3451
        %3453 = vst [vmem:[#allocation2 + $0x74] sm:$0x1] %v3452
        %v3454 = vld [vmem:[#allocation2] sm:$0xf]
        %v3455 = vld [vmem:[#allocation2 + $0x4] sm:$0xf]
        %v3456 = vld [vmem:[#allocation2 + $0xc] sm:$0xf]
        %v3457 = vld [vmem:[#allocation2 + $0x10] sm:$0xf]
        %v3458 = vld [vmem:[#allocation2 + $0x18] sm:$0xf]
        %v3459 = vld [vmem:[#allocation2 + $0x1c] sm:$0xf]
        %v3460 = vld [vmem:[#allocation2 + $0x24] sm:$0xf]
        %v3461 = vld [vmem:[#allocation2 + $0x28] sm:$0xf]
        %v3462 = vld [vmem:[#allocation2 + $0x30] sm:$0xf]
        %v3463 = vld [vmem:[#allocation2 + $0x34] sm:$0xf]
        %v3464 = vld [vmem:[#allocation2 + $0x3c] sm:$0xf]
        %v3465 = vld [vmem:[#allocation2 + $0x40] sm:$0xf]
        %v3466 = vld [vmem:[#allocation2 + $0x48] sm:$0xf]
        %v3467 = vld [vmem:[#allocation2 + $0x4c] sm:$0xf]
        %v3468 = vld [vmem:[#allocation2 + $0x54] sm:$0xf]
        %v3469 = vld [vmem:[#allocation2 + $0x58] sm:$0xf]
        %v3470 = vld [vmem:[#allocation2 + $0x8] sm:$0x1]
        %v3471 = vld [vmem:[#allocation2 + $0x14] sm:$0x1]
        %v3472 = vld [vmem:[#allocation2 + $0x20] sm:$0x1]
        %v3473 = vld [vmem:[#allocation2 + $0x2c] sm:$0x1]
        %v3474 = vld [vmem:[#allocation2 + $0x38] sm:$0x1]
        %v3475 = vld [vmem:[#allocation2 + $0x44] sm:$0x1]
        %v3476 = vld [vmem:[#allocation2 + $0x50] sm:$0x1]
        %v3477 = vld [vmem:[#allocation2 + $0x5c] sm:$0x1]
        %v3479 = vshrl.u32 %v3454, 16
        %v3481 = vrot.slane %v3479, 4
        %v3482 = vshll.u32 %v3454, 16
        %v3484 = vrot.slane %v3482, 5
        %v3485 = vor.u32 %v3481, %v3484
        %v3486 = vrot.slane %v3485, 4
        %v3488 = vshll.u32 %v3455, 16
        %v3490 = vrot.slane %v3488, 5
        %v3491 = vsel %vm257, %v3486, %v3490
        %v3492 = vshrl.u32 %v3455, 16
        %v3494 = vrot.slane %v3492, 4
        %v3495 = vor.u32 %v3494, %v3490
        %v3496 = vrot.slane %v3495, 4
        %v3498 = vshll.u32 %v3470, 16
        %v3500 = vrot.slane %v3498, 5
        %v3501 = vsel %vm257, %v3496, %v3500
        %v3503 = vshrl.u32 %v3456, 16
        %v3505 = vrot.slane %v3503, 4
        %v3506 = vshll.u32 %v3456, 16
        %v3508 = vrot.slane %v3506, 5
        %v3509 = vor.u32 %v3505, %v3508
        %v3510 = vrot.slane %v3509, 4
        %v3512 = vshll.u32 %v3457, 16
        %v3514 = vrot.slane %v3512, 5
        %v3515 = vsel %vm257, %v3510, %v3514
        %v3516 = vshrl.u32 %v3457, 16
        %v3518 = vrot.slane %v3516, 4
        %v3519 = vor.u32 %v3518, %v3514
        %v3520 = vrot.slane %v3519, 4
        %v3522 = vshll.u32 %v3471, 16
        %v3524 = vrot.slane %v3522, 5
        %v3525 = vsel %vm257, %v3520, %v3524
        %v3527 = vshrl.u32 %v3458, 16
        %v3529 = vrot.slane %v3527, 4
        %v3530 = vshll.u32 %v3458, 16
        %v3532 = vrot.slane %v3530, 5
        %v3533 = vor.u32 %v3529, %v3532
        %v3534 = vrot.slane %v3533, 4
        %v3536 = vshll.u32 %v3459, 16
        %v3538 = vrot.slane %v3536, 5
        %v3539 = vsel %vm257, %v3534, %v3538
        %v3540 = vshrl.u32 %v3459, 16
        %v3542 = vrot.slane %v3540, 4
        %v3543 = vor.u32 %v3542, %v3538
        %v3544 = vrot.slane %v3543, 4
        %v3546 = vshll.u32 %v3472, 16
        %v3548 = vrot.slane %v3546, 5
        %v3549 = vsel %vm257, %v3544, %v3548
        %v3551 = vshrl.u32 %v3460, 16
        %v3553 = vrot.slane %v3551, 4
        %v3554 = vshll.u32 %v3460, 16
        %v3556 = vrot.slane %v3554, 5
        %v3557 = vor.u32 %v3553, %v3556
        %v3558 = vrot.slane %v3557, 4
        %v3560 = vshll.u32 %v3461, 16
        %v3562 = vrot.slane %v3560, 5
        %v3563 = vsel %vm257, %v3558, %v3562
        %v3564 = vshrl.u32 %v3461, 16
        %v3566 = vrot.slane %v3564, 4
        %v3567 = vor.u32 %v3566, %v3562
        %v3568 = vrot.slane %v3567, 4
        %v3570 = vshll.u32 %v3473, 16
        %v3572 = vrot.slane %v3570, 5
        %v3573 = vsel %vm257, %v3568, %v3572
        %v3575 = vshrl.u32 %v3462, 16
        %v3577 = vrot.slane %v3575, 4
        %v3578 = vshll.u32 %v3462, 16
        %v3580 = vrot.slane %v3578, 5
        %v3581 = vor.u32 %v3577, %v3580
        %v3582 = vrot.slane %v3581, 4
        %v3584 = vshll.u32 %v3463, 16
        %v3586 = vrot.slane %v3584, 5
        %v3587 = vsel %vm257, %v3582, %v3586
        %v3588 = vshrl.u32 %v3463, 16
        %v3590 = vrot.slane %v3588, 4
        %v3591 = vor.u32 %v3590, %v3586
        %v3592 = vrot.slane %v3591, 4
        %v3594 = vshll.u32 %v3474, 16
        %v3596 = vrot.slane %v3594, 5
        %v3597 = vsel %vm257, %v3592, %v3596
        %v3599 = vshrl.u32 %v3464, 16
        %v3601 = vrot.slane %v3599, 4
        %v3602 = vshll.u32 %v3464, 16
        %v3604 = vrot.slane %v3602, 5
        %v3605 = vor.u32 %v3601, %v3604
        %v3606 = vrot.slane %v3605, 4
        %v3608 = vshll.u32 %v3465, 16
        %v3610 = vrot.slane %v3608, 5
        %v3611 = vsel %vm257, %v3606, %v3610
        %v3612 = vshrl.u32 %v3465, 16
        %v3614 = vrot.slane %v3612, 4
        %v3615 = vor.u32 %v3614, %v3610
        %v3616 = vrot.slane %v3615, 4
        %v3618 = vshll.u32 %v3475, 16
        %v3620 = vrot.slane %v3618, 5
        %v3621 = vsel %vm257, %v3616, %v3620
        %v3623 = vshrl.u32 %v3466, 16
        %v3625 = vrot.slane %v3623, 4
        %v3626 = vshll.u32 %v3466, 16
        %v3628 = vrot.slane %v3626, 5
        %v3629 = vor.u32 %v3625, %v3628
        %v3630 = vrot.slane %v3629, 4
        %v3632 = vshll.u32 %v3467, 16
        %v3634 = vrot.slane %v3632, 5
        %v3635 = vsel %vm257, %v3630, %v3634
        %v3636 = vshrl.u32 %v3467, 16
        %v3638 = vrot.slane %v3636, 4
        %v3639 = vor.u32 %v3638, %v3634
        %v3640 = vrot.slane %v3639, 4
        %v3642 = vshll.u32 %v3476, 16
        %v3644 = vrot.slane %v3642, 5
        %v3645 = vsel %vm257, %v3640, %v3644
        %v3647 = vshrl.u32 %v3468, 16
        %v3649 = vrot.slane %v3647, 4
        %v3650 = vshll.u32 %v3468, 16
        %v3652 = vrot.slane %v3650, 5
        %v3653 = vor.u32 %v3649, %v3652
        %v3654 = vrot.slane %v3653, 4
        %v3656 = vshll.u32 %v3469, 16
        %v3658 = vrot.slane %v3656, 5
        %v3659 = vsel %vm257, %v3654, %v3658
        %v3660 = vshrl.u32 %v3469, 16
        %v3662 = vrot.slane %v3660, 4
        %v3663 = vor.u32 %v3662, %v3658
        %v3664 = vrot.slane %v3663, 4
        %v3666 = vshll.u32 %v3477, 16
        %v3668 = vrot.slane %v3666, 5
        %v3669 = vsel %vm257, %v3664, %v3668
        %v3670 = vld [vmem:[#allocation2] sm:$0xe]
        %v3671 = vld [vmem:[#allocation2 + $0xc] sm:$0xe]
        %v3672 = vld [vmem:[#allocation2 + $0x18] sm:$0xe]
        %v3673 = vld [vmem:[#allocation2 + $0x24] sm:$0xe]
        %v3674 = vld [vmem:[#allocation2 + $0x30] sm:$0xe]
        %v3675 = vld [vmem:[#allocation2 + $0x3c] sm:$0xe]
        %v3676 = vld [vmem:[#allocation2 + $0x48] sm:$0xe]
        %v3677 = vld [vmem:[#allocation2 + $0x54] sm:$0xe]
        %v3702 = vrot.slane %v3670, 5
        %v3703 = vrot.slane %v3702, 4
        %v3704 = vrot.slane %v3455, 5
        %v3705 = vsel %vm540, %v3703, %v3704
        %v3706 = vrot.slane %v3704, 4
        %v3707 = vrot.slane %v3470, 5
        %v3708 = vsel %vm540, %v3706, %v3707
        %v3709 = vrot.slane %v3671, 5
        %v3710 = vrot.slane %v3709, 4
        %v3711 = vrot.slane %v3457, 5
        %v3712 = vsel %vm540, %v3710, %v3711
        %v3713 = vrot.slane %v3711, 4
        %v3714 = vrot.slane %v3471, 5
        %v3715 = vsel %vm540, %v3713, %v3714
        %v3716 = vrot.slane %v3672, 5
        %v3717 = vrot.slane %v3716, 4
        %v3718 = vrot.slane %v3459, 5
        %v3719 = vsel %vm540, %v3717, %v3718
        %v3720 = vrot.slane %v3718, 4
        %v3721 = vrot.slane %v3472, 5
        %v3722 = vsel %vm540, %v3720, %v3721
        %v3723 = vrot.slane %v3673, 5
        %v3724 = vrot.slane %v3723, 4
        %v3725 = vrot.slane %v3461, 5
        %v3726 = vsel %vm540, %v3724, %v3725
        %v3727 = vrot.slane %v3725, 4
        %v3728 = vrot.slane %v3473, 5
        %v3729 = vsel %vm540, %v3727, %v3728
        %v3730 = vrot.slane %v3674, 5
        %v3731 = vrot.slane %v3730, 4
        %v3732 = vrot.slane %v3463, 5
        %v3733 = vsel %vm540, %v3731, %v3732
        %v3734 = vrot.slane %v3732, 4
        %v3735 = vrot.slane %v3474, 5
        %v3736 = vsel %vm540, %v3734, %v3735
        %v3737 = vrot.slane %v3675, 5
        %v3738 = vrot.slane %v3737, 4
        %v3739 = vrot.slane %v3465, 5
        %v3740 = vsel %vm540, %v3738, %v3739
        %v3741 = vrot.slane %v3739, 4
        %v3742 = vrot.slane %v3475, 5
        %v3743 = vsel %vm540, %v3741, %v3742
        %v3744 = vrot.slane %v3676, 5
        %v3745 = vrot.slane %v3744, 4
        %v3746 = vrot.slane %v3467, 5
        %v3747 = vsel %vm540, %v3745, %v3746
        %v3748 = vrot.slane %v3746, 4
        %v3749 = vrot.slane %v3476, 5
        %v3750 = vsel %vm540, %v3748, %v3749
        %v3751 = vrot.slane %v3677, 5
        %v3752 = vrot.slane %v3751, 4
        %v3753 = vrot.slane %v3469, 5
        %v3754 = vsel %vm540, %v3752, %v3753
        %v3755 = vrot.slane %v3753, 4
        %v3756 = vrot.slane %v3477, 5
        %v3757 = vsel %vm540, %v3755, %v3756
        %s3758 = scalar_lea.vmem [#allocation2], 12
        %v3759 = vld [vmem:[%s3758] sm:$0xf]
        %v3760 = vld [vmem:[%s3758 + $0x4] sm:$0xf]
        %v3761 = vld [vmem:[%s3758 + $0xc] sm:$0xf]
        %v3762 = vld [vmem:[%s3758 + $0x10] sm:$0xf]
        %v3763 = vld [vmem:[%s3758 + $0x18] sm:$0xf]
        %v3764 = vld [vmem:[%s3758 + $0x1c] sm:$0xf]
        %v3765 = vld [vmem:[%s3758 + $0x24] sm:$0xf]
        %v3766 = vld [vmem:[%s3758 + $0x28] sm:$0xf]
        %v3767 = vld [vmem:[%s3758 + $0x30] sm:$0xf]
        %v3768 = vld [vmem:[%s3758 + $0x34] sm:$0xf]
        %v3769 = vld [vmem:[%s3758 + $0x3c] sm:$0xf]
        %v3770 = vld [vmem:[%s3758 + $0x40] sm:$0xf]
        %v3771 = vld [vmem:[%s3758 + $0x48] sm:$0xf]
        %v3772 = vld [vmem:[%s3758 + $0x4c] sm:$0xf]
        %v3773 = vld [vmem:[%s3758 + $0x54] sm:$0xf]
        %v3774 = vld [vmem:[%s3758 + $0x58] sm:$0xf]
        %v3775 = vld [vmem:[%s3758 + $0x8] sm:$0x1]
        %v3776 = vld [vmem:[%s3758 + $0x14] sm:$0x1]
        %v3777 = vld [vmem:[%s3758 + $0x20] sm:$0x1]
        %v3778 = vld [vmem:[%s3758 + $0x2c] sm:$0x1]
        %v3779 = vld [vmem:[%s3758 + $0x38] sm:$0x1]
        %v3780 = vld [vmem:[%s3758 + $0x44] sm:$0x1]
        %v3781 = vld [vmem:[%s3758 + $0x50] sm:$0x1]
        %v3782 = vld [vmem:[%s3758 + $0x5c] sm:$0x1]
        %v3784 = vshrl.u32 %v3759, 16
        %v3786 = vrot.slane %v3784, 4
        %v3787 = vshll.u32 %v3759, 16
        %v3789 = vrot.slane %v3787, 5
        %v3790 = vor.u32 %v3786, %v3789
        %v3791 = vrot.slane %v3790, 4
        %v3793 = vshll.u32 %v3760, 16
        %v3795 = vrot.slane %v3793, 5
        %v3796 = vsel %vm257, %v3791, %v3795
        %v3797 = vshrl.u32 %v3760, 16
        %v3799 = vrot.slane %v3797, 4
        %v3800 = vor.u32 %v3799, %v3795
        %v3801 = vrot.slane %v3800, 4
        %v3803 = vshll.u32 %v3775, 16
        %v3805 = vrot.slane %v3803, 5
        %v3806 = vsel %vm257, %v3801, %v3805
        %v3808 = vshrl.u32 %v3761, 16
        %v3810 = vrot.slane %v3808, 4
        %v3811 = vshll.u32 %v3761, 16
        %v3813 = vrot.slane %v3811, 5
        %v3814 = vor.u32 %v3810, %v3813
        %v3815 = vrot.slane %v3814, 4
        %v3817 = vshll.u32 %v3762, 16
        %v3819 = vrot.slane %v3817, 5
        %v3820 = vsel %vm257, %v3815, %v3819
        %v3821 = vshrl.u32 %v3762, 16
        %v3823 = vrot.slane %v3821, 4
        %v3824 = vor.u32 %v3823, %v3819
        %v3825 = vrot.slane %v3824, 4
        %v3827 = vshll.u32 %v3776, 16
        %v3829 = vrot.slane %v3827, 5
        %v3830 = vsel %vm257, %v3825, %v3829
        %v3832 = vshrl.u32 %v3763, 16
        %v3834 = vrot.slane %v3832, 4
        %v3835 = vshll.u32 %v3763, 16
        %v3837 = vrot.slane %v3835, 5
        %v3838 = vor.u32 %v3834, %v3837
        %v3839 = vrot.slane %v3838, 4
        %v3841 = vshll.u32 %v3764, 16
        %v3843 = vrot.slane %v3841, 5
        %v3844 = vsel %vm257, %v3839, %v3843
        %v3845 = vshrl.u32 %v3764, 16
        %v3847 = vrot.slane %v3845, 4
        %v3848 = vor.u32 %v3847, %v3843
        %v3849 = vrot.slane %v3848, 4
        %v3851 = vshll.u32 %v3777, 16
        %v3853 = vrot.slane %v3851, 5
        %v3854 = vsel %vm257, %v3849, %v3853
        %v3856 = vshrl.u32 %v3765, 16
        %v3858 = vrot.slane %v3856, 4
        %v3859 = vshll.u32 %v3765, 16
        %v3861 = vrot.slane %v3859, 5
        %v3862 = vor.u32 %v3858, %v3861
        %v3863 = vrot.slane %v3862, 4
        %v3865 = vshll.u32 %v3766, 16
        %v3867 = vrot.slane %v3865, 5
        %v3868 = vsel %vm257, %v3863, %v3867
        %v3869 = vshrl.u32 %v3766, 16
        %v3871 = vrot.slane %v3869, 4
        %v3872 = vor.u32 %v3871, %v3867
        %v3873 = vrot.slane %v3872, 4
        %v3875 = vshll.u32 %v3778, 16
        %v3877 = vrot.slane %v3875, 5
        %v3878 = vsel %vm257, %v3873, %v3877
        %v3880 = vshrl.u32 %v3767, 16
        %v3882 = vrot.slane %v3880, 4
        %v3883 = vshll.u32 %v3767, 16
        %v3885 = vrot.slane %v3883, 5
        %v3886 = vor.u32 %v3882, %v3885
        %v3887 = vrot.slane %v3886, 4
        %v3889 = vshll.u32 %v3768, 16
        %v3891 = vrot.slane %v3889, 5
        %v3892 = vsel %vm257, %v3887, %v3891
        %v3893 = vshrl.u32 %v3768, 16
        %v3895 = vrot.slane %v3893, 4
        %v3896 = vor.u32 %v3895, %v3891
        %v3897 = vrot.slane %v3896, 4
        %v3899 = vshll.u32 %v3779, 16
        %v3901 = vrot.slane %v3899, 5
        %v3902 = vsel %vm257, %v3897, %v3901
        %v3904 = vshrl.u32 %v3769, 16
        %v3906 = vrot.slane %v3904, 4
        %v3907 = vshll.u32 %v3769, 16
        %v3909 = vrot.slane %v3907, 5
        %v3910 = vor.u32 %v3906, %v3909
        %v3911 = vrot.slane %v3910, 4
        %v3913 = vshll.u32 %v3770, 16
        %v3915 = vrot.slane %v3913, 5
        %v3916 = vsel %vm257, %v3911, %v3915
        %v3917 = vshrl.u32 %v3770, 16
        %v3919 = vrot.slane %v3917, 4
        %v3920 = vor.u32 %v3919, %v3915
        %v3921 = vrot.slane %v3920, 4
        %v3923 = vshll.u32 %v3780, 16
        %v3925 = vrot.slane %v3923, 5
        %v3926 = vsel %vm257, %v3921, %v3925
        %v3928 = vshrl.u32 %v3771, 16
        %v3930 = vrot.slane %v3928, 4
        %v3931 = vshll.u32 %v3771, 16
        %v3933 = vrot.slane %v3931, 5
        %v3934 = vor.u32 %v3930, %v3933
        %v3935 = vrot.slane %v3934, 4
        %v3937 = vshll.u32 %v3772, 16
        %v3939 = vrot.slane %v3937, 5
        %v3940 = vsel %vm257, %v3935, %v3939
        %v3941 = vshrl.u32 %v3772, 16
        %v3943 = vrot.slane %v3941, 4
        %v3944 = vor.u32 %v3943, %v3939
        %v3945 = vrot.slane %v3944, 4
        %v3947 = vshll.u32 %v3781, 16
        %v3949 = vrot.slane %v3947, 5
        %v3950 = vsel %vm257, %v3945, %v3949
        %v3952 = vshrl.u32 %v3773, 16
        %v3954 = vrot.slane %v3952, 4
        %v3955 = vshll.u32 %v3773, 16
        %v3957 = vrot.slane %v3955, 5
        %v3958 = vor.u32 %v3954, %v3957
        %v3959 = vrot.slane %v3958, 4
        %v3961 = vshll.u32 %v3774, 16
        %v3963 = vrot.slane %v3961, 5
        %v3964 = vsel %vm257, %v3959, %v3963
        %v3965 = vshrl.u32 %v3774, 16
        %v3967 = vrot.slane %v3965, 4
        %v3968 = vor.u32 %v3967, %v3963
        %v3969 = vrot.slane %v3968, 4
        %v3971 = vshll.u32 %v3782, 16
        %v3973 = vrot.slane %v3971, 5
        %v3974 = vsel %vm257, %v3969, %v3973
        %v3975 = vld [vmem:[%s3758] sm:$0xe]
        %v3976 = vld [vmem:[%s3758 + $0xc] sm:$0xe]
        %v3977 = vld [vmem:[%s3758 + $0x18] sm:$0xe]
        %v3978 = vld [vmem:[%s3758 + $0x24] sm:$0xe]
        %v3979 = vld [vmem:[%s3758 + $0x30] sm:$0xe]
        %v3980 = vld [vmem:[%s3758 + $0x3c] sm:$0xe]
        %v3981 = vld [vmem:[%s3758 + $0x48] sm:$0xe]
        %v3982 = vld [vmem:[%s3758 + $0x54] sm:$0xe]
        %v4007 = vrot.slane %v3975, 5
        %v4008 = vrot.slane %v4007, 4
        %v4009 = vrot.slane %v3760, 5
        %v4010 = vsel %vm540, %v4008, %v4009
        %v4011 = vrot.slane %v4009, 4
        %v4012 = vrot.slane %v3775, 5
        %v4013 = vsel %vm540, %v4011, %v4012
        %v4014 = vrot.slane %v3976, 5
        %v4015 = vrot.slane %v4014, 4
        %v4016 = vrot.slane %v3762, 5
        %v4017 = vsel %vm540, %v4015, %v4016
        %v4018 = vrot.slane %v4016, 4
        %v4019 = vrot.slane %v3776, 5
        %v4020 = vsel %vm540, %v4018, %v4019
        %v4021 = vrot.slane %v3977, 5
        %v4022 = vrot.slane %v4021, 4
        %v4023 = vrot.slane %v3764, 5
        %v4024 = vsel %vm540, %v4022, %v4023
        %v4025 = vrot.slane %v4023, 4
        %v4026 = vrot.slane %v3777, 5
        %v4027 = vsel %vm540, %v4025, %v4026
        %v4028 = vrot.slane %v3978, 5
        %v4029 = vrot.slane %v4028, 4
        %v4030 = vrot.slane %v3766, 5
        %v4031 = vsel %vm540, %v4029, %v4030
        %v4032 = vrot.slane %v4030, 4
        %v4033 = vrot.slane %v3778, 5
        %v4034 = vsel %vm540, %v4032, %v4033
        %v4035 = vrot.slane %v3979, 5
        %v4036 = vrot.slane %v4035, 4
        %v4037 = vrot.slane %v3768, 5
        %v4038 = vsel %vm540, %v4036, %v4037
        %v4039 = vrot.slane %v4037, 4
        %v4040 = vrot.slane %v3779, 5
        %v4041 = vsel %vm540, %v4039, %v4040
        %v4042 = vrot.slane %v3980, 5
        %v4043 = vrot.slane %v4042, 4
        %v4044 = vrot.slane %v3770, 5
        %v4045 = vsel %vm540, %v4043, %v4044
        %v4046 = vrot.slane %v4044, 4
        %v4047 = vrot.slane %v3780, 5
        %v4048 = vsel %vm540, %v4046, %v4047
        %v4049 = vrot.slane %v3981, 5
        %v4050 = vrot.slane %v4049, 4
        %v4051 = vrot.slane %v3772, 5
        %v4052 = vsel %vm540, %v4050, %v4051
        %v4053 = vrot.slane %v4051, 4
        %v4054 = vrot.slane %v3781, 5
        %v4055 = vsel %vm540, %v4053, %v4054
        %v4056 = vrot.slane %v3982, 5
        %v4057 = vrot.slane %v4056, 4
        %v4058 = vrot.slane %v3774, 5
        %v4059 = vsel %vm540, %v4057, %v4058
        %v4060 = vrot.slane %v4058, 4
        %v4061 = vrot.slane %v3782, 5
        %v4062 = vsel %vm540, %v4060, %v4061
        %s4063 = scalar_lea.vmem [#allocation2], 24
        %v4064 = vld [vmem:[%s4063] sm:$0xf]
        %v4065 = vld [vmem:[%s4063 + $0x4] sm:$0xf]
        %v4066 = vld [vmem:[%s4063 + $0xc] sm:$0xf]
        %v4067 = vld [vmem:[%s4063 + $0x10] sm:$0xf]
        %v4068 = vld [vmem:[%s4063 + $0x18] sm:$0xf]
        %v4069 = vld [vmem:[%s4063 + $0x1c] sm:$0xf]
        %v4070 = vld [vmem:[%s4063 + $0x24] sm:$0xf]
        %v4071 = vld [vmem:[%s4063 + $0x28] sm:$0xf]
        %v4072 = vld [vmem:[%s4063 + $0x30] sm:$0xf]
        %v4073 = vld [vmem:[%s4063 + $0x34] sm:$0xf]
        %v4074 = vld [vmem:[%s4063 + $0x3c] sm:$0xf]
        %v4075 = vld [vmem:[%s4063 + $0x40] sm:$0xf]
        %v4076 = vld [vmem:[%s4063 + $0x48] sm:$0xf]
        %v4077 = vld [vmem:[%s4063 + $0x4c] sm:$0xf]
        %v4078 = vld [vmem:[%s4063 + $0x54] sm:$0xf]
        %v4079 = vld [vmem:[%s4063 + $0x58] sm:$0xf]
        %v4080 = vld [vmem:[%s4063 + $0x8] sm:$0x1]
        %v4081 = vld [vmem:[%s4063 + $0x14] sm:$0x1]
        %v4082 = vld [vmem:[%s4063 + $0x20] sm:$0x1]
        %v4083 = vld [vmem:[%s4063 + $0x2c] sm:$0x1]
        %v4084 = vld [vmem:[%s4063 + $0x38] sm:$0x1]
        %v4085 = vld [vmem:[%s4063 + $0x44] sm:$0x1]
        %v4086 = vld [vmem:[%s4063 + $0x50] sm:$0x1]
        %v4087 = vld [vmem:[%s4063 + $0x5c] sm:$0x1]
        %v4089 = vshrl.u32 %v4064, 16
        %v4091 = vrot.slane %v4089, 4
        %v4092 = vshll.u32 %v4064, 16
        %v4094 = vrot.slane %v4092, 5
        %v4095 = vor.u32 %v4091, %v4094
        %v4096 = vrot.slane %v4095, 4
        %v4098 = vshll.u32 %v4065, 16
        %v4100 = vrot.slane %v4098, 5
        %v4101 = vsel %vm257, %v4096, %v4100
        %v4102 = vshrl.u32 %v4065, 16
        %v4104 = vrot.slane %v4102, 4
        %v4105 = vor.u32 %v4104, %v4100
        %v4106 = vrot.slane %v4105, 4
        %v4108 = vshll.u32 %v4080, 16
        %v4110 = vrot.slane %v4108, 5
        %v4111 = vsel %vm257, %v4106, %v4110
        %v4113 = vshrl.u32 %v4066, 16
        %v4115 = vrot.slane %v4113, 4
        %v4116 = vshll.u32 %v4066, 16
        %v4118 = vrot.slane %v4116, 5
        %v4119 = vor.u32 %v4115, %v4118
        %v4120 = vrot.slane %v4119, 4
        %v4122 = vshll.u32 %v4067, 16
        %v4124 = vrot.slane %v4122, 5
        %v4125 = vsel %vm257, %v4120, %v4124
        %v4126 = vshrl.u32 %v4067, 16
        %v4128 = vrot.slane %v4126, 4
        %v4129 = vor.u32 %v4128, %v4124
        %v4130 = vrot.slane %v4129, 4
        %v4132 = vshll.u32 %v4081, 16
        %v4134 = vrot.slane %v4132, 5
        %v4135 = vsel %vm257, %v4130, %v4134
        %v4137 = vshrl.u32 %v4068, 16
        %v4139 = vrot.slane %v4137, 4
        %v4140 = vshll.u32 %v4068, 16
        %v4142 = vrot.slane %v4140, 5
        %v4143 = vor.u32 %v4139, %v4142
        %v4144 = vrot.slane %v4143, 4
        %v4146 = vshll.u32 %v4069, 16
        %v4148 = vrot.slane %v4146, 5
        %v4149 = vsel %vm257, %v4144, %v4148
        %v4150 = vshrl.u32 %v4069, 16
        %v4152 = vrot.slane %v4150, 4
        %v4153 = vor.u32 %v4152, %v4148
        %v4154 = vrot.slane %v4153, 4
        %v4156 = vshll.u32 %v4082, 16
        %v4158 = vrot.slane %v4156, 5
        %v4159 = vsel %vm257, %v4154, %v4158
        %v4161 = vshrl.u32 %v4070, 16
        %v4163 = vrot.slane %v4161, 4
        %v4164 = vshll.u32 %v4070, 16
        %v4166 = vrot.slane %v4164, 5
        %v4167 = vor.u32 %v4163, %v4166
        %v4168 = vrot.slane %v4167, 4
        %v4170 = vshll.u32 %v4071, 16
        %v4172 = vrot.slane %v4170, 5
        %v4173 = vsel %vm257, %v4168, %v4172
        %v4174 = vshrl.u32 %v4071, 16
        %v4176 = vrot.slane %v4174, 4
        %v4177 = vor.u32 %v4176, %v4172
        %v4178 = vrot.slane %v4177, 4
        %v4180 = vshll.u32 %v4083, 16
        %v4182 = vrot.slane %v4180, 5
        %v4183 = vsel %vm257, %v4178, %v4182
        %v4185 = vshrl.u32 %v4072, 16
        %v4187 = vrot.slane %v4185, 4
        %v4188 = vshll.u32 %v4072, 16
        %v4190 = vrot.slane %v4188, 5
        %v4191 = vor.u32 %v4187, %v4190
        %v4192 = vrot.slane %v4191, 4
        %v4194 = vshll.u32 %v4073, 16
        %v4196 = vrot.slane %v4194, 5
        %v4197 = vsel %vm257, %v4192, %v4196
        %v4198 = vshrl.u32 %v4073, 16
        %v4200 = vrot.slane %v4198, 4
        %v4201 = vor.u32 %v4200, %v4196
        %v4202 = vrot.slane %v4201, 4
        %v4204 = vshll.u32 %v4084, 16
        %v4206 = vrot.slane %v4204, 5
        %v4207 = vsel %vm257, %v4202, %v4206
        %v4209 = vshrl.u32 %v4074, 16
        %v4211 = vrot.slane %v4209, 4
        %v4212 = vshll.u32 %v4074, 16
        %v4214 = vrot.slane %v4212, 5
        %v4215 = vor.u32 %v4211, %v4214
        %v4216 = vrot.slane %v4215, 4
        %v4218 = vshll.u32 %v4075, 16
        %v4220 = vrot.slane %v4218, 5
        %v4221 = vsel %vm257, %v4216, %v4220
        %v4222 = vshrl.u32 %v4075, 16
        %v4224 = vrot.slane %v4222, 4
        %v4225 = vor.u32 %v4224, %v4220
        %v4226 = vrot.slane %v4225, 4
        %v4228 = vshll.u32 %v4085, 16
        %v4230 = vrot.slane %v4228, 5
        %v4231 = vsel %vm257, %v4226, %v4230
        %v4233 = vshrl.u32 %v4076, 16
        %v4235 = vrot.slane %v4233, 4
        %v4236 = vshll.u32 %v4076, 16
        %v4238 = vrot.slane %v4236, 5
        %v4239 = vor.u32 %v4235, %v4238
        %v4240 = vrot.slane %v4239, 4
        %v4242 = vshll.u32 %v4077, 16
        %v4244 = vrot.slane %v4242, 5
        %v4245 = vsel %vm257, %v4240, %v4244
        %v4246 = vshrl.u32 %v4077, 16
        %v4248 = vrot.slane %v4246, 4
        %v4249 = vor.u32 %v4248, %v4244
        %v4250 = vrot.slane %v4249, 4
        %v4252 = vshll.u32 %v4086, 16
        %v4254 = vrot.slane %v4252, 5
        %v4255 = vsel %vm257, %v4250, %v4254
        %v4257 = vshrl.u32 %v4078, 16
        %v4259 = vrot.slane %v4257, 4
        %v4260 = vshll.u32 %v4078, 16
        %v4262 = vrot.slane %v4260, 5
        %v4263 = vor.u32 %v4259, %v4262
        %v4264 = vrot.slane %v4263, 4
        %v4266 = vshll.u32 %v4079, 16
        %v4268 = vrot.slane %v4266, 5
        %v4269 = vsel %vm257, %v4264, %v4268
        %v4270 = vshrl.u32 %v4079, 16
        %v4272 = vrot.slane %v4270, 4
        %v4273 = vor.u32 %v4272, %v4268
        %v4274 = vrot.slane %v4273, 4
        %v4276 = vshll.u32 %v4087, 16
        %v4278 = vrot.slane %v4276, 5
        %v4279 = vsel %vm257, %v4274, %v4278
        %v4280 = vld [vmem:[%s4063] sm:$0xe]
        %v4281 = vld [vmem:[%s4063 + $0xc] sm:$0xe]
        %v4282 = vld [vmem:[%s4063 + $0x18] sm:$0xe]
        %v4283 = vld [vmem:[%s4063 + $0x24] sm:$0xe]
        %v4284 = vld [vmem:[%s4063 + $0x30] sm:$0xe]
        %v4285 = vld [vmem:[%s4063 + $0x3c] sm:$0xe]
        %v4286 = vld [vmem:[%s4063 + $0x48] sm:$0xe]
        %v4287 = vld [vmem:[%s4063 + $0x54] sm:$0xe]
        %v4312 = vrot.slane %v4280, 5
        %v4313 = vrot.slane %v4312, 4
        %v4314 = vrot.slane %v4065, 5
        %v4315 = vsel %vm540, %v4313, %v4314
        %v4316 = vrot.slane %v4314, 4
        %v4317 = vrot.slane %v4080, 5
        %v4318 = vsel %vm540, %v4316, %v4317
        %v4319 = vrot.slane %v4281, 5
        %v4320 = vrot.slane %v4319, 4
        %v4321 = vrot.slane %v4067, 5
        %v4322 = vsel %vm540, %v4320, %v4321
        %v4323 = vrot.slane %v4321, 4
        %v4324 = vrot.slane %v4081, 5
        %v4325 = vsel %vm540, %v4323, %v4324
        %v4326 = vrot.slane %v4282, 5
        %v4327 = vrot.slane %v4326, 4
        %v4328 = vrot.slane %v4069, 5
        %v4329 = vsel %vm540, %v4327, %v4328
        %v4330 = vrot.slane %v4328, 4
        %v4331 = vrot.slane %v4082, 5
        %v4332 = vsel %vm540, %v4330, %v4331
        %v4333 = vrot.slane %v4283, 5
        %v4334 = vrot.slane %v4333, 4
        %v4335 = vrot.slane %v4071, 5
        %v4336 = vsel %vm540, %v4334, %v4335
        %v4337 = vrot.slane %v4335, 4
        %v4338 = vrot.slane %v4083, 5
        %v4339 = vsel %vm540, %v4337, %v4338
        %v4340 = vrot.slane %v4284, 5
        %v4341 = vrot.slane %v4340, 4
        %v4342 = vrot.slane %v4073, 5
        %v4343 = vsel %vm540, %v4341, %v4342
        %v4344 = vrot.slane %v4342, 4
        %v4345 = vrot.slane %v4084, 5
        %v4346 = vsel %vm540, %v4344, %v4345
        %v4347 = vrot.slane %v4285, 5
        %v4348 = vrot.slane %v4347, 4
        %v4349 = vrot.slane %v4075, 5
        %v4350 = vsel %vm540, %v4348, %v4349
        %v4351 = vrot.slane %v4349, 4
        %v4352 = vrot.slane %v4085, 5
        %v4353 = vsel %vm540, %v4351, %v4352
        %v4354 = vrot.slane %v4286, 5
        %v4355 = vrot.slane %v4354, 4
        %v4356 = vrot.slane %v4077, 5
        %v4357 = vsel %vm540, %v4355, %v4356
        %v4358 = vrot.slane %v4356, 4
        %v4359 = vrot.slane %v4086, 5
        %v4360 = vsel %vm540, %v4358, %v4359
        %v4361 = vrot.slane %v4287, 5
        %v4362 = vrot.slane %v4361, 4
        %v4363 = vrot.slane %v4079, 5
        %v4364 = vsel %vm540, %v4362, %v4363
        %v4365 = vrot.slane %v4363, 4
        %v4366 = vrot.slane %v4087, 5
        %v4367 = vsel %vm540, %v4365, %v4366
        %v4376 = vunpack.c.l.b16 %v3454
        %v4377 = vunpack.c.l.b16 %v3455
        %v4378 = vunpack.c.l.b16 %v3456
        %v4379 = vunpack.c.l.b16 %v3457
        %v4380 = vunpack.c.l.b16 %v3458
        %v4381 = vunpack.c.l.b16 %v3459
        %v4382 = vunpack.c.l.b16 %v3460
        %v4383 = vunpack.c.l.b16 %v3461
        %v4384 = vunpack.c.l.b16 %v3462
        %v4385 = vunpack.c.l.b16 %v3463
        %v4386 = vunpack.c.l.b16 %v3464
        %v4387 = vunpack.c.l.b16 %v3465
        %v4388 = vunpack.c.l.b16 %v3466
        %v4389 = vunpack.c.l.b16 %v3467
        %v4390 = vunpack.c.l.b16 %v3468
        %v4391 = vunpack.c.l.b16 %v3469
        %v4392 = vpack.c.b16 %v4377, %v4376
        %v4393 = vpack.c.b16 %v4379, %v4378
        %v4394 = vpack.c.b16 %v4381, %v4380
        %v4395 = vpack.c.b16 %v4383, %v4382
        %v4396 = vpack.c.b16 %v4385, %v4384
        %v4397 = vpack.c.b16 %v4387, %v4386
        %v4398 = vpack.c.b16 %v4389, %v4388
        %v4399 = vpack.c.b16 %v4391, %v4390
        %v4408 = vunpack.c.l.b16 %v3491
        %v4409 = vunpack.c.l.b16 %v3501
        %v4410 = vunpack.c.l.b16 %v3515
        %v4411 = vunpack.c.l.b16 %v3525
        %v4412 = vunpack.c.l.b16 %v3539
        %v4413 = vunpack.c.l.b16 %v3549
        %v4414 = vunpack.c.l.b16 %v3563
        %v4415 = vunpack.c.l.b16 %v3573
        %v4416 = vunpack.c.l.b16 %v3587
        %v4417 = vunpack.c.l.b16 %v3597
        %v4418 = vunpack.c.l.b16 %v3611
        %v4419 = vunpack.c.l.b16 %v3621
        %v4420 = vunpack.c.l.b16 %v3635
        %v4421 = vunpack.c.l.b16 %v3645
        %v4422 = vunpack.c.l.b16 %v3659
        %v4423 = vunpack.c.l.b16 %v3669
        %v4424 = vpack.c.b16 %v4409, %v4408
        %v4425 = vpack.c.b16 %v4411, %v4410
        %v4426 = vpack.c.b16 %v4413, %v4412
        %v4427 = vpack.c.b16 %v4415, %v4414
        %v4428 = vpack.c.b16 %v4417, %v4416
        %v4429 = vpack.c.b16 %v4419, %v4418
        %v4430 = vpack.c.b16 %v4421, %v4420
        %v4431 = vpack.c.b16 %v4423, %v4422
        %v4440 = vunpack.c.l.b16 %v3705
        %v4441 = vunpack.c.l.b16 %v3708
        %v4442 = vunpack.c.l.b16 %v3712
        %v4443 = vunpack.c.l.b16 %v3715
        %v4444 = vunpack.c.l.b16 %v3719
        %v4445 = vunpack.c.l.b16 %v3722
        %v4446 = vunpack.c.l.b16 %v3726
        %v4447 = vunpack.c.l.b16 %v3729
        %v4448 = vunpack.c.l.b16 %v3733
        %v4449 = vunpack.c.l.b16 %v3736
        %v4450 = vunpack.c.l.b16 %v3740
        %v4451 = vunpack.c.l.b16 %v3743
        %v4452 = vunpack.c.l.b16 %v3747
        %v4453 = vunpack.c.l.b16 %v3750
        %v4454 = vunpack.c.l.b16 %v3754
        %v4455 = vunpack.c.l.b16 %v3757
        %v4456 = vpack.c.b16 %v4441, %v4440
        %v4457 = vpack.c.b16 %v4443, %v4442
        %v4458 = vpack.c.b16 %v4445, %v4444
        %v4459 = vpack.c.b16 %v4447, %v4446
        %v4460 = vpack.c.b16 %v4449, %v4448
        %v4461 = vpack.c.b16 %v4451, %v4450
        %v4462 = vpack.c.b16 %v4453, %v4452
        %v4463 = vpack.c.b16 %v4455, %v4454
        %v4480 = vunpack.c.l.b16 %v3759
        %v4481 = vunpack.c.l.b16 %v3760
        %v4482 = vunpack.c.l.b16 %v3761
        %v4483 = vunpack.c.l.b16 %v3762
        %v4484 = vunpack.c.l.b16 %v3763
        %v4485 = vunpack.c.l.b16 %v3764
        %v4486 = vunpack.c.l.b16 %v3765
        %v4487 = vunpack.c.l.b16 %v3766
        %v4488 = vunpack.c.l.b16 %v3767
        %v4489 = vunpack.c.l.b16 %v3768
        %v4490 = vunpack.c.l.b16 %v3769
        %v4491 = vunpack.c.l.b16 %v3770
        %v4492 = vunpack.c.l.b16 %v3771
        %v4493 = vunpack.c.l.b16 %v3772
        %v4494 = vunpack.c.l.b16 %v3773
        %v4495 = vunpack.c.l.b16 %v3774
        %v4496 = vpack.c.b16 %v4481, %v4480
        %v4497 = vpack.c.b16 %v4483, %v4482
        %v4498 = vpack.c.b16 %v4485, %v4484
        %v4499 = vpack.c.b16 %v4487, %v4486
        %v4500 = vpack.c.b16 %v4489, %v4488
        %v4501 = vpack.c.b16 %v4491, %v4490
        %v4502 = vpack.c.b16 %v4493, %v4492
        %v4503 = vpack.c.b16 %v4495, %v4494
        %v4512 = vunpack.c.l.b16 %v3796
        %v4513 = vunpack.c.l.b16 %v3806
        %v4514 = vunpack.c.l.b16 %v3820
        %v4515 = vunpack.c.l.b16 %v3830
        %v4516 = vunpack.c.l.b16 %v3844
        %v4517 = vunpack.c.l.b16 %v3854
        %v4518 = vunpack.c.l.b16 %v3868
        %v4519 = vunpack.c.l.b16 %v3878
        %v4520 = vunpack.c.l.b16 %v3892
        %v4521 = vunpack.c.l.b16 %v3902
        %v4522 = vunpack.c.l.b16 %v3916
        %v4523 = vunpack.c.l.b16 %v3926
        %v4524 = vunpack.c.l.b16 %v3940
        %v4525 = vunpack.c.l.b16 %v3950
        %v4526 = vunpack.c.l.b16 %v3964
        %v4527 = vunpack.c.l.b16 %v3974
        %v4528 = vpack.c.b16 %v4513, %v4512
        %v4529 = vpack.c.b16 %v4515, %v4514
        %v4530 = vpack.c.b16 %v4517, %v4516
        %v4531 = vpack.c.b16 %v4519, %v4518
        %v4532 = vpack.c.b16 %v4521, %v4520
        %v4533 = vpack.c.b16 %v4523, %v4522
        %v4534 = vpack.c.b16 %v4525, %v4524
        %v4535 = vpack.c.b16 %v4527, %v4526
        %v4544 = vunpack.c.l.b16 %v4010
        %v4545 = vunpack.c.l.b16 %v4013
        %v4546 = vunpack.c.l.b16 %v4017
        %v4547 = vunpack.c.l.b16 %v4020
        %v4548 = vunpack.c.l.b16 %v4024
        %v4549 = vunpack.c.l.b16 %v4027
        %v4550 = vunpack.c.l.b16 %v4031
        %v4551 = vunpack.c.l.b16 %v4034
        %v4552 = vunpack.c.l.b16 %v4038
        %v4553 = vunpack.c.l.b16 %v4041
        %v4554 = vunpack.c.l.b16 %v4045
        %v4555 = vunpack.c.l.b16 %v4048
        %v4556 = vunpack.c.l.b16 %v4052
        %v4557 = vunpack.c.l.b16 %v4055
        %v4558 = vunpack.c.l.b16 %v4059
        %v4559 = vunpack.c.l.b16 %v4062
        %v4560 = vpack.c.b16 %v4545, %v4544
        %v4561 = vpack.c.b16 %v4547, %v4546
        %v4562 = vpack.c.b16 %v4549, %v4548
        %v4563 = vpack.c.b16 %v4551, %v4550
        %v4564 = vpack.c.b16 %v4553, %v4552
        %v4565 = vpack.c.b16 %v4555, %v4554
        %v4566 = vpack.c.b16 %v4557, %v4556
        %v4567 = vpack.c.b16 %v4559, %v4558
        %v4584 = vunpack.c.l.b16 %v4064
        %v4585 = vunpack.c.l.b16 %v4065
        %v4586 = vunpack.c.l.b16 %v4066
        %v4587 = vunpack.c.l.b16 %v4067
        %v4588 = vunpack.c.l.b16 %v4068
        %v4589 = vunpack.c.l.b16 %v4069
        %v4590 = vunpack.c.l.b16 %v4070
        %v4591 = vunpack.c.l.b16 %v4071
        %v4592 = vunpack.c.l.b16 %v4072
        %v4593 = vunpack.c.l.b16 %v4073
        %v4594 = vunpack.c.l.b16 %v4074
        %v4595 = vunpack.c.l.b16 %v4075
        %v4596 = vunpack.c.l.b16 %v4076
        %v4597 = vunpack.c.l.b16 %v4077
        %v4598 = vunpack.c.l.b16 %v4078
        %v4599 = vunpack.c.l.b16 %v4079
        %v4600 = vpack.c.b16 %v4585, %v4584
        %v4601 = vpack.c.b16 %v4587, %v4586
        %v4602 = vpack.c.b16 %v4589, %v4588
        %v4603 = vpack.c.b16 %v4591, %v4590
        %v4604 = vpack.c.b16 %v4593, %v4592
        %v4605 = vpack.c.b16 %v4595, %v4594
        %v4606 = vpack.c.b16 %v4597, %v4596
        %v4607 = vpack.c.b16 %v4599, %v4598
        %v4616 = vunpack.c.l.b16 %v4101
        %v4617 = vunpack.c.l.b16 %v4111
        %v4618 = vunpack.c.l.b16 %v4125
        %v4619 = vunpack.c.l.b16 %v4135
        %v4620 = vunpack.c.l.b16 %v4149
        %v4621 = vunpack.c.l.b16 %v4159
        %v4622 = vunpack.c.l.b16 %v4173
        %v4623 = vunpack.c.l.b16 %v4183
        %v4624 = vunpack.c.l.b16 %v4197
        %v4625 = vunpack.c.l.b16 %v4207
        %v4626 = vunpack.c.l.b16 %v4221
        %v4627 = vunpack.c.l.b16 %v4231
        %v4628 = vunpack.c.l.b16 %v4245
        %v4629 = vunpack.c.l.b16 %v4255
        %v4630 = vunpack.c.l.b16 %v4269
        %v4631 = vunpack.c.l.b16 %v4279
        %v4632 = vpack.c.b16 %v4617, %v4616
        %v4633 = vpack.c.b16 %v4619, %v4618
        %v4634 = vpack.c.b16 %v4621, %v4620
        %v4635 = vpack.c.b16 %v4623, %v4622
        %v4636 = vpack.c.b16 %v4625, %v4624
        %v4637 = vpack.c.b16 %v4627, %v4626
        %v4638 = vpack.c.b16 %v4629, %v4628
        %v4639 = vpack.c.b16 %v4631, %v4630
        %v4648 = vunpack.c.l.b16 %v4315
        %v4649 = vunpack.c.l.b16 %v4318
        %v4650 = vunpack.c.l.b16 %v4322
        %v4651 = vunpack.c.l.b16 %v4325
        %v4652 = vunpack.c.l.b16 %v4329
        %v4653 = vunpack.c.l.b16 %v4332
        %v4654 = vunpack.c.l.b16 %v4336
        %v4655 = vunpack.c.l.b16 %v4339
        %v4656 = vunpack.c.l.b16 %v4343
        %v4657 = vunpack.c.l.b16 %v4346
        %v4658 = vunpack.c.l.b16 %v4350
        %v4659 = vunpack.c.l.b16 %v4353
        %v4660 = vunpack.c.l.b16 %v4357
        %v4661 = vunpack.c.l.b16 %v4360
        %v4662 = vunpack.c.l.b16 %v4364
        %v4663 = vunpack.c.l.b16 %v4367
        %v4664 = vpack.c.b16 %v4649, %v4648
        %v4665 = vpack.c.b16 %v4651, %v4650
        %v4666 = vpack.c.b16 %v4653, %v4652
        %v4667 = vpack.c.b16 %v4655, %v4654
        %v4668 = vpack.c.b16 %v4657, %v4656
        %v4669 = vpack.c.b16 %v4659, %v4658
        %v4670 = vpack.c.b16 %v4661, %v4660
        %v4671 = vpack.c.b16 %v4663, %v4662
        %v4680 = vld [vmem:[#allocation3] sm:$0xf]
        %v4681 = vld [vmem:[#allocation3 + $0x4] sm:$0xf]
        %v4682 = vld [vmem:[#allocation3 + $0x8] sm:$0xf]
        %v4683 = vld [vmem:[#allocation3 + $0xc] sm:$0xf]
        %v4684 = vld [vmem:[#allocation3 + $0x10] sm:$0xf]
        %v4685 = vld [vmem:[#allocation3 + $0x14] sm:$0xf]
        %v4686 = vld [vmem:[#allocation3 + $0x18] sm:$0xf]
        %v4687 = vld [vmem:[#allocation3 + $0x1c] sm:$0xf]
        %v4688 = vld [vmem:[#allocation3 + $0x20] sm:$0xf]
        %v4689 = vld [vmem:[#allocation3 + $0x24] sm:$0xf]
        %v4690 = vld [vmem:[#allocation3 + $0x28] sm:$0xf]
        %v4691 = vld [vmem:[#allocation3 + $0x2c] sm:$0xf]
        %v4692 = vld [vmem:[#allocation3 + $0x30] sm:$0xf]
        %v4693 = vld [vmem:[#allocation3 + $0x34] sm:$0xf]
        %v4694 = vld [vmem:[#allocation3 + $0x38] sm:$0xf]
        %v4695 = vld [vmem:[#allocation3 + $0x3c] sm:$0xf]
        %v4696 = vld [vmem:[#allocation3 + $0x40] sm:$0xf]
        %v4697 = vld [vmem:[#allocation3 + $0x44] sm:$0xf]
        %v4698 = vld [vmem:[#allocation3 + $0x48] sm:$0xf]
        %v4699 = vld [vmem:[#allocation3 + $0x4c] sm:$0xf]
        %v4700 = vld [vmem:[#allocation3 + $0x50] sm:$0xf]
        %v4701 = vld [vmem:[#allocation3 + $0x54] sm:$0xf]
        %v4702 = vld [vmem:[#allocation3 + $0x58] sm:$0xf]
        %v4703 = vld [vmem:[#allocation3 + $0x5c] sm:$0xf]
        %v4704 = vld [vmem:[#allocation3 + $0x60] sm:$0xf]
        %v4705 = vld [vmem:[#allocation3 + $0x64] sm:$0xf]
        %v4706 = vld [vmem:[#allocation3 + $0x68] sm:$0xf]
        %v4707 = vld [vmem:[#allocation3 + $0x6c] sm:$0xf]
        %v4708 = vld [vmem:[#allocation3 + $0x70] sm:$0xf]
        %v4709 = vld [vmem:[#allocation3 + $0x74] sm:$0xf]
        %v4710 = vld [vmem:[#allocation3 + $0x78] sm:$0xf]
        %v4711 = vld [vmem:[#allocation3 + $0x7c] sm:$0xf]
        %v4712 = vld [vmem:[#allocation3 + $0x80] sm:$0xf]
        %v4713 = vld [vmem:[#allocation3 + $0x84] sm:$0xf]
        %v4714 = vld [vmem:[#allocation3 + $0x88] sm:$0xf]
        %v4715 = vld [vmem:[#allocation3 + $0x8c] sm:$0xf]
        %v4716 = vld [vmem:[#allocation3 + $0x90] sm:$0xf]
        %v4717 = vld [vmem:[#allocation3 + $0x94] sm:$0xf]
        %v4718 = vld [vmem:[#allocation3 + $0x98] sm:$0xf]
        %v4719 = vld [vmem:[#allocation3 + $0x9c] sm:$0xf]
        %v4720 = vld [vmem:[#allocation3 + $0xa0] sm:$0xf]
        %v4721 = vld [vmem:[#allocation3 + $0xa4] sm:$0xf]
        %v4722 = vld [vmem:[#allocation3 + $0xa8] sm:$0xf]
        %v4723 = vld [vmem:[#allocation3 + $0xac] sm:$0xf]
        %v4724 = vld [vmem:[#allocation3 + $0xb0] sm:$0xf]
        %v4725 = vld [vmem:[#allocation3 + $0xb4] sm:$0xf]
        %v4726 = vld [vmem:[#allocation3 + $0xb8] sm:$0xf]
        %v4727 = vld [vmem:[#allocation3 + $0xbc] sm:$0xf]
        %v4728 = vld [vmem:[#allocation3 + $0xc0] sm:$0xf]
        %v4729 = vld [vmem:[#allocation3 + $0xc4] sm:$0xf]
        %v4730 = vld [vmem:[#allocation3 + $0xc8] sm:$0xf]
        %v4731 = vld [vmem:[#allocation3 + $0xcc] sm:$0xf]
        %v4732 = vld [vmem:[#allocation3 + $0xd0] sm:$0xf]
        %v4733 = vld [vmem:[#allocation3 + $0xd4] sm:$0xf]
        %v4734 = vld [vmem:[#allocation3 + $0xd8] sm:$0xf]
        %v4735 = vld [vmem:[#allocation3 + $0xdc] sm:$0xf]
        %v4736 = vld [vmem:[#allocation3 + $0xe0] sm:$0xf]
        %v4737 = vld [vmem:[#allocation3 + $0xe4] sm:$0xf]
        %v4738 = vld [vmem:[#allocation3 + $0xe8] sm:$0xf]
        %v4739 = vld [vmem:[#allocation3 + $0xec] sm:$0xf]
        %v4740 = vld [vmem:[#allocation3 + $0xf0] sm:$0xf]
        %v4741 = vld [vmem:[#allocation3 + $0xf4] sm:$0xf]
        %v4742 = vld [vmem:[#allocation3 + $0xf8] sm:$0xf]
        %v4743 = vld [vmem:[#allocation3 + $0xfc] sm:$0xf]
        %v4744 = vld [vmem:[#allocation3 + $0x100] sm:$0xf]
        %v4745 = vld [vmem:[#allocation3 + $0x104] sm:$0xf]
        %v4746 = vld [vmem:[#allocation3 + $0x108] sm:$0xf]
        %v4747 = vld [vmem:[#allocation3 + $0x10c] sm:$0xf]
        %v4748 = vld [vmem:[#allocation3 + $0x110] sm:$0xf]
        %v4749 = vld [vmem:[#allocation3 + $0x114] sm:$0xf]
        %v4750 = vld [vmem:[#allocation3 + $0x118] sm:$0xf]
        %v4751 = vld [vmem:[#allocation3 + $0x11c] sm:$0xf]
        %v4752 = vld [vmem:[#allocation3 + $0x120] sm:$0xf]
        %v4753 = vld [vmem:[#allocation3 + $0x124] sm:$0xf]
        %v4754 = vld [vmem:[#allocation3 + $0x128] sm:$0xf]
        %v4755 = vld [vmem:[#allocation3 + $0x12c] sm:$0xf]
        %v4756 = vld [vmem:[#allocation3 + $0x130] sm:$0xf]
        %v4757 = vld [vmem:[#allocation3 + $0x134] sm:$0xf]
        %v4758 = vld [vmem:[#allocation3 + $0x138] sm:$0xf]
        %v4759 = vld [vmem:[#allocation3 + $0x13c] sm:$0xf]
        %v4760 = vld [vmem:[#allocation3 + $0x140] sm:$0xf]
        %v4761 = vld [vmem:[#allocation3 + $0x144] sm:$0xf]
        %v4762 = vld [vmem:[#allocation3 + $0x148] sm:$0xf]
        %v4763 = vld [vmem:[#allocation3 + $0x14c] sm:$0xf]
        %v4764 = vld [vmem:[#allocation3 + $0x150] sm:$0xf]
        %v4765 = vld [vmem:[#allocation3 + $0x154] sm:$0xf]
        %v4766 = vld [vmem:[#allocation3 + $0x158] sm:$0xf]
        %v4767 = vld [vmem:[#allocation3 + $0x15c] sm:$0xf]
        %v4768 = vld [vmem:[#allocation3 + $0x160] sm:$0xf]
        %v4769 = vld [vmem:[#allocation3 + $0x164] sm:$0xf]
        %v4770 = vld [vmem:[#allocation3 + $0x168] sm:$0xf]
        %v4771 = vld [vmem:[#allocation3 + $0x16c] sm:$0xf]
        %v4772 = vld [vmem:[#allocation3 + $0x170] sm:$0xf]
        %v4773 = vld [vmem:[#allocation3 + $0x174] sm:$0xf]
        %v4774 = vld [vmem:[#allocation3 + $0x178] sm:$0xf]
        %v4775 = vld [vmem:[#allocation3 + $0x17c] sm:$0xf]
        %v4776 = vld [vmem:[#allocation3 + $0x180] sm:$0xf]
        %v4777 = vld [vmem:[#allocation3 + $0x184] sm:$0xf]
        %v4778 = vld [vmem:[#allocation3 + $0x188] sm:$0xf]
        %v4779 = vld [vmem:[#allocation3 + $0x18c] sm:$0xf]
        %v4780 = vld [vmem:[#allocation3 + $0x190] sm:$0xf]
        %v4781 = vld [vmem:[#allocation3 + $0x194] sm:$0xf]
        %v4782 = vld [vmem:[#allocation3 + $0x198] sm:$0xf]
        %v4783 = vld [vmem:[#allocation3 + $0x19c] sm:$0xf]
        %v4784 = vld [vmem:[#allocation3 + $0x1a0] sm:$0xf]
        %v4785 = vld [vmem:[#allocation3 + $0x1a4] sm:$0xf]
        %v4786 = vld [vmem:[#allocation3 + $0x1a8] sm:$0xf]
        %v4787 = vld [vmem:[#allocation3 + $0x1ac] sm:$0xf]
        %v4788 = vld [vmem:[#allocation3 + $0x1b0] sm:$0xf]
        %v4789 = vld [vmem:[#allocation3 + $0x1b4] sm:$0xf]
        %v4790 = vld [vmem:[#allocation3 + $0x1b8] sm:$0xf]
        %v4791 = vld [vmem:[#allocation3 + $0x1bc] sm:$0xf]
        %v4792 = vld [vmem:[#allocation3 + $0x1c0] sm:$0xf]
        %v4793 = vld [vmem:[#allocation3 + $0x1c4] sm:$0xf]
        %v4794 = vld [vmem:[#allocation3 + $0x1c8] sm:$0xf]
        %v4795 = vld [vmem:[#allocation3 + $0x1cc] sm:$0xf]
        %v4796 = vld [vmem:[#allocation3 + $0x1d0] sm:$0xf]
        %v4797 = vld [vmem:[#allocation3 + $0x1d4] sm:$0xf]
        %v4798 = vld [vmem:[#allocation3 + $0x1d8] sm:$0xf]
        %v4799 = vld [vmem:[#allocation3 + $0x1dc] sm:$0xf]
        %v4800 = vld [vmem:[#allocation3 + $0x1e0] sm:$0xf]
        %v4801 = vld [vmem:[#allocation3 + $0x1e4] sm:$0xf]
        %v4802 = vld [vmem:[#allocation3 + $0x1e8] sm:$0xf]
        %v4803 = vld [vmem:[#allocation3 + $0x1ec] sm:$0xf]
        %v4804 = vld [vmem:[#allocation3 + $0x1f0] sm:$0xf]
        %v4805 = vld [vmem:[#allocation3 + $0x1f4] sm:$0xf]
        %v4806 = vld [vmem:[#allocation3 + $0x1f8] sm:$0xf]
        %v4807 = vld [vmem:[#allocation3 + $0x1fc] sm:$0xf]
        %v4808 = vld [vmem:[#allocation3 + $0x200] sm:$0xf]
        %v4809 = vld [vmem:[#allocation3 + $0x204] sm:$0xf]
        %v4810 = vld [vmem:[#allocation3 + $0x208] sm:$0xf]
        %v4811 = vld [vmem:[#allocation3 + $0x20c] sm:$0xf]
        %v4812 = vld [vmem:[#allocation3 + $0x210] sm:$0xf]
        %v4813 = vld [vmem:[#allocation3 + $0x214] sm:$0xf]
        %v4814 = vld [vmem:[#allocation3 + $0x218] sm:$0xf]
        %v4815 = vld [vmem:[#allocation3 + $0x21c] sm:$0xf]
        %v4816 = vld [vmem:[#allocation3 + $0x220] sm:$0xf]
        %v4817 = vld [vmem:[#allocation3 + $0x224] sm:$0xf]
        %v4818 = vld [vmem:[#allocation3 + $0x228] sm:$0xf]
        %v4819 = vld [vmem:[#allocation3 + $0x22c] sm:$0xf]
        %v4820 = vld [vmem:[#allocation3 + $0x230] sm:$0xf]
        %v4821 = vld [vmem:[#allocation3 + $0x234] sm:$0xf]
        %v4822 = vld [vmem:[#allocation3 + $0x238] sm:$0xf]
        %v4823 = vld [vmem:[#allocation3 + $0x23c] sm:$0xf]
        %v4968 = vunpack.c.l.b16 %v4680
        %v4969 = vunpack.c.l.b16 %v4681
        %v4970 = vunpack.c.l.b16 %v4682
        %v4971 = vunpack.c.l.b16 %v4683
        %v4972 = vunpack.c.l.b16 %v4684
        %v4973 = vunpack.c.l.b16 %v4685
        %v4974 = vunpack.c.l.b16 %v4686
        %v4975 = vunpack.c.l.b16 %v4687
        %v4976 = vunpack.c.l.b16 %v4688
        %v4977 = vunpack.c.l.b16 %v4689
        %v4978 = vunpack.c.l.b16 %v4690
        %v4979 = vunpack.c.l.b16 %v4691
        %v4980 = vunpack.c.l.b16 %v4692
        %v4981 = vunpack.c.l.b16 %v4693
        %v4982 = vunpack.c.l.b16 %v4694
        %v4983 = vunpack.c.l.b16 %v4695
        %v4984 = vunpack.c.l.b16 %v4696
        %v4985 = vunpack.c.l.b16 %v4697
        %v4986 = vunpack.c.l.b16 %v4698
        %v4987 = vunpack.c.l.b16 %v4699
        %v4988 = vunpack.c.l.b16 %v4700
        %v4989 = vunpack.c.l.b16 %v4701
        %v4990 = vunpack.c.l.b16 %v4702
        %v4991 = vunpack.c.l.b16 %v4703
        %v4992 = vunpack.c.l.b16 %v4704
        %v4993 = vunpack.c.l.b16 %v4705
        %v4994 = vunpack.c.l.b16 %v4706
        %v4995 = vunpack.c.l.b16 %v4707
        %v4996 = vunpack.c.l.b16 %v4708
        %v4997 = vunpack.c.l.b16 %v4709
        %v4998 = vunpack.c.l.b16 %v4710
        %v4999 = vunpack.c.l.b16 %v4711
        %v5000 = vunpack.c.l.b16 %v4712
        %v5001 = vunpack.c.l.b16 %v4713
        %v5002 = vunpack.c.l.b16 %v4714
        %v5003 = vunpack.c.l.b16 %v4715
        %v5004 = vunpack.c.l.b16 %v4716
        %v5005 = vunpack.c.l.b16 %v4717
        %v5006 = vunpack.c.l.b16 %v4718
        %v5007 = vunpack.c.l.b16 %v4719
        %v5008 = vunpack.c.l.b16 %v4720
        %v5009 = vunpack.c.l.b16 %v4721
        %v5010 = vunpack.c.l.b16 %v4722
        %v5011 = vunpack.c.l.b16 %v4723
        %v5012 = vunpack.c.l.b16 %v4724
        %v5013 = vunpack.c.l.b16 %v4725
        %v5014 = vunpack.c.l.b16 %v4726
        %v5015 = vunpack.c.l.b16 %v4727
        %v5016 = vunpack.c.l.b16 %v4728
        %v5017 = vunpack.c.l.b16 %v4729
        %v5018 = vunpack.c.l.b16 %v4730
        %v5019 = vunpack.c.l.b16 %v4731
        %v5020 = vunpack.c.l.b16 %v4732
        %v5021 = vunpack.c.l.b16 %v4733
        %v5022 = vunpack.c.l.b16 %v4734
        %v5023 = vunpack.c.l.b16 %v4735
        %v5024 = vunpack.c.l.b16 %v4736
        %v5025 = vunpack.c.l.b16 %v4737
        %v5026 = vunpack.c.l.b16 %v4738
        %v5027 = vunpack.c.l.b16 %v4739
        %v5028 = vunpack.c.l.b16 %v4740
        %v5029 = vunpack.c.l.b16 %v4741
        %v5030 = vunpack.c.l.b16 %v4742
        %v5031 = vunpack.c.l.b16 %v4743
        %v5032 = vunpack.c.l.b16 %v4744
        %v5033 = vunpack.c.l.b16 %v4745
        %v5034 = vunpack.c.l.b16 %v4746
        %v5035 = vunpack.c.l.b16 %v4747
        %v5036 = vunpack.c.l.b16 %v4748
        %v5037 = vunpack.c.l.b16 %v4749
        %v5038 = vunpack.c.l.b16 %v4750
        %v5039 = vunpack.c.l.b16 %v4751
        %v5040 = vunpack.c.l.b16 %v4752
        %v5041 = vunpack.c.l.b16 %v4753
        %v5042 = vunpack.c.l.b16 %v4754
        %v5043 = vunpack.c.l.b16 %v4755
        %v5044 = vunpack.c.l.b16 %v4756
        %v5045 = vunpack.c.l.b16 %v4757
        %v5046 = vunpack.c.l.b16 %v4758
        %v5047 = vunpack.c.l.b16 %v4759
        %v5048 = vunpack.c.l.b16 %v4760
        %v5049 = vunpack.c.l.b16 %v4761
        %v5050 = vunpack.c.l.b16 %v4762
        %v5051 = vunpack.c.l.b16 %v4763
        %v5052 = vunpack.c.l.b16 %v4764
        %v5053 = vunpack.c.l.b16 %v4765
        %v5054 = vunpack.c.l.b16 %v4766
        %v5055 = vunpack.c.l.b16 %v4767
        %v5056 = vunpack.c.l.b16 %v4768
        %v5057 = vunpack.c.l.b16 %v4769
        %v5058 = vunpack.c.l.b16 %v4770
        %v5059 = vunpack.c.l.b16 %v4771
        %v5060 = vunpack.c.l.b16 %v4772
        %v5061 = vunpack.c.l.b16 %v4773
        %v5062 = vunpack.c.l.b16 %v4774
        %v5063 = vunpack.c.l.b16 %v4775
        %v5064 = vunpack.c.l.b16 %v4776
        %v5065 = vunpack.c.l.b16 %v4777
        %v5066 = vunpack.c.l.b16 %v4778
        %v5067 = vunpack.c.l.b16 %v4779
        %v5068 = vunpack.c.l.b16 %v4780
        %v5069 = vunpack.c.l.b16 %v4781
        %v5070 = vunpack.c.l.b16 %v4782
        %v5071 = vunpack.c.l.b16 %v4783
        %v5072 = vunpack.c.l.b16 %v4784
        %v5073 = vunpack.c.l.b16 %v4785
        %v5074 = vunpack.c.l.b16 %v4786
        %v5075 = vunpack.c.l.b16 %v4787
        %v5076 = vunpack.c.l.b16 %v4788
        %v5077 = vunpack.c.l.b16 %v4789
        %v5078 = vunpack.c.l.b16 %v4790
        %v5079 = vunpack.c.l.b16 %v4791
        %v5080 = vunpack.c.l.b16 %v4792
        %v5081 = vunpack.c.l.b16 %v4793
        %v5082 = vunpack.c.l.b16 %v4794
        %v5083 = vunpack.c.l.b16 %v4795
        %v5084 = vunpack.c.l.b16 %v4796
        %v5085 = vunpack.c.l.b16 %v4797
        %v5086 = vunpack.c.l.b16 %v4798
        %v5087 = vunpack.c.l.b16 %v4799
        %v5088 = vunpack.c.l.b16 %v4800
        %v5089 = vunpack.c.l.b16 %v4801
        %v5090 = vunpack.c.l.b16 %v4802
        %v5091 = vunpack.c.l.b16 %v4803
        %v5092 = vunpack.c.l.b16 %v4804
        %v5093 = vunpack.c.l.b16 %v4805
        %v5094 = vunpack.c.l.b16 %v4806
        %v5095 = vunpack.c.l.b16 %v4807
        %v5096 = vunpack.c.l.b16 %v4808
        %v5097 = vunpack.c.l.b16 %v4809
        %v5098 = vunpack.c.l.b16 %v4810
        %v5099 = vunpack.c.l.b16 %v4811
        %v5100 = vunpack.c.l.b16 %v4812
        %v5101 = vunpack.c.l.b16 %v4813
        %v5102 = vunpack.c.l.b16 %v4814
        %v5103 = vunpack.c.l.b16 %v4815
        %v5104 = vunpack.c.l.b16 %v4816
        %v5105 = vunpack.c.l.b16 %v4817
        %v5106 = vunpack.c.l.b16 %v4818
        %v5107 = vunpack.c.l.b16 %v4819
        %v5108 = vunpack.c.l.b16 %v4820
        %v5109 = vunpack.c.l.b16 %v4821
        %v5110 = vunpack.c.l.b16 %v4822
        %v5111 = vunpack.c.l.b16 %v4823
        %v5112 = vpack.c.b16 %v4969, %v4968
        %v5113 = vpack.c.b16 %v4971, %v4970
        %v5114 = vpack.c.b16 %v4973, %v4972
        %v5115 = vpack.c.b16 %v4975, %v4974
        %v5116 = vpack.c.b16 %v4977, %v4976
        %v5117 = vpack.c.b16 %v4979, %v4978
        %v5118 = vpack.c.b16 %v4981, %v4980
        %v5119 = vpack.c.b16 %v4983, %v4982
        %v5120 = vpack.c.b16 %v4985, %v4984
        %v5121 = vpack.c.b16 %v4987, %v4986
        %v5122 = vpack.c.b16 %v4989, %v4988
        %v5123 = vpack.c.b16 %v4991, %v4990
        %v5124 = vpack.c.b16 %v4993, %v4992
        %v5125 = vpack.c.b16 %v4995, %v4994
        %v5126 = vpack.c.b16 %v4997, %v4996
        %v5127 = vpack.c.b16 %v4999, %v4998
        %v5128 = vpack.c.b16 %v5001, %v5000
        %v5129 = vpack.c.b16 %v5003, %v5002
        %v5130 = vpack.c.b16 %v5005, %v5004
        %v5131 = vpack.c.b16 %v5007, %v5006
        %v5132 = vpack.c.b16 %v5009, %v5008
        %v5133 = vpack.c.b16 %v5011, %v5010
        %v5134 = vpack.c.b16 %v5013, %v5012
        %v5135 = vpack.c.b16 %v5015, %v5014
        %v5136 = vpack.c.b16 %v5017, %v5016
        %v5137 = vpack.c.b16 %v5019, %v5018
        %v5138 = vpack.c.b16 %v5021, %v5020
        %v5139 = vpack.c.b16 %v5023, %v5022
        %v5140 = vpack.c.b16 %v5025, %v5024
        %v5141 = vpack.c.b16 %v5027, %v5026
        %v5142 = vpack.c.b16 %v5029, %v5028
        %v5143 = vpack.c.b16 %v5031, %v5030
        %v5144 = vpack.c.b16 %v5033, %v5032
        %v5145 = vpack.c.b16 %v5035, %v5034
        %v5146 = vpack.c.b16 %v5037, %v5036
        %v5147 = vpack.c.b16 %v5039, %v5038
        %v5148 = vpack.c.b16 %v5041, %v5040
        %v5149 = vpack.c.b16 %v5043, %v5042
        %v5150 = vpack.c.b16 %v5045, %v5044
        %v5151 = vpack.c.b16 %v5047, %v5046
        %v5152 = vpack.c.b16 %v5049, %v5048
        %v5153 = vpack.c.b16 %v5051, %v5050
        %v5154 = vpack.c.b16 %v5053, %v5052
        %v5155 = vpack.c.b16 %v5055, %v5054
        %v5156 = vpack.c.b16 %v5057, %v5056
        %v5157 = vpack.c.b16 %v5059, %v5058
        %v5158 = vpack.c.b16 %v5061, %v5060
        %v5159 = vpack.c.b16 %v5063, %v5062
        %v5160 = vpack.c.b16 %v5065, %v5064
        %v5161 = vpack.c.b16 %v5067, %v5066
        %v5162 = vpack.c.b16 %v5069, %v5068
        %v5163 = vpack.c.b16 %v5071, %v5070
        %v5164 = vpack.c.b16 %v5073, %v5072
        %v5165 = vpack.c.b16 %v5075, %v5074
        %v5166 = vpack.c.b16 %v5077, %v5076
        %v5167 = vpack.c.b16 %v5079, %v5078
        %v5168 = vpack.c.b16 %v5081, %v5080
        %v5169 = vpack.c.b16 %v5083, %v5082
        %v5170 = vpack.c.b16 %v5085, %v5084
        %v5171 = vpack.c.b16 %v5087, %v5086
        %v5172 = vpack.c.b16 %v5089, %v5088
        %v5173 = vpack.c.b16 %v5091, %v5090
        %v5174 = vpack.c.b16 %v5093, %v5092
        %v5175 = vpack.c.b16 %v5095, %v5094
        %v5176 = vpack.c.b16 %v5097, %v5096
        %v5177 = vpack.c.b16 %v5099, %v5098
        %v5178 = vpack.c.b16 %v5101, %v5100
        %v5179 = vpack.c.b16 %v5103, %v5102
        %v5180 = vpack.c.b16 %v5105, %v5104
        %v5181 = vpack.c.b16 %v5107, %v5106
        %v5182 = vpack.c.b16 %v5109, %v5108
        %v5183 = vpack.c.b16 %v5111, %v5110
        %5256 = vmatprep.subr.bf16.mxu0 0
        %5257 = vmatpush1.bf16.msra.mxu0 %v5112
        %5258 = vmatprep.subr.bf16.mxu0 0
        %5259 = vmatpush1.bf16.msra.mxu0 %v5113
        %5260 = vmatprep.subr.bf16.mxu0 0
        %5261 = vmatpush1.bf16.msra.mxu0 %v5114
        %5262 = vmatprep.subr.bf16.mxu0 0
        %5263 = vmatpush1.bf16.msra.mxu0 %v5115
        %5264 = vmatprep.subr.bf16.mxu0 0
        %5265 = vmatpush1.bf16.msra.mxu0 %v5116
        %5266 = vmatprep.subr.bf16.mxu0 0
        %5267 = vmatpush1.bf16.msra.mxu0 %v5117
        %5268 = vmatprep.subr.bf16.mxu0 0
        %5269 = vmatpush1.bf16.msra.mxu0 %v5118
        %5270 = vmatprep.subr.bf16.mxu0 0
        %5271 = vmatpush1.bf16.msra.mxu0 %v5119
        %5272 = vmatprep.subr.bf16.mxu0 0
        %5273 = vmatpush1.bf16.msra.mxu0 %v5120
        %5274 = vmatprep.subr.bf16.mxu0 0
        %5275 = vmatpush1.bf16.msra.mxu0 %v5121
        %5276 = vmatprep.subr.bf16.mxu0 0
        %5277 = vmatpush1.bf16.msra.mxu0 %v5122
        %5278 = vmatprep.subr.bf16.mxu0 0
        %5279 = vmatpush1.bf16.msra.mxu0 %v5123
        %5280 = vmatprep.subr.bf16.mxu0 0
        %5281 = vmatpush1.bf16.msra.mxu0 %v5124
        %5282 = vmatprep.subr.bf16.mxu0 0
        %5283 = vmatpush1.bf16.msra.mxu0 %v5125
        %5284 = vmatprep.subr.bf16.mxu0 0
        %5285 = vmatpush1.bf16.msra.mxu0 %v5126
        %5286 = vmatprep.subr.bf16.mxu0 0
        %5287 = vmatpush1.bf16.msra.mxu0 %v5127
        %5288 = vmatprep.mubr.bf16.mxu0 %v4424
        %5289 = vmatmul.mubr.bf16.gmra.mrb[0].mxu0 %v4392
        %v5290 = vpop.f32.mrb[0].mxu0
        %v5291 = vadd.f32 0.0, %v5290
        %v5292 = vpop.f32.mrb[0].mxu0
        %v5293 = vpop.f32.mrb[0].mxu0
        %v5294 = vadd.f32 0.0, %v5293
        %v5295 = vpop.f32.mrb[0].mxu0
        %5296 = vmatprep.mubr.bf16.mxu0 %v4425
        %5297 = vmatmul.mubr.bf16.gmra.mrb[0].mxu0 %v4393
        %v5298 = vpop.f32.mrb[0].mxu0
        %v5299 = vadd.f32 0.0, %v5298
        %v5300 = vpop.f32.mrb[0].mxu0
        %v5301 = vpop.f32.mrb[0].mxu0
        %v5302 = vadd.f32 0.0, %v5301
        %v5303 = vpop.f32.mrb[0].mxu0
        %5304 = vmatprep.mubr.bf16.mxu0 %v4426
        %5305 = vmatmul.mubr.bf16.gmra.mrb[0].mxu0 %v4394
        %v5306 = vpop.f32.mrb[0].mxu0
        %v5307 = vadd.f32 0.0, %v5306
        %v5308 = vpop.f32.mrb[0].mxu0
        %v5309 = vpop.f32.mrb[0].mxu0
        %v5310 = vadd.f32 0.0, %v5309
        %v5311 = vpop.f32.mrb[0].mxu0
        %5312 = vmatprep.mubr.bf16.mxu0 %v4427
        %5313 = vmatmul.mubr.bf16.gmra.mrb[0].mxu0 %v4395
        %v5314 = vpop.f32.mrb[0].mxu0
        %v5315 = vadd.f32 0.0, %v5314
        %v5316 = vpop.f32.mrb[0].mxu0
        %v5317 = vpop.f32.mrb[0].mxu0
        %v5318 = vadd.f32 0.0, %v5317
        %v5319 = vpop.f32.mrb[0].mxu0
        %5320 = vmatprep.mubr.bf16.mxu0 %v4428
        %5321 = vmatmul.mubr.bf16.gmra.mrb[0].mxu0 %v4396
        %v5322 = vpop.f32.mrb[0].mxu0
        %v5323 = vadd.f32 0.0, %v5322
        %v5324 = vpop.f32.mrb[0].mxu0
        %v5325 = vpop.f32.mrb[0].mxu0
        %v5326 = vadd.f32 0.0, %v5325
        %v5327 = vpop.f32.mrb[0].mxu0
        %5328 = vmatprep.mubr.bf16.mxu0 %v4429
        %5329 = vmatmul.mubr.bf16.gmra.mrb[0].mxu0 %v4397
        %v5330 = vpop.f32.mrb[0].mxu0
        %v5331 = vadd.f32 0.0, %v5330
        %v5332 = vpop.f32.mrb[0].mxu0
        %v5333 = vpop.f32.mrb[0].mxu0
        %v5334 = vadd.f32 0.0, %v5333
        %v5335 = vpop.f32.mrb[0].mxu0
        %5336 = vmatprep.mubr.bf16.mxu0 %v4430
        %5337 = vmatmul.mubr.bf16.gmra.mrb[0].mxu0 %v4398
        %v5338 = vpop.f32.mrb[0].mxu0
        %v5339 = vadd.f32 0.0, %v5338
        %v5340 = vpop.f32.mrb[0].mxu0
        %v5341 = vpop.f32.mrb[0].mxu0
        %v5342 = vadd.f32 0.0, %v5341
        %v5343 = vpop.f32.mrb[0].mxu0
        %5344 = vmatprep.mubr.bf16.mxu0 %v4431
        %5345 = vmatmul.mubr.bf16.gmra.mrb[0].mxu0 %v4399
        %v5346 = vpop.f32.mrb[0].mxu0
        %v5347 = vadd.f32 0.0, %v5346
        %v5348 = vpop.f32.mrb[0].mxu0
        %v5349 = vpop.f32.mrb[0].mxu0
        %v5350 = vadd.f32 0.0, %v5349
        %v5351 = vpop.f32.mrb[0].mxu0
        %5352 = vdwg.mxu0
        %5353 = vmatprep.subr.bf16.mxu0 0
        %5354 = vmatpush1.bf16.msra.mxu0 %v5128
        %5355 = vmatprep.subr.bf16.mxu0 0
        %5356 = vmatpush1.bf16.msra.mxu0 %v5129
        %5357 = vmatprep.subr.bf16.mxu0 0
        %5358 = vmatpush1.bf16.msra.mxu0 %v5130
        %5359 = vmatprep.subr.bf16.mxu0 0
        %5360 = vmatpush1.bf16.msra.mxu0 %v5131
        %5361 = vmatprep.subr.bf16.mxu0 0
        %5362 = vmatpush1.bf16.msra.mxu0 %v5132
        %5363 = vmatprep.subr.bf16.mxu0 0
        %5364 = vmatpush1.bf16.msra.mxu0 %v5133
        %5365 = vmatprep.subr.bf16.mxu0 0
        %5366 = vmatpush1.bf16.msra.mxu0 %v5134
        %5367 = vmatprep.subr.bf16.mxu0 0
        %5368 = vmatpush1.bf16.msra.mxu0 %v5135
        %5369 = vmatprep.subr.bf16.mxu0 0
        %5370 = vmatpush1.bf16.msra.mxu0 %v5136
        %5371 = vmatprep.subr.bf16.mxu0 0
        %5372 = vmatpush1.bf16.msra.mxu0 %v5137
        %5373 = vmatprep.subr.bf16.mxu0 0
        %5374 = vmatpush1.bf16.msra.mxu0 %v5138
        %5375 = vmatprep.subr.bf16.mxu0 0
        %5376 = vmatpush1.bf16.msra.mxu0 %v5139
        %5377 = vmatprep.subr.bf16.mxu0 0
        %5378 = vmatpush1.bf16.msra.mxu0 %v5140
        %5379 = vmatprep.subr.bf16.mxu0 0
        %5380 = vmatpush1.bf16.msra.mxu0 %v5141
        %5381 = vmatprep.subr.bf16.mxu0 0
        %5382 = vmatpush1.bf16.msra.mxu0 %v5142
        %5383 = vmatprep.subr.bf16.mxu0 0
        %5384 = vmatpush1.bf16.msra.mxu0 %v5143
        %5385 = vmatprep.mubr.bf16.mxu0 %v4496
        %5386 = vmatmul.mubr.bf16.gmra.mrb[0].mxu0 %v4456
        %v5387 = vpop.f32.mrb[0].mxu0
        %v5388 = vadd.f32 %v5291, %v5387
        %v5389 = vpop.f32.mrb[0].mxu0
        %v5390 = vpop.f32.mrb[0].mxu0
        %v5391 = vadd.f32 %v5294, %v5390
        %v5392 = vpop.f32.mrb[0].mxu0
        %5393 = vmatprep.mubr.bf16.mxu0 %v4497
        %5394 = vmatmul.mubr.bf16.gmra.mrb[0].mxu0 %v4457
        %v5395 = vpop.f32.mrb[0].mxu0
        %v5396 = vadd.f32 %v5299, %v5395
        %v5397 = vpop.f32.mrb[0].mxu0
        %v5398 = vpop.f32.mrb[0].mxu0
        %v5399 = vadd.f32 %v5302, %v5398
        %v5400 = vpop.f32.mrb[0].mxu0
        %5401 = vmatprep.mubr.bf16.mxu0 %v4498
        %5402 = vmatmul.mubr.bf16.gmra.mrb[0].mxu0 %v4458
        %v5403 = vpop.f32.mrb[0].mxu0
        %v5404 = vadd.f32 %v5307, %v5403
        %v5405 = vpop.f32.mrb[0].mxu0
        %v5406 = vpop.f32.mrb[0].mxu0
        %v5407 = vadd.f32 %v5310, %v5406
        %v5408 = vpop.f32.mrb[0].mxu0
        %5409 = vmatprep.mubr.bf16.mxu0 %v4499
        %5410 = vmatmul.mubr.bf16.gmra.mrb[0].mxu0 %v4459
        %v5411 = vpop.f32.mrb[0].mxu0
        %v5412 = vadd.f32 %v5315, %v5411
        %v5413 = vpop.f32.mrb[0].mxu0
        %v5414 = vpop.f32.mrb[0].mxu0
        %v5415 = vadd.f32 %v5318, %v5414
        %v5416 = vpop.f32.mrb[0].mxu0
        %5417 = vmatprep.mubr.bf16.mxu0 %v4500
        %5418 = vmatmul.mubr.bf16.gmra.mrb[0].mxu0 %v4460
        %v5419 = vpop.f32.mrb[0].mxu0
        %v5420 = vadd.f32 %v5323, %v5419
        %v5421 = vpop.f32.mrb[0].mxu0
        %v5422 = vpop.f32.mrb[0].mxu0
        %v5423 = vadd.f32 %v5326, %v5422
        %v5424 = vpop.f32.mrb[0].mxu0
        %5425 = vmatprep.mubr.bf16.mxu0 %v4501
        %5426 = vmatmul.mubr.bf16.gmra.mrb[0].mxu0 %v4461
        %v5427 = vpop.f32.mrb[0].mxu0
        %v5428 = vadd.f32 %v5331, %v5427
        %v5429 = vpop.f32.mrb[0].mxu0
        %v5430 = vpop.f32.mrb[0].mxu0
        %v5431 = vadd.f32 %v5334, %v5430
        %v5432 = vpop.f32.mrb[0].mxu0
        %5433 = vmatprep.mubr.bf16.mxu0 %v4502
        %5434 = vmatmul.mubr.bf16.gmra.mrb[0].mxu0 %v4462
        %v5435 = vpop.f32.mrb[0].mxu0
        %v5436 = vadd.f32 %v5339, %v5435
        %v5437 = vpop.f32.mrb[0].mxu0
        %v5438 = vpop.f32.mrb[0].mxu0
        %v5439 = vadd.f32 %v5342, %v5438
        %v5440 = vpop.f32.mrb[0].mxu0
        %5441 = vmatprep.mubr.bf16.mxu0 %v4503
        %5442 = vmatmul.mubr.bf16.gmra.mrb[0].mxu0 %v4463
        %v5443 = vpop.f32.mrb[0].mxu0
        %v5444 = vadd.f32 %v5347, %v5443
        %v5445 = vpop.f32.mrb[0].mxu0
        %v5446 = vpop.f32.mrb[0].mxu0
        %v5447 = vadd.f32 %v5350, %v5446
        %v5448 = vpop.f32.mrb[0].mxu0
        %5449 = vdwg.mxu0
        %5450 = vmatprep.subr.bf16.mxu0 0
        %5451 = vmatpush1.bf16.msra.mxu0 %v5144
        %5452 = vmatprep.subr.bf16.mxu0 0
        %5453 = vmatpush1.bf16.msra.mxu0 %v5145
        %5454 = vmatprep.subr.bf16.mxu0 0
        %5455 = vmatpush1.bf16.msra.mxu0 %v5146
        %5456 = vmatprep.subr.bf16.mxu0 0
        %5457 = vmatpush1.bf16.msra.mxu0 %v5147
        %5458 = vmatprep.subr.bf16.mxu0 0
        %5459 = vmatpush1.bf16.msra.mxu0 %v5148
        %5460 = vmatprep.subr.bf16.mxu0 0
        %5461 = vmatpush1.bf16.msra.mxu0 %v5149
        %5462 = vmatprep.subr.bf16.mxu0 0
        %5463 = vmatpush1.bf16.msra.mxu0 %v5150
        %5464 = vmatprep.subr.bf16.mxu0 0
        %5465 = vmatpush1.bf16.msra.mxu0 %v5151
        %5466 = vmatprep.subr.bf16.mxu0 0
        %5467 = vmatpush1.bf16.msra.mxu0 %v5152
        %5468 = vmatprep.subr.bf16.mxu0 0
        %5469 = vmatpush1.bf16.msra.mxu0 %v5153
        %5470 = vmatprep.subr.bf16.mxu0 0
        %5471 = vmatpush1.bf16.msra.mxu0 %v5154
        %5472 = vmatprep.subr.bf16.mxu0 0
        %5473 = vmatpush1.bf16.msra.mxu0 %v5155
        %5474 = vmatprep.subr.bf16.mxu0 0
        %5475 = vmatpush1.bf16.msra.mxu0 %v5156
        %5476 = vmatprep.subr.bf16.mxu0 0
        %5477 = vmatpush1.bf16.msra.mxu0 %v5157
        %5478 = vmatprep.subr.bf16.mxu0 0
        %5479 = vmatpush1.bf16.msra.mxu0 %v5158
        %5480 = vmatprep.subr.bf16.mxu0 0
        %5481 = vmatpush1.bf16.msra.mxu0 %v5159
        %5482 = vmatprep.mubr.bf16.mxu0 %v4560
        %5483 = vmatmul.mubr.bf16.gmra.mrb[0].mxu0 %v4528
        %v5484 = vpop.f32.mrb[0].mxu0
        %v5485 = vadd.f32 %v5388, %v5484
        %v5486 = vpop.f32.mrb[0].mxu0
        %v5487 = vpop.f32.mrb[0].mxu0
        %v5488 = vadd.f32 %v5391, %v5487
        %v5489 = vpop.f32.mrb[0].mxu0
        %5490 = vmatprep.mubr.bf16.mxu0 %v4561
        %5491 = vmatmul.mubr.bf16.gmra.mrb[0].mxu0 %v4529
        %v5492 = vpop.f32.mrb[0].mxu0
        %v5493 = vadd.f32 %v5396, %v5492
        %v5494 = vpop.f32.mrb[0].mxu0
        %v5495 = vpop.f32.mrb[0].mxu0
        %v5496 = vadd.f32 %v5399, %v5495
        %v5497 = vpop.f32.mrb[0].mxu0
        %5498 = vmatprep.mubr.bf16.mxu0 %v4562
        %5499 = vmatmul.mubr.bf16.gmra.mrb[0].mxu0 %v4530
        %v5500 = vpop.f32.mrb[0].mxu0
        %v5501 = vadd.f32 %v5404, %v5500
        %v5502 = vpop.f32.mrb[0].mxu0
        %v5503 = vpop.f32.mrb[0].mxu0
        %v5504 = vadd.f32 %v5407, %v5503
        %v5505 = vpop.f32.mrb[0].mxu0
        %5506 = vmatprep.mubr.bf16.mxu0 %v4563
        %5507 = vmatmul.mubr.bf16.gmra.mrb[0].mxu0 %v4531
        %v5508 = vpop.f32.mrb[0].mxu0
        %v5509 = vadd.f32 %v5412, %v5508
        %v5510 = vpop.f32.mrb[0].mxu0
        %v5511 = vpop.f32.mrb[0].mxu0
        %v5512 = vadd.f32 %v5415, %v5511
        %v5513 = vpop.f32.mrb[0].mxu0
        %5514 = vmatprep.mubr.bf16.mxu0 %v4564
        %5515 = vmatmul.mubr.bf16.gmra.mrb[0].mxu0 %v4532
        %v5516 = vpop.f32.mrb[0].mxu0
        %v5517 = vadd.f32 %v5420, %v5516
        %v5518 = vpop.f32.mrb[0].mxu0
        %v5519 = vpop.f32.mrb[0].mxu0
        %v5520 = vadd.f32 %v5423, %v5519
        %v5521 = vpop.f32.mrb[0].mxu0
        %5522 = vmatprep.mubr.bf16.mxu0 %v4565
        %5523 = vmatmul.mubr.bf16.gmra.mrb[0].mxu0 %v4533
        %v5524 = vpop.f32.mrb[0].mxu0
        %v5525 = vadd.f32 %v5428, %v5524
        %v5526 = vpop.f32.mrb[0].mxu0
        %v5527 = vpop.f32.mrb[0].mxu0
        %v5528 = vadd.f32 %v5431, %v5527
        %v5529 = vpop.f32.mrb[0].mxu0
        %5530 = vmatprep.mubr.bf16.mxu0 %v4566
        %5531 = vmatmul.mubr.bf16.gmra.mrb[0].mxu0 %v4534
        %v5532 = vpop.f32.mrb[0].mxu0
        %v5533 = vadd.f32 %v5436, %v5532
        %v5534 = vpop.f32.mrb[0].mxu0
        %v5535 = vpop.f32.mrb[0].mxu0
        %v5536 = vadd.f32 %v5439, %v5535
        %v5537 = vpop.f32.mrb[0].mxu0
        %5538 = vmatprep.mubr.bf16.mxu0 %v4567
        %5539 = vmatmul.mubr.bf16.gmra.mrb[0].mxu0 %v4535
        %v5540 = vpop.f32.mrb[0].mxu0
        %v5541 = vadd.f32 %v5444, %v5540
        %v5542 = vpop.f32.mrb[0].mxu0
        %v5543 = vpop.f32.mrb[0].mxu0
        %v5544 = vadd.f32 %v5447, %v5543
        %v5545 = vpop.f32.mrb[0].mxu0
        %5546 = vdwg.mxu0
        %5547 = vmatprep.subr.bf16.mxu0 0
        %5548 = vmatpush1.bf16.msra.mxu0 %v5160
        %5549 = vmatprep.subr.bf16.mxu0 0
        %5550 = vmatpush1.bf16.msra.mxu0 %v5161
        %5551 = vmatprep.subr.bf16.mxu0 0
        %5552 = vmatpush1.bf16.msra.mxu0 %v5162
        %5553 = vmatprep.subr.bf16.mxu0 0
        %5554 = vmatpush1.bf16.msra.mxu0 %v5163
        %5555 = vmatprep.subr.bf16.mxu0 0
        %5556 = vmatpush1.bf16.msra.mxu0 %v5164
        %5557 = vmatprep.subr.bf16.mxu0 0
        %5558 = vmatpush1.bf16.msra.mxu0 %v5165
        %5559 = vmatprep.subr.bf16.mxu0 0
        %5560 = vmatpush1.bf16.msra.mxu0 %v5166
        %5561 = vmatprep.subr.bf16.mxu0 0
        %5562 = vmatpush1.bf16.msra.mxu0 %v5167
        %5563 = vmatprep.subr.bf16.mxu0 0
        %5564 = vmatpush1.bf16.msra.mxu0 %v5168
        %5565 = vmatprep.subr.bf16.mxu0 0
        %5566 = vmatpush1.bf16.msra.mxu0 %v5169
        %5567 = vmatprep.subr.bf16.mxu0 0
        %5568 = vmatpush1.bf16.msra.mxu0 %v5170
        %5569 = vmatprep.subr.bf16.mxu0 0
        %5570 = vmatpush1.bf16.msra.mxu0 %v5171
        %5571 = vmatprep.subr.bf16.mxu0 0
        %5572 = vmatpush1.bf16.msra.mxu0 %v5172
        %5573 = vmatprep.subr.bf16.mxu0 0
        %5574 = vmatpush1.bf16.msra.mxu0 %v5173
        %5575 = vmatprep.subr.bf16.mxu0 0
        %5576 = vmatpush1.bf16.msra.mxu0 %v5174
        %5577 = vmatprep.subr.bf16.mxu0 0
        %5578 = vmatpush1.bf16.msra.mxu0 %v5175
        %5579 = vmatprep.mubr.bf16.mxu0 %v4632
        %5580 = vmatmul.mubr.bf16.gmra.mrb[0].mxu0 %v4600
        %v5581 = vpop.f32.mrb[0].mxu0
        %v5582 = vadd.f32 %v5485, %v5581
        %v5583 = vpop.f32.mrb[0].mxu0
        %v5584 = vpop.f32.mrb[0].mxu0
        %v5585 = vadd.f32 %v5488, %v5584
        %v5586 = vpop.f32.mrb[0].mxu0
        %5587 = vmatprep.mubr.bf16.mxu0 %v4633
        %5588 = vmatmul.mubr.bf16.gmra.mrb[0].mxu0 %v4601
        %v5589 = vpop.f32.mrb[0].mxu0
        %v5590 = vadd.f32 %v5493, %v5589
        %v5591 = vpop.f32.mrb[0].mxu0
        %v5592 = vpop.f32.mrb[0].mxu0
        %v5593 = vadd.f32 %v5496, %v5592
        %v5594 = vpop.f32.mrb[0].mxu0
        %5595 = vmatprep.mubr.bf16.mxu0 %v4634
        %5596 = vmatmul.mubr.bf16.gmra.mrb[0].mxu0 %v4602
        %v5597 = vpop.f32.mrb[0].mxu0
        %v5598 = vadd.f32 %v5501, %v5597
        %v5599 = vpop.f32.mrb[0].mxu0
        %v5600 = vpop.f32.mrb[0].mxu0
        %v5601 = vadd.f32 %v5504, %v5600
        %v5602 = vpop.f32.mrb[0].mxu0
        %5603 = vmatprep.mubr.bf16.mxu0 %v4635
        %5604 = vmatmul.mubr.bf16.gmra.mrb[0].mxu0 %v4603
        %v5605 = vpop.f32.mrb[0].mxu0
        %v5606 = vadd.f32 %v5509, %v5605
        %v5607 = vpop.f32.mrb[0].mxu0
        %v5608 = vpop.f32.mrb[0].mxu0
        %v5609 = vadd.f32 %v5512, %v5608
        %v5610 = vpop.f32.mrb[0].mxu0
        %5611 = vmatprep.mubr.bf16.mxu0 %v4636
        %5612 = vmatmul.mubr.bf16.gmra.mrb[0].mxu0 %v4604
        %v5613 = vpop.f32.mrb[0].mxu0
        %v5614 = vadd.f32 %v5517, %v5613
        %v5615 = vpop.f32.mrb[0].mxu0
        %v5616 = vpop.f32.mrb[0].mxu0
        %v5617 = vadd.f32 %v5520, %v5616
        %v5618 = vpop.f32.mrb[0].mxu0
        %5619 = vmatprep.mubr.bf16.mxu0 %v4637
        %5620 = vmatmul.mubr.bf16.gmra.mrb[0].mxu0 %v4605
        %v5621 = vpop.f32.mrb[0].mxu0
        %v5622 = vadd.f32 %v5525, %v5621
        %v5623 = vpop.f32.mrb[0].mxu0
        %v5624 = vpop.f32.mrb[0].mxu0
        %v5625 = vadd.f32 %v5528, %v5624
        %v5626 = vpop.f32.mrb[0].mxu0
        %5627 = vmatprep.mubr.bf16.mxu0 %v4638
        %5628 = vmatmul.mubr.bf16.gmra.mrb[0].mxu0 %v4606
        %v5629 = vpop.f32.mrb[0].mxu0
        %v5630 = vadd.f32 %v5533, %v5629
        %v5631 = vpop.f32.mrb[0].mxu0
        %v5632 = vpop.f32.mrb[0].mxu0
        %v5633 = vadd.f32 %v5536, %v5632
        %v5634 = vpop.f32.mrb[0].mxu0
        %5635 = vmatprep.mubr.bf16.mxu0 %v4639
        %5636 = vmatmul.mubr.bf16.gmra.mrb[0].mxu0 %v4607
        %v5637 = vpop.f32.mrb[0].mxu0
        %v5638 = vadd.f32 %v5541, %v5637
        %v5639 = vpop.f32.mrb[0].mxu0
        %v5640 = vpop.f32.mrb[0].mxu0
        %v5641 = vadd.f32 %v5544, %v5640
        %v5642 = vpop.f32.mrb[0].mxu0
        %5643 = vdwg.mxu0
        %5644 = vmatprep.subr.bf16.mxu0 0
        %5645 = vmatpush1.bf16.msra.mxu0 %v5176
        %5646 = vmatprep.subr.bf16.mxu0 0
        %5647 = vmatpush1.bf16.msra.mxu0 %v5177
        %5648 = vmatprep.subr.bf16.mxu0 0
        %5649 = vmatpush1.bf16.msra.mxu0 %v5178
        %5650 = vmatprep.subr.bf16.mxu0 0
        %5651 = vmatpush1.bf16.msra.mxu0 %v5179
        %5652 = vmatprep.subr.bf16.mxu0 0
        %5653 = vmatpush1.bf16.msra.mxu0 %v5180
        %5654 = vmatprep.subr.bf16.mxu0 0
        %5655 = vmatpush1.bf16.msra.mxu0 %v5181
        %5656 = vmatprep.subr.bf16.mxu0 0
        %5657 = vmatpush1.bf16.msra.mxu0 %v5182
        %5658 = vmatprep.subr.bf16.mxu0 0
        %5659 = vmatpush1.bf16.msra.mxu0 %v5183
        %5660 = vmatprep.subr.bf16.mxu0 0
        %5661 = vmatpush1.bf16.msra.mxu0 0
        %5662 = vmatprep.subr.bf16.mxu0 0
        %5663 = vmatpush1.bf16.msra.mxu0 0
        %5664 = vmatprep.subr.bf16.mxu0 0
        %5665 = vmatpush1.bf16.msra.mxu0 0
        %5666 = vmatprep.subr.bf16.mxu0 0
        %5667 = vmatpush1.bf16.msra.mxu0 0
        %5668 = vmatprep.subr.bf16.mxu0 0
        %5669 = vmatpush1.bf16.msra.mxu0 0
        %5670 = vmatprep.subr.bf16.mxu0 0
        %5671 = vmatpush1.bf16.msra.mxu0 0
        %5672 = vmatprep.subr.bf16.mxu0 0
        %5673 = vmatpush1.bf16.msra.mxu0 0
        %5674 = vmatprep.subr.bf16.mxu0 0
        %5675 = vmatpush1.bf16.msra.mxu0 0
        %5676 = vmatprep.mubr.bf16.mxu0 0
        %5677 = vmatmul.mubr.bf16.gmra.mrb[0].mxu0 %v4664
        %v5678 = vpop.f32.mrb[0].mxu0
        %v5679 = vadd.f32 %v5582, %v5678
        %v5680 = vpop.f32.mrb[0].mxu0
        %v5681 = vpop.f32.mrb[0].mxu0
        %v5682 = vadd.f32 %v5585, %v5681
        %v5683 = vpop.f32.mrb[0].mxu0
        %5684 = vmatprep.mubr.bf16.mxu0 0
        %5685 = vmatmul.mubr.bf16.gmra.mrb[0].mxu0 %v4665
        %v5686 = vpop.f32.mrb[0].mxu0
        %v5687 = vadd.f32 %v5590, %v5686
        %v5688 = vpop.f32.mrb[0].mxu0
        %v5689 = vpop.f32.mrb[0].mxu0
        %v5690 = vadd.f32 %v5593, %v5689
        %v5691 = vpop.f32.mrb[0].mxu0
        %5692 = vmatprep.mubr.bf16.mxu0 0
        %5693 = vmatmul.mubr.bf16.gmra.mrb[0].mxu0 %v4666
        %v5694 = vpop.f32.mrb[0].mxu0
        %v5695 = vadd.f32 %v5598, %v5694
        %v5696 = vpop.f32.mrb[0].mxu0
        %v5697 = vpop.f32.mrb[0].mxu0
        %v5698 = vadd.f32 %v5601, %v5697
        %v5699 = vpop.f32.mrb[0].mxu0
        %5700 = vmatprep.mubr.bf16.mxu0 0
        %5701 = vmatmul.mubr.bf16.gmra.mrb[0].mxu0 %v4667
        %v5702 = vpop.f32.mrb[0].mxu0
        %v5703 = vadd.f32 %v5606, %v5702
        %v5704 = vpop.f32.mrb[0].mxu0
        %v5705 = vpop.f32.mrb[0].mxu0
        %v5706 = vadd.f32 %v5609, %v5705
        %v5707 = vpop.f32.mrb[0].mxu0
        %5708 = vmatprep.mubr.bf16.mxu0 0
        %5709 = vmatmul.mubr.bf16.gmra.mrb[0].mxu0 %v4668
        %v5710 = vpop.f32.mrb[0].mxu0
        %v5711 = vadd.f32 %v5614, %v5710
        %v5712 = vpop.f32.mrb[0].mxu0
        %v5713 = vpop.f32.mrb[0].mxu0
        %v5714 = vadd.f32 %v5617, %v5713
        %v5715 = vpop.f32.mrb[0].mxu0
        %5716 = vmatprep.mubr.bf16.mxu0 0
        %5717 = vmatmul.mubr.bf16.gmra.mrb[0].mxu0 %v4669
        %v5718 = vpop.f32.mrb[0].mxu0
        %v5719 = vadd.f32 %v5622, %v5718
        %v5720 = vpop.f32.mrb[0].mxu0
        %v5721 = vpop.f32.mrb[0].mxu0
        %v5722 = vadd.f32 %v5625, %v5721
        %v5723 = vpop.f32.mrb[0].mxu0
        %5724 = vmatprep.mubr.bf16.mxu0 0
        %5725 = vmatmul.mubr.bf16.gmra.mrb[0].mxu0 %v4670
        %v5726 = vpop.f32.mrb[0].mxu0
        %v5727 = vadd.f32 %v5630, %v5726
        %v5728 = vpop.f32.mrb[0].mxu0
        %v5729 = vpop.f32.mrb[0].mxu0
        %v5730 = vadd.f32 %v5633, %v5729
        %v5731 = vpop.f32.mrb[0].mxu0
        %5732 = vmatprep.mubr.bf16.mxu0 0
        %5733 = vmatmul.mubr.bf16.gmra.mrb[0].mxu0 %v4671
        %v5734 = vpop.f32.mrb[0].mxu0
        %v5735 = vadd.f32 %v5638, %v5734
        %v5736 = vpop.f32.mrb[0].mxu0
        %v5737 = vpop.f32.mrb[0].mxu0
        %v5738 = vadd.f32 %v5641, %v5737
        %v5739 = vpop.f32.mrb[0].mxu0
        %5740 = vdwg.mxu0
        %v5741 = vld [vmem:[%s3 + $0x2] sm:$0x1]
        %v5742 = vlaneseq
        %v5743 = vshrl.u32 %v5742, 7
        %v5744 = vsub.s32 0, %v5743
        %v5745 = vrot.slane %v5741, %v5744
        %v5746 = vmul.f32 %v5679, %v5745
        %v5747 = vmul.f32 %v5682, %v5745
        %v5748 = vmul.f32 %v5687, %v5745
        %v5749 = vmul.f32 %v5690, %v5745
        %v5750 = vmul.f32 %v5695, %v5745
        %v5751 = vmul.f32 %v5698, %v5745
        %v5752 = vmul.f32 %v5703, %v5745
        %v5753 = vmul.f32 %v5706, %v5745
        %v5754 = vmul.f32 %v5711, %v5745
        %v5755 = vmul.f32 %v5714, %v5745
        %v5756 = vmul.f32 %v5719, %v5745
        %v5757 = vmul.f32 %v5722, %v5745
        %v5758 = vmul.f32 %v5727, %v5745
        %v5759 = vmul.f32 %v5730, %v5745
        %v5760 = vmul.f32 %v5735, %v5745
        %v5761 = vmul.f32 %v5738, %v5745
        %v5762 = vld [vmem:[%s3 + $0x3] sm:$0x1]
        %v5763 = vlaneseq
        %v5764 = vshrl.u32 %v5763, 7
        %v5765 = vsub.s32 0, %v5764
        %v5766 = vrot.slane %v5762, %v5765
        %v5767 = vadd.f32 %v5746, %v5766
        %v5768 = vadd.f32 %v5747, %v5766
        %v5769 = vadd.f32 %v5748, %v5766
        %v5770 = vadd.f32 %v5749, %v5766
        %v5771 = vadd.f32 %v5750, %v5766
        %v5772 = vadd.f32 %v5751, %v5766
        %v5773 = vadd.f32 %v5752, %v5766
        %v5774 = vadd.f32 %v5753, %v5766
        %v5775 = vadd.f32 %v5754, %v5766
        %v5776 = vadd.f32 %v5755, %v5766
        %v5777 = vadd.f32 %v5756, %v5766
        %v5778 = vadd.f32 %v5757, %v5766
        %v5779 = vadd.f32 %v5758, %v5766
        %v5780 = vadd.f32 %v5759, %v5766
        %v5781 = vadd.f32 %v5760, %v5766
        %v5782 = vadd.f32 %v5761, %v5766
        %v5783 = vld [vmem:[%s992] sm:$0xf]
        %v5784 = vld [vmem:[%s992 + $0x4] sm:$0xf]
        %v5785 = vld [vmem:[%s992 + $0x8] sm:$0x1]
        %v5786 = vld [vmem:[%s992 + $0xc] sm:$0xf]
        %v5787 = vld [vmem:[%s992 + $0x10] sm:$0xf]
        %v5788 = vld [vmem:[%s992 + $0x14] sm:$0x1]
        %v5789 = vld [vmem:[%s992 + $0x18] sm:$0xf]
        %v5790 = vld [vmem:[%s992 + $0x1c] sm:$0xf]
        %v5791 = vld [vmem:[%s992 + $0x20] sm:$0x1]
        %v5792 = vld [vmem:[%s992 + $0x24] sm:$0xf]
        %v5793 = vld [vmem:[%s992 + $0x28] sm:$0xf]
        %v5794 = vld [vmem:[%s992 + $0x2c] sm:$0x1]
        %v5795 = vld [vmem:[%s992 + $0x30] sm:$0xf]
        %v5796 = vld [vmem:[%s992 + $0x34] sm:$0xf]
        %v5797 = vld [vmem:[%s992 + $0x38] sm:$0x1]
        %v5798 = vld [vmem:[%s992 + $0x3c] sm:$0xf]
        %v5799 = vld [vmem:[%s992 + $0x40] sm:$0xf]
        %v5800 = vld [vmem:[%s992 + $0x44] sm:$0x1]
        %v5801 = vld [vmem:[%s992 + $0x48] sm:$0xf]
        %v5802 = vld [vmem:[%s992 + $0x4c] sm:$0xf]
        %v5803 = vld [vmem:[%s992 + $0x50] sm:$0x1]
        %v5804 = vld [vmem:[%s992 + $0x54] sm:$0xf]
        %v5805 = vld [vmem:[%s992 + $0x58] sm:$0xf]
        %v5806 = vld [vmem:[%s992 + $0x5c] sm:$0x1]
        %v5808 = vshrl.u32 %v5783, 16
        %v5810 = vrot.slane %v5808, 4
        %v5811 = vshll.u32 %v5783, 16
        %v5813 = vrot.slane %v5811, 5
        %v5814 = vor.u32 %v5810, %v5813
        %v5815 = vrot.slane %v5814, 4
        %v5817 = vshll.u32 %v5784, 16
        %v5819 = vrot.slane %v5817, 5
        %v5820 = vsel %vm257, %v5815, %v5819
        %v5821 = vshrl.u32 %v5784, 16
        %v5823 = vrot.slane %v5821, 4
        %v5824 = vor.u32 %v5823, %v5819
        %v5825 = vrot.slane %v5824, 4
        %v5827 = vshll.u32 %v5785, 16
        %v5829 = vrot.slane %v5827, 5
        %v5830 = vsel %vm257, %v5825, %v5829
        %v5832 = vshrl.u32 %v5786, 16
        %v5834 = vrot.slane %v5832, 4
        %v5835 = vshll.u32 %v5786, 16
        %v5837 = vrot.slane %v5835, 5
        %v5838 = vor.u32 %v5834, %v5837
        %v5839 = vrot.slane %v5838, 4
        %v5841 = vshll.u32 %v5787, 16
        %v5843 = vrot.slane %v5841, 5
        %v5844 = vsel %vm257, %v5839, %v5843
        %v5845 = vshrl.u32 %v5787, 16
        %v5847 = vrot.slane %v5845, 4
        %v5848 = vor.u32 %v5847, %v5843
        %v5849 = vrot.slane %v5848, 4
        %v5851 = vshll.u32 %v5788, 16
        %v5853 = vrot.slane %v5851, 5
        %v5854 = vsel %vm257, %v5849, %v5853
        %v5856 = vshrl.u32 %v5789, 16
        %v5858 = vrot.slane %v5856, 4
        %v5859 = vshll.u32 %v5789, 16
        %v5861 = vrot.slane %v5859, 5
        %v5862 = vor.u32 %v5858, %v5861
        %v5863 = vrot.slane %v5862, 4
        %v5865 = vshll.u32 %v5790, 16
        %v5867 = vrot.slane %v5865, 5
        %v5868 = vsel %vm257, %v5863, %v5867
        %v5869 = vshrl.u32 %v5790, 16
        %v5871 = vrot.slane %v5869, 4
        %v5872 = vor.u32 %v5871, %v5867
        %v5873 = vrot.slane %v5872, 4
        %v5875 = vshll.u32 %v5791, 16
        %v5877 = vrot.slane %v5875, 5
        %v5878 = vsel %vm257, %v5873, %v5877
        %v5880 = vshrl.u32 %v5792, 16
        %v5882 = vrot.slane %v5880, 4
        %v5883 = vshll.u32 %v5792, 16
        %v5885 = vrot.slane %v5883, 5
        %v5886 = vor.u32 %v5882, %v5885
        %v5887 = vrot.slane %v5886, 4
        %v5889 = vshll.u32 %v5793, 16
        %v5891 = vrot.slane %v5889, 5
        %v5892 = vsel %vm257, %v5887, %v5891
        %v5893 = vshrl.u32 %v5793, 16
        %v5895 = vrot.slane %v5893, 4
        %v5896 = vor.u32 %v5895, %v5891
        %v5897 = vrot.slane %v5896, 4
        %v5899 = vshll.u32 %v5794, 16
        %v5901 = vrot.slane %v5899, 5
        %v5902 = vsel %vm257, %v5897, %v5901
        %v5904 = vshrl.u32 %v5795, 16
        %v5906 = vrot.slane %v5904, 4
        %v5907 = vshll.u32 %v5795, 16
        %v5909 = vrot.slane %v5907, 5
        %v5910 = vor.u32 %v5906, %v5909
        %v5911 = vrot.slane %v5910, 4
        %v5913 = vshll.u32 %v5796, 16
        %v5915 = vrot.slane %v5913, 5
        %v5916 = vsel %vm257, %v5911, %v5915
        %v5917 = vshrl.u32 %v5796, 16
        %v5919 = vrot.slane %v5917, 4
        %v5920 = vor.u32 %v5919, %v5915
        %v5921 = vrot.slane %v5920, 4
        %v5923 = vshll.u32 %v5797, 16
        %v5925 = vrot.slane %v5923, 5
        %v5926 = vsel %vm257, %v5921, %v5925
        %v5928 = vshrl.u32 %v5798, 16
        %v5930 = vrot.slane %v5928, 4
        %v5931 = vshll.u32 %v5798, 16
        %v5933 = vrot.slane %v5931, 5
        %v5934 = vor.u32 %v5930, %v5933
        %v5935 = vrot.slane %v5934, 4
        %v5937 = vshll.u32 %v5799, 16
        %v5939 = vrot.slane %v5937, 5
        %v5940 = vsel %vm257, %v5935, %v5939
        %v5941 = vshrl.u32 %v5799, 16
        %v5943 = vrot.slane %v5941, 4
        %v5944 = vor.u32 %v5943, %v5939
        %v5945 = vrot.slane %v5944, 4
        %v5947 = vshll.u32 %v5800, 16
        %v5949 = vrot.slane %v5947, 5
        %v5950 = vsel %vm257, %v5945, %v5949
        %v5952 = vshrl.u32 %v5801, 16
        %v5954 = vrot.slane %v5952, 4
        %v5955 = vshll.u32 %v5801, 16
        %v5957 = vrot.slane %v5955, 5
        %v5958 = vor.u32 %v5954, %v5957
        %v5959 = vrot.slane %v5958, 4
        %v5961 = vshll.u32 %v5802, 16
        %v5963 = vrot.slane %v5961, 5
        %v5964 = vsel %vm257, %v5959, %v5963
        %v5965 = vshrl.u32 %v5802, 16
        %v5967 = vrot.slane %v5965, 4
        %v5968 = vor.u32 %v5967, %v5963
        %v5969 = vrot.slane %v5968, 4
        %v5971 = vshll.u32 %v5803, 16
        %v5973 = vrot.slane %v5971, 5
        %v5974 = vsel %vm257, %v5969, %v5973
        %v5976 = vshrl.u32 %v5804, 16
        %v5978 = vrot.slane %v5976, 4
        %v5979 = vshll.u32 %v5804, 16
        %v5981 = vrot.slane %v5979, 5
        %v5982 = vor.u32 %v5978, %v5981
        %v5983 = vrot.slane %v5982, 4
        %v5985 = vshll.u32 %v5805, 16
        %v5987 = vrot.slane %v5985, 5
        %v5988 = vsel %vm257, %v5983, %v5987
        %v5989 = vshrl.u32 %v5805, 16
        %v5991 = vrot.slane %v5989, 4
        %v5992 = vor.u32 %v5991, %v5987
        %v5993 = vrot.slane %v5992, 4
        %v5995 = vshll.u32 %v5806, 16
        %v5997 = vrot.slane %v5995, 5
        %v5998 = vsel %vm257, %v5993, %v5997
        %v6015 = vunpack.c.l.bf16 %v5820
        %v6016 = vunpack.c.l.bf16 %v5830
        %v6017 = vunpack.c.l.bf16 %v5844
        %v6018 = vunpack.c.l.bf16 %v5854
        %v6019 = vunpack.c.l.bf16 %v5868
        %v6020 = vunpack.c.l.bf16 %v5878
        %v6021 = vunpack.c.l.bf16 %v5892
        %v6022 = vunpack.c.l.bf16 %v5902
        %v6023 = vunpack.c.l.bf16 %v5916
        %v6024 = vunpack.c.l.bf16 %v5926
        %v6025 = vunpack.c.l.bf16 %v5940
        %v6026 = vunpack.c.l.bf16 %v5950
        %v6027 = vunpack.c.l.bf16 %v5964
        %v6028 = vunpack.c.l.bf16 %v5974
        %v6029 = vunpack.c.l.bf16 %v5988
        %v6030 = vunpack.c.l.bf16 %v5998
        %v6031 = vadd.f32 %v5767, %v6015
        %v6032 = vadd.f32 %v5768, %v6016
        %v6033 = vadd.f32 %v5769, %v6017
        %v6034 = vadd.f32 %v5770, %v6018
        %v6035 = vadd.f32 %v5771, %v6019
        %v6036 = vadd.f32 %v5772, %v6020
        %v6037 = vadd.f32 %v5773, %v6021
        %v6038 = vadd.f32 %v5774, %v6022
        %v6039 = vadd.f32 %v5775, %v6023
        %v6040 = vadd.f32 %v5776, %v6024
        %v6041 = vadd.f32 %v5777, %v6025
        %v6042 = vadd.f32 %v5778, %v6026
        %v6043 = vadd.f32 %v5779, %v6027
        %v6044 = vadd.f32 %v5780, %v6028
        %v6045 = vadd.f32 %v5781, %v6029
        %v6046 = vadd.f32 %v5782, %v6030
        %v6047 = vmax.f32 %v6031, 0.0
        %v6048 = vmax.f32 %v6032, 0.0
        %v6049 = vmax.f32 %v6033, 0.0
        %v6050 = vmax.f32 %v6034, 0.0
        %v6051 = vmax.f32 %v6035, 0.0
        %v6052 = vmax.f32 %v6036, 0.0
        %v6053 = vmax.f32 %v6037, 0.0
        %v6054 = vmax.f32 %v6038, 0.0
        %v6055 = vmax.f32 %v6039, 0.0
        %v6056 = vmax.f32 %v6040, 0.0
        %v6057 = vmax.f32 %v6041, 0.0
        %v6058 = vmax.f32 %v6042, 0.0
        %v6059 = vmax.f32 %v6043, 0.0
        %v6060 = vmax.f32 %v6044, 0.0
        %v6061 = vmax.f32 %v6045, 0.0
        %v6062 = vmax.f32 %v6046, 0.0
        %6063 = vst [vmem:[%s205] sm:$0xff] %v6047
        %6064 = vst [vmem:[%s205 + $0x8] sm:$0xff] %v6048
        %6065 = vst [vmem:[%s205 + $0x10] sm:$0xff] %v6049
        %6066 = vst [vmem:[%s205 + $0x18] sm:$0xff] %v6050
        %6067 = vst [vmem:[%s205 + $0x20] sm:$0xff] %v6051
        %6068 = vst [vmem:[%s205 + $0x28] sm:$0xff] %v6052
        %6069 = vst [vmem:[%s205 + $0x30] sm:$0xff] %v6053
        %6070 = vst [vmem:[%s205 + $0x38] sm:$0xff] %v6054
        %6071 = vst [vmem:[%s205 + $0x40] sm:$0xff] %v6055
        %6072 = vst [vmem:[%s205 + $0x48] sm:$0xff] %v6056
        %6073 = vst [vmem:[%s205 + $0x50] sm:$0xff] %v6057
        %6074 = vst [vmem:[%s205 + $0x58] sm:$0xff] %v6058
        %6075 = vst [vmem:[%s205 + $0x60] sm:$0xff] %v6059
        %6076 = vst [vmem:[%s205 + $0x68] sm:$0xff] %v6060
        %6077 = vst [vmem:[%s205 + $0x70] sm:$0xff] %v6061
        %6078 = vst [vmem:[%s205 + $0x78] sm:$0xff] %v6062
        %s6079 = sand.u32 %s116, 1
        %s6080 = scalar_lea.sflag [#allocation5], %s6079
        %s6081 = sand.u32 %s116, 1
        %s6082 = smul.addr %s6081, 128
        %s6083 = scalar_lea.vmem [#allocation6], %s6082
        // Predicated region
        $region41: #{tpu_custom_call.1} parent=35 // pred_check
          %p6084 = pneg %p126
        $region42: #{tpu_custom_call.1} parent=35 // pred_check_branch
          %6086 = sbr.rel (%p6084) target = $region44
        $region43: #{tpu_custom_call.1} parent=35 // pred_region
          %s6088 = ssub.s32 2048, 2048
          %6089 = vsyncadd %s6080, %s6088
          %s6090 = smul.addr %s19, 16
          %s6091 = smul.addr %s6090, 128
          %s6092 = scalar_lea.hbm %s4, %s6091
          %s6093 = sshll.u32 %s6083, 4
          %s6094 = int_to_ptr.vmem [resolvable:$true] %s6093
          %6099 = dma.vmem_to_hbm [thread:$0]  %s6094, 2048, %s6092, %s6080, 128, 128, 8
        $region44: #{tpu_custom_call.1} parent=35 // pred_fallthru
          _
      $region36: #{tpu_custom_call.1} parent=5 // pred_fallthru
        _
      %p6100 = scmp.le.s32.totalorder 2, %s14
      // Predicated region
      $region45: #{tpu_custom_call.1} parent=5 // pred_check
        %p6101 = pneg %p6100
      $region46: #{tpu_custom_call.1} parent=5 // pred_check_branch
        %6103 = sbr.rel (%p6101) target = $region48
      $region47: #{tpu_custom_call.1} parent=5 // pred_region
        %s6104 = ssub.s32 %s14, 2
        // Predicated region
        $region49: #{tpu_custom_call.1} parent=47 // pred_check
          %p6105 = pneg %p132
        $region50: #{tpu_custom_call.1} parent=47 // pred_check_branch
          %6107 = sbr.rel (%p6105) target = $region52
        $region51: #{tpu_custom_call.1} parent=47 // pred_region
          %s6108 = sand.u32 %s117, 1
          %s6109 = scalar_lea.sflag [#allocation5], %s6108
          %s6110 = sand.u32 %s117, 1
          %s6111 = smul.addr %s6110, 128
          %s6112 = scalar_lea.vmem [#allocation6], %s6111
          %6113 = dma.done %s6109, 2048
        $region52: #{tpu_custom_call.1} parent=47 // pred_fallthru
          _
      $region48: #{tpu_custom_call.1} parent=5 // pred_fallthru
        _
    $region6: #{tpu_custom_call.1} parent=1 // loop_footer
      %s18 = sadd.s32 1, %s14
    $region7: #{tpu_custom_call.1} parent=1 // loop_footer_branch
      %13 = sbr.rel target = $region3
    $region8: #{tpu_custom_call.1} parent=1 // loop_exit
      _
    %6114 = vsyncpa [#allocation4], 1
    %s6115 = scalar_lea.sflag [#allocation4], 1
    %6116 = vsyncpa %s6115, 1
    %6117 = vsyncpa [#allocation5], 1
    %s6118 = scalar_lea.sflag [#allocation5], 1
    %6119 = vsyncpa %s6118, 1

</llo_original>
